<compile_context>
chip_gen: v6e
topology: v6e:2x2x1
jax: 0.10.0
libtpu: 0.0.40
codegen_flags: <defaults>
</compile_context>

<pallas_src>
import functools

import jax
import jax.numpy as jnp
from jax import lax
from jax.experimental import pallas as pl
from jax.experimental.pallas import tpu as pltpu

EMBED_DIM = 16
INPUT_DIM = 5
N_SCENARIOS = 10                         # synthetic stand-in for len(X_grouped)
H1, H2, H3, H4, OUT = 256, 512, 512, 256, 1

XPAD = 16                                # input features padded 5 -> 16 (bf16 sublane tile)
NS_PAD = ((N_SCENARIOS + 7) // 8) * 8    # scenario axis padded 10 -> 16
OUT_ROWS = 8                             # output rows padded 1 -> 8 (sublane tile)


def _default_bf16_epilogue():
    """bf16 bias/ReLU epilogue only where the VPU is bf16-native (v6e/v7x)."""
    try:
        kind = jax.devices()[0].device_kind.lower()
    except Exception:
        return True
    return not any(t in kind for t in ("v2", "v3", "v4", "v5"))


def _epilogue(h_f32, b, bf16_ep):
    """Bias + ReLU; returns bf16 (the next MXU matmul consumes bf16 anyway)."""
    bf16 = jnp.bfloat16
    if bf16_ep:
        h = h_f32.astype(bf16)
        if b is not None:
            h = h + b.astype(bf16)
        return jnp.maximum(h, 0)
    if b is not None:
        h_f32 = h_f32 + b
    return jnp.maximum(h_f32, 0.0).astype(bf16)


def mlp_kernel(sid_ref, x_ref, ctx1_ref, w1x_ref,
               w2_ref, b2_ref, w3_ref, b3_ref, w4_ref, b4_ref,
               w5_ref, b5_ref, o_ref, *, bf16_epilogue):
    """Fused embedding lookup + 5-layer MLP, batch-on-lanes layout, f32 MXU acc."""
    bf16, f32 = jnp.bfloat16, jnp.float32
    tile = x_ref.shape[1]

    # --- embedding lookup as a one-hot matmul against the folded layer-1 context
    sid = sid_ref[...]                                           # [1, tile] int32
    scen = lax.broadcasted_iota(jnp.int32, (NS_PAD, tile), 0)    # [NS_PAD, tile]
    onehot = jnp.where(scen == sid, 1.0, 0.0).astype(bf16)       # [NS_PAD, tile]

    # --- layer 1: W1x^T @ x  +  (embed @ W1e + b1)^T selected via one-hot
    h = (jnp.dot(w1x_ref[...], x_ref[...], preferred_element_type=f32)
         + jnp.dot(ctx1_ref[...], onehot, preferred_element_type=f32))
    h = _epilogue(h, None, bf16_epilogue)                        # bias folded into ctx1

    # --- layers 2-4: Linear -> ReLU (Dropout = identity at inference)
    for w_ref, b_ref in ((w2_ref, b2_ref), (w3_ref, b3_ref), (w4_ref, b4_ref)):
        h = _epilogue(jnp.dot(w_ref[...], h, preferred_element_type=f32),
                      b_ref[...], bf16_epilogue)

    # --- layer 5: [OUT_ROWS, tile] lane-dense output block (row 0 is the real output)
    y = jnp.dot(w5_ref[...], h, preferred_element_type=f32) + b5_ref[...]
    o_ref[...] = y.astype(o_ref.dtype)


def context_aware_mlp(x, sid, kp, *, batch_tile=1024, bf16_epilogue=None):
    """x: [B, INPUT_DIM] f32, sid: [B] int32 -> [B, 1] f32."""
    if bf16_epilogue is None:
        bf16_epilogue = _default_bf16_epilogue()

    B = x.shape[0]
    # Cap the tile so there are >= 2 grid steps when B allows (2 TCs on v7x).
    bt = max(256, min(batch_tile, 256 * pl.cdiv(pl.cdiv(B, 2), 256)))
    num_tiles = pl.cdiv(B, bt)
    b_pad = num_tiles * bt

    # Batch-on-lanes layout: x as [XPAD, b_pad] bf16, sid as [1, b_pad] int32.
    xT = jnp.zeros((XPAD, b_pad), jnp.bfloat16).at[:INPUT_DIM, :B].set(
        x.T.astype(jnp.bfloat16))
    sidT = jnp.zeros((1, b_pad), jnp.int32).at[0, :B].set(sid)

    def col_spec(rows):
        return pl.BlockSpec((rows, bt), lambda i: (0, i))

    def resident(arr):
        # Constant index_map -> block fetched once, stays resident across grid steps.
        return pl.BlockSpec(arr.shape, lambda i: (0, 0))

    kernel = functools.partial(mlp_kernel, bf16_epilogue=bf16_epilogue)

    out = pl.pallas_call(
        kernel,
        out_shape=jax.ShapeDtypeStruct((OUT_ROWS, b_pad), jnp.float32),
        grid_spec=pltpu.PrefetchScalarGridSpec(
            num_scalar_prefetch=0,
            grid=(num_tiles,),
            in_specs=[
                col_spec(1),                 # sid
                col_spec(XPAD),              # x (transposed, padded, bf16)
                resident(kp["ctx1_t"]), resident(kp["w1x_t"]),
                resident(kp["w2_t"]), resident(kp["b2"]),
                resident(kp["w3_t"]), resident(kp["b3"]),
                resident(kp["w4_t"]), resident(kp["b4"]),
                resident(kp["w5_t"]), resident(kp["b5"]),
            ],
            out_specs=col_spec(OUT_ROWS),
        ),
        compiler_params=pltpu.CompilerParams(
            dimension_semantics=("parallel",),
            vmem_limit_bytes=32 * 1024 * 1024),
    )(sidT, xT, kp["ctx1_t"], kp["w1x_t"],
      kp["w2_t"], kp["b2"], kp["w3_t"], kp["b3"],
      kp["w4_t"], kp["b4"], kp["w5_t"], kp["b5"])

    return out[:OUT, :B].T                                       # [B, 1]


def init_params(key):
    """f32 master parameters matching the nn.Module shapes (weights as [in, out])."""
    ks = jax.random.split(key, 11)

    def lin(kw, kb, din, dout):
        lim = 1.0 / jnp.sqrt(din)
        w = jax.random.uniform(kw, (din, dout), jnp.float32, -lim, lim)
        b = jax.random.uniform(kb, (1, dout), jnp.float32, -lim, lim)
        return w, b

    p = {}
    p["embed"] = jax.random.normal(ks[0], (N_SCENARIOS, EMBED_DIM), jnp.float32)
    p["w1"], p["b1"] = lin(ks[1], ks[2], INPUT_DIM + EMBED_DIM, H1)
    p["w2"], p["b2"] = lin(ks[3], ks[4], H1, H2)
    p["w3"], p["b3"] = lin(ks[5], ks[6], H2, H3)
    p["w4"], p["b4"] = lin(ks[7], ks[8], H3, H4)
    p["w5"], p["b5"] = lin(ks[9], ks[10], H4, OUT)
    return p


def prepare_kernel_params(p):
    """Transpose / pad / cast master params to the kernel's bf16 batch-on-lanes layout."""
    bf16 = jnp.bfloat16
    kp = {}

    # Folded per-scenario layer-1 context: embed @ W1[5:] + b1  (bias folds exactly
    # because each one-hot column sums to 1; padded scenarios are never selected).
    ctx1 = p["embed"] @ p["w1"][INPUT_DIM:] + p["b1"]                     # [NS, H1]
    ctx1_pad = jnp.zeros((NS_PAD, H1), jnp.float32).at[:N_SCENARIOS].set(ctx1)
    kp["ctx1_t"] = ctx1_pad.T.astype(bf16)                                # [H1, NS_PAD]

    w1x = jnp.zeros((XPAD, H1), jnp.float32).at[:INPUT_DIM].set(p["w1"][:INPUT_DIM])
    kp["w1x_t"] = w1x.T.astype(bf16)                                      # [H1, XPAD]

    kp["w2_t"], kp["b2"] = p["w2"].T.astype(bf16), p["b2"].T              # [H2,H1],[H2,1]
    kp["w3_t"], kp["b3"] = p["w3"].T.astype(bf16), p["b3"].T
    kp["w4_t"], kp["b4"] = p["w4"].T.astype(bf16), p["b4"].T

    w5 = jnp.zeros((OUT_ROWS, H4), jnp.float32).at[:OUT].set(p["w5"].T)   # [8, H4]
    b5 = jnp.zeros((OUT_ROWS, 1), jnp.float32).at[:OUT, 0].set(p["b5"][0])
    kp["w5_t"], kp["b5"] = w5.astype(bf16), b5
    return kp


def reference_forward_f32(x, sid, p):
    """Pure-f32 reference of the PyTorch forward (dropout = identity)."""
    emb = jnp.take(p["embed"], sid, axis=0)
    h = jnp.concatenate([x, emb], axis=1)
    h = jnp.maximum(h @ p["w1"] + p["b1"], 0.0)
    h = jnp.maximum(h @ p["w2"] + p["b2"], 0.0)
    h = jnp.maximum(h @ p["w3"] + p["b3"], 0.0)
    h = jnp.maximum(h @ p["w4"] + p["b4"], 0.0)
    return h @ p["w5"] + p["b5"]


def reference_forward_mirror(x, sid, kp, bf16_epilogue):
    """Reference mirroring the kernel numerics exactly (bf16 weights, f32 MXU acc)."""
    f32 = jnp.float32
    B = x.shape[0]
    xT = jnp.zeros((XPAD, B), f32).at[:INPUT_DIM].set(x.T).astype(jnp.bfloat16)
    h = (jnp.dot(kp["w1x_t"], xT, preferred_element_type=f32)
         + jnp.take(kp["ctx1_t"], sid, axis=1).astype(f32))
    h = _epilogue(h, None, bf16_epilogue)
    for wt, b in ((kp["w2_t"], kp["b2"]), (kp["w3_t"], kp["b3"]), (kp["w4_t"], kp["b4"])):
        h = _epilogue(jnp.dot(wt, h, preferred_element_type=f32), b, bf16_epilogue)
    y = jnp.dot(kp["w5_t"], h, preferred_element_type=f32) + kp["b5"]
    return y[:OUT].T                                                       # [B, 1]


if __name__ == "__main__":
    key = jax.random.PRNGKey(0)
    k_x, k_sid, k_p = jax.random.split(key, 3)

    B = 300                       # deliberately NOT a multiple of the tile (pad path)
    x = jax.random.normal(k_x, (B, INPUT_DIM), jnp.float32)
    sid = jax.random.randint(k_sid, (B,), 0, N_SCENARIOS, jnp.int32)

    params = init_params(k_p)                 # f32 masters (PyTorch-equivalent)
    kparams = prepare_kernel_params(params)   # bf16 / transposed / padded kernel params

    bf16_ep = _default_bf16_epilogue()
    out = context_aware_mlp(x, sid, kparams, batch_tile=1024, bf16_epilogue=bf16_ep)
    out = jax.block_until_ready(out)
    assert out.shape == (B, OUT)

    # Tight check vs. a reference that mirrors the kernel numerics exactly.
    ref_mirror = reference_forward_mirror(x, sid, kparams, bf16_ep)
    assert jnp.allclose(out, ref_mirror, atol=1e-3, rtol=1e-3), "mismatch vs bf16 mirror"

    # Loose sanity check vs. the pure-f32 PyTorch-semantics reference
    # (bf16 weights/activations intentionally diverge slightly from f32).
    ref_f32 = reference_forward_f32(x, sid, params)
    assert float(jnp.max(jnp.abs(out - ref_f32))) < 1e-1, "mismatch vs f32 reference"

    print("KERNEL_OK")
</pallas_src>

<mosaic_0001>
module attributes {stable_mosaic.version = 11 : i64} {
  func.func @mlp_kernel(%arg0: i32, %arg1: memref<1x256xi32, #tpu.memory_space<vmem>>, %arg2: memref<16x256xbf16, #tpu.memory_space<vmem>>, %arg3: memref<256x16xbf16, #tpu.memory_space<vmem>>, %arg4: memref<256x16xbf16, #tpu.memory_space<vmem>>, %arg5: memref<512x256xbf16, #tpu.memory_space<vmem>>, %arg6: memref<512x1xf32, #tpu.memory_space<vmem>>, %arg7: memref<512x512xbf16, #tpu.memory_space<vmem>>, %arg8: memref<512x1xf32, #tpu.memory_space<vmem>>, %arg9: memref<256x512xbf16, #tpu.memory_space<vmem>>, %arg10: memref<256x1xf32, #tpu.memory_space<vmem>>, %arg11: memref<8x256xbf16, #tpu.memory_space<vmem>>, %arg12: memref<8x1xf32, #tpu.memory_space<vmem>>, %arg13: memref<8x256xf32, #tpu.memory_space<vmem>>) attributes {dimension_semantics = [#tpu.dimension_semantics<parallel>], iteration_bounds = array<i64: 2>, scalar_prefetch = 0 : i64, scratch_operands = 0 : i64, tpu.core_type = #tpu.core_type<tc>, window_params = [{transform_indices = @transform_0, window_bounds = array<i64: 1, 256>}, {transform_indices = @transform_1, window_bounds = array<i64: 16, 256>}, {pipeline_mode = #tpu.pipeline_mode<synchronous>, transform_indices = @transform_2, window_bounds = array<i64: 256, 16>}, {pipeline_mode = #tpu.pipeline_mode<synchronous>, transform_indices = @transform_3, window_bounds = array<i64: 256, 16>}, {pipeline_mode = #tpu.pipeline_mode<synchronous>, transform_indices = @transform_4, window_bounds = array<i64: 512, 256>}, {pipeline_mode = #tpu.pipeline_mode<synchronous>, transform_indices = @transform_5, window_bounds = array<i64: 512, 1>}, {pipeline_mode = #tpu.pipeline_mode<synchronous>, transform_indices = @transform_6, window_bounds = array<i64: 512, 512>}, {pipeline_mode = #tpu.pipeline_mode<synchronous>, transform_indices = @transform_7, window_bounds = array<i64: 512, 1>}, {pipeline_mode = #tpu.pipeline_mode<synchronous>, transform_indices = @transform_8, window_bounds = array<i64: 256, 512>}, {pipeline_mode = #tpu.pipeline_mode<synchronous>, transform_indices = @transform_9, window_bounds = array<i64: 256, 1>}, {pipeline_mode = #tpu.pipeline_mode<synchronous>, transform_indices = @transform_10, window_bounds = array<i64: 8, 256>}, {pipeline_mode = #tpu.pipeline_mode<synchronous>, transform_indices = @transform_11, window_bounds = array<i64: 8, 1>}, {transform_indices = @transform_12, window_bounds = array<i64: 8, 256>}]} {
    %c0 = arith.constant 0 : index
    %c0_0 = arith.constant 0 : index
    %0 = vector.load %arg1[%c0, %c0_0] : memref<1x256xi32, #tpu.memory_space<vmem>>, vector<1x256xi32>
    %1 = tpu.iota {dimensions = array<i32: 0>} : vector<16x256xi32>
    %2 = vector.broadcast %0 : vector<1x256xi32> to vector<16x256xi32>
    %3 = arith.cmpi eq, %1, %2 : vector<16x256xi32>
    %cst = arith.constant 1.000000e+00 : f32
    %cst_1 = arith.constant 0.000000e+00 : f32
    %4 = vector.broadcast %cst : f32 to vector<16x256xf32>
    %5 = vector.broadcast %cst_1 : f32 to vector<16x256xf32>
    %6 = arith.select %3, %4, %5 : vector<16x256xi1>, vector<16x256xf32>
    %7 = arith.truncf %6 : vector<16x256xf32> to vector<16x256xbf16>
    %c0_2 = arith.constant 0 : index
    %c0_3 = arith.constant 0 : index
    %8 = vector.load %arg4[%c0_2, %c0_3] : memref<256x16xbf16, #tpu.memory_space<vmem>>, vector<256x16xbf16>
    %c0_4 = arith.constant 0 : index
    %c0_5 = arith.constant 0 : index
    %9 = vector.load %arg2[%c0_4, %c0_5] : memref<16x256xbf16, #tpu.memory_space<vmem>>, vector<16x256xbf16>
    %cst_6 = arith.constant dense<0.000000e+00> : vector<256x256xf32>
    %10 = tpu.matmul %8, %9, %cst_6 {dimension_numbers = #tpu.dot_dimension_numbers<[1], [0], [0], [1], [0, 0, 1, 1], [], []>} : vector<256x16xbf16>, vector<16x256xbf16>, vector<256x256xf32> -> vector<256x256xf32>
    %c0_7 = arith.constant 0 : index
    %c0_8 = arith.constant 0 : index
    %11 = vector.load %arg3[%c0_7, %c0_8] : memref<256x16xbf16, #tpu.memory_space<vmem>>, vector<256x16xbf16>
    %cst_9 = arith.constant dense<0.000000e+00> : vector<256x256xf32>
    %12 = tpu.matmul %11, %7, %cst_9 {dimension_numbers = #tpu.dot_dimension_numbers<[1], [0], [0], [1], [0, 0, 1, 1], [], []>} : vector<256x16xbf16>, vector<16x256xbf16>, vector<256x256xf32> -> vector<256x256xf32>
    %13 = arith.addf %10, %12 : vector<256x256xf32>
    %14 = arith.truncf %13 : vector<256x256xf32> to vector<256x256xbf16>
    %cst_10 = arith.constant 0.000000e+00 : bf16
    %15 = vector.broadcast %cst_10 : bf16 to vector<256x256xbf16>
    %16 = arith.maximumf %14, %15 : vector<256x256xbf16>
    %c0_11 = arith.constant 0 : index
    %c0_12 = arith.constant 0 : index
    %17 = vector.load %arg5[%c0_11, %c0_12] : memref<512x256xbf16, #tpu.memory_space<vmem>>, vector<512x256xbf16>
    %cst_13 = arith.constant dense<0.000000e+00> : vector<512x256xf32>
    %18 = tpu.matmul %17, %16, %cst_13 {dimension_numbers = #tpu.dot_dimension_numbers<[1], [0], [0], [1], [0, 0, 1, 1], [], []>} : vector<512x256xbf16>, vector<256x256xbf16>, vector<512x256xf32> -> vector<512x256xf32>
    %c0_14 = arith.constant 0 : index
    %c0_15 = arith.constant 0 : index
    %19 = vector.load %arg6[%c0_14, %c0_15] : memref<512x1xf32, #tpu.memory_space<vmem>>, vector<512x1xf32>
    %20 = arith.truncf %18 : vector<512x256xf32> to vector<512x256xbf16>
    %21 = arith.truncf %19 : vector<512x1xf32> to vector<512x1xbf16>
    %22 = vector.broadcast %21 : vector<512x1xbf16> to vector<512x256xbf16>
    %23 = arith.addf %20, %22 : vector<512x256xbf16>
    %cst_16 = arith.constant 0.000000e+00 : bf16
    %24 = vector.broadcast %cst_16 : bf16 to vector<512x256xbf16>
    %25 = arith.maximumf %23, %24 : vector<512x256xbf16>
    %c0_17 = arith.constant 0 : index
    %c0_18 = arith.constant 0 : index
    %26 = vector.load %arg7[%c0_17, %c0_18] : memref<512x512xbf16, #tpu.memory_space<vmem>>, vector<512x512xbf16>
    %cst_19 = arith.constant dense<0.000000e+00> : vector<512x256xf32>
    %27 = tpu.matmul %26, %25, %cst_19 {dimension_numbers = #tpu.dot_dimension_numbers<[1], [0], [0], [1], [0, 0, 1, 1], [], []>} : vector<512x512xbf16>, vector<512x256xbf16>, vector<512x256xf32> -> vector<512x256xf32>
    %c0_20 = arith.constant 0 : index
    %c0_21 = arith.constant 0 : index
    %28 = vector.load %arg8[%c0_20, %c0_21] : memref<512x1xf32, #tpu.memory_space<vmem>>, vector<512x1xf32>
    %29 = arith.truncf %27 : vector<512x256xf32> to vector<512x256xbf16>
    %30 = arith.truncf %28 : vector<512x1xf32> to vector<512x1xbf16>
    %31 = vector.broadcast %30 : vector<512x1xbf16> to vector<512x256xbf16>
    %32 = arith.addf %29, %31 : vector<512x256xbf16>
    %cst_22 = arith.constant 0.000000e+00 : bf16
    %33 = vector.broadcast %cst_22 : bf16 to vector<512x256xbf16>
    %34 = arith.maximumf %32, %33 : vector<512x256xbf16>
    %c0_23 = arith.constant 0 : index
    %c0_24 = arith.constant 0 : index
    %35 = vector.load %arg9[%c0_23, %c0_24] : memref<256x512xbf16, #tpu.memory_space<vmem>>, vector<256x512xbf16>
    %cst_25 = arith.constant dense<0.000000e+00> : vector<256x256xf32>
    %36 = tpu.matmul %35, %34, %cst_25 {dimension_numbers = #tpu.dot_dimension_numbers<[1], [0], [0], [1], [0, 0, 1, 1], [], []>} : vector<256x512xbf16>, vector<512x256xbf16>, vector<256x256xf32> -> vector<256x256xf32>
    %c0_26 = arith.constant 0 : index
    %c0_27 = arith.constant 0 : index
    %37 = vector.load %arg10[%c0_26, %c0_27] : memref<256x1xf32, #tpu.memory_space<vmem>>, vector<256x1xf32>
    %38 = arith.truncf %36 : vector<256x256xf32> to vector<256x256xbf16>
    %39 = arith.truncf %37 : vector<256x1xf32> to vector<256x1xbf16>
    %40 = vector.broadcast %39 : vector<256x1xbf16> to vector<256x256xbf16>
    %41 = arith.addf %38, %40 : vector<256x256xbf16>
    %cst_28 = arith.constant 0.000000e+00 : bf16
    %42 = vector.broadcast %cst_28 : bf16 to vector<256x256xbf16>
    %43 = arith.maximumf %41, %42 : vector<256x256xbf16>
    %c0_29 = arith.constant 0 : index
    %c0_30 = arith.constant 0 : index
    %44 = vector.load %arg11[%c0_29, %c0_30] : memref<8x256xbf16, #tpu.memory_space<vmem>>, vector<8x256xbf16>
    %cst_31 = arith.constant dense<0.000000e+00> : vector<8x256xf32>
    %45 = tpu.matmul %44, %43, %cst_31 {dimension_numbers = #tpu.dot_dimension_numbers<[1], [0], [0], [1], [0, 0, 1, 1], [], []>} : vector<8x256xbf16>, vector<256x256xbf16>, vector<8x256xf32> -> vector<8x256xf32>
    %c0_32 = arith.constant 0 : index
    %c0_33 = arith.constant 0 : index
    %46 = vector.load %arg12[%c0_32, %c0_33] : memref<8x1xf32, #tpu.memory_space<vmem>>, vector<8x1xf32>
    %47 = vector.broadcast %46 : vector<8x1xf32> to vector<8x256xf32>
    %48 = arith.addf %45, %47 : vector<8x256xf32>
    %c0_34 = arith.constant 0 : index
    %c0_35 = arith.constant 0 : index
    %49 = vector.load %arg13[%c0_34, %c0_35] : memref<8x256xf32, #tpu.memory_space<vmem>>, vector<8x256xf32>
    tpu.vector_store %arg13[%c0_34, %c0_35], %48 {strides = array<i32>} : memref<8x256xf32, #tpu.memory_space<vmem>>, vector<8x256xf32>,
    return
  }
  func.func @transform_0(%arg0: i32) -> (i32, i32) {
    %c0_i32 = arith.constant 0 : i32
    %c0_i32_0 = arith.constant 0 : i32
    return %c0_i32, %arg0 : i32, i32
  }
  func.func @transform_1(%arg0: i32) -> (i32, i32) {
    %c0_i32 = arith.constant 0 : i32
    %c0_i32_0 = arith.constant 0 : i32
    return %c0_i32, %arg0 : i32, i32
  }
  func.func @transform_2(%arg0: i32) -> (i32, i32) {
    %c0_i32 = arith.constant 0 : i32
    %c0_i32_0 = arith.constant 0 : i32
    %c0_i32_1 = arith.constant 0 : i32
    return %c0_i32, %c0_i32_0 : i32, i32
  }
  func.func @transform_3(%arg0: i32) -> (i32, i32) {
    %c0_i32 = arith.constant 0 : i32
    %c0_i32_0 = arith.constant 0 : i32
    %c0_i32_1 = arith.constant 0 : i32
    return %c0_i32, %c0_i32_0 : i32, i32
  }
  func.func @transform_4(%arg0: i32) -> (i32, i32) {
    %c0_i32 = arith.constant 0 : i32
    %c0_i32_0 = arith.constant 0 : i32
    %c0_i32_1 = arith.constant 0 : i32
    return %c0_i32, %c0_i32_0 : i32, i32
  }
  func.func @transform_5(%arg0: i32) -> (i32, i32) {
    %c0_i32 = arith.constant 0 : i32
    %c0_i32_0 = arith.constant 0 : i32
    %c0_i32_1 = arith.constant 0 : i32
    return %c0_i32, %c0_i32_0 : i32, i32
  }
  func.func @transform_6(%arg0: i32) -> (i32, i32) {
    %c0_i32 = arith.constant 0 : i32
    %c0_i32_0 = arith.constant 0 : i32
    %c0_i32_1 = arith.constant 0 : i32
    return %c0_i32, %c0_i32_0 : i32, i32
  }
  func.func @transform_7(%arg0: i32) -> (i32, i32) {
    %c0_i32 = arith.constant 0 : i32
    %c0_i32_0 = arith.constant 0 : i32
    %c0_i32_1 = arith.constant 0 : i32
    return %c0_i32, %c0_i32_0 : i32, i32
  }
  func.func @transform_8(%arg0: i32) -> (i32, i32) {
    %c0_i32 = arith.constant 0 : i32
    %c0_i32_0 = arith.constant 0 : i32
    %c0_i32_1 = arith.constant 0 : i32
    return %c0_i32, %c0_i32_0 : i32, i32
  }
  func.func @transform_9(%arg0: i32) -> (i32, i32) {
    %c0_i32 = arith.constant 0 : i32
    %c0_i32_0 = arith.constant 0 : i32
    %c0_i32_1 = arith.constant 0 : i32
    return %c0_i32, %c0_i32_0 : i32, i32
  }
  func.func @transform_10(%arg0: i32) -> (i32, i32) {
    %c0_i32 = arith.constant 0 : i32
    %c0_i32_0 = arith.constant 0 : i32
    %c0_i32_1 = arith.constant 0 : i32
    return %c0_i32, %c0_i32_0 : i32, i32
  }
  func.func @transform_11(%arg0: i32) -> (i32, i32) {
    %c0_i32 = arith.constant 0 : i32
    %c0_i32_0 = arith.constant 0 : i32
    %c0_i32_1 = arith.constant 0 : i32
    return %c0_i32, %c0_i32_0 : i32, i32
  }
  func.func @transform_12(%arg0: i32) -> (i32, i32) {
    %c0_i32 = arith.constant 0 : i32
    %c0_i32_0 = arith.constant 0 : i32
    return %c0_i32, %arg0 : i32, i32
  }
}

</mosaic_0001>

<llo_original>
// kernel: tpu_custom_call.1
$region0: #{tpu_custom_call.1}
  #allocation0 [shape = 'u32[]', space=smem, size = 0x4, offset = 0x4, fixed_abs, tag = 'smem constant byte address 0x4 - core index']
  #allocation1 [shape = 'u32[144,128]{1,0:T(1,128)}', space=vmem, size = 0x12000, scoped, tag = 'internal scratch']
  %s0 = inlined_call_operand.vmem [shape: s32[1,512], index: 0, kind: input, shape index: {}]
  %s1 = inlined_call_operand.vmem [shape: bf16[16,512], index: 1, kind: input, shape index: {}]
  %s2 = inlined_call_operand.vmem [shape: bf16[256,16], index: 2, kind: input, shape index: {}]
  %s3 = inlined_call_operand.vmem [shape: bf16[256,16], index: 3, kind: input, shape index: {}]
  %s4 = inlined_call_operand.vmem [shape: bf16[512,256], index: 4, kind: input, shape index: {}]
  %s5 = inlined_call_operand.vmem [shape: f32[512,1], index: 5, kind: input, shape index: {}]
  %s6 = inlined_call_operand.vmem [shape: bf16[512,512], index: 6, kind: input, shape index: {}]
  %s7 = inlined_call_operand.vmem [shape: f32[512,1], index: 7, kind: input, shape index: {}]
  %s8 = inlined_call_operand.hbm [shape: bf16[256,512], index: 8, kind: input, shape index: {}]
  %s9 = inlined_call_operand.vmem [shape: f32[256,1], index: 9, kind: input, shape index: {}]
  %s10 = inlined_call_operand.vmem [shape: bf16[8,256], index: 10, kind: input, shape index: {}]
  %s11 = inlined_call_operand.vmem [shape: f32[8,1], index: 11, kind: input, shape index: {}]
  %s12 = inlined_call_operand.hbm [shape: f32[8,512], index: 12, kind: output, shape index: {}]
  %s13 = sld [smem:[#allocation0]]
  $region123: #{tpu_custom_call.1} parent=0
    _
  %s15 = ssub.s32 1, %s13
  %s16 = scalar_select 0, %s15, %s13
  $region1: #{tpu_custom_call.1} parent=0
    #allocation2 [shape = 'u8[16384]{0}', space=vmem, size = 0x4000, scoped, tag = 'input window, operand 1']
    #allocation3 [shape = 'u8[262144]{0}', space=vmem, size = 0x40000, scoped, tag = 'input window, operand 8, single buffered']
    #allocation4 [shape = 's32[2]{0}', space=sflag, size = 0x8, scoped, tag = 'scoped memory for tpu_custom_call.1']
    #allocation5 [shape = 's32[2]{0}', space=sflag, size = 0x8, scoped, tag = 'scoped memory for tpu_custom_call.1']
    #allocation6 [shape = 'u8[16384]{0}', space=vmem, size = 0x4000, scoped, tag = 'output window, operand 0']
    %17 = vsyncpa [#allocation4], 0
    %18 = vsyncpa [#allocation5], 0
    %s19 = scalar_lea.sflag [#allocation5], 1
    %20 = vsyncpa %s19, 0
    loop: start=0, step=1, limit=4
    $region2: #{tpu_custom_call.1} parent=1 // loop_pre_header
      _
    $region3: #{tpu_custom_call.1} parent=1 // loop_header
      %s22 = sphi 0, %s26
      %p23 = scmp.ge.s32.totalorder %s22, 4
      %s32 = sphi 0, %s34
      %s35 = sphi 0, %s32
      %s36 = sphi 0, %s35
      %s52 = sphi 0, %s36
      %s58 = sphi 0, %s60
      %s61 = sphi 0, %s58
      %s62 = sphi 0, %s61
      %s78 = sphi 0, %s62
      %s82 = sphi 0, %s82
      %s84 = sphi 0, %s82
      %s85 = sphi 0, %s84
      %s99 = sphi 0, %s85
      %s103 = sphi 0, %s103
      %s105 = sphi 0, %s103
      %s106 = sphi 0, %s105
      %s120 = sphi 0, %s106
      %s124 = sphi 0, %s124
      %s126 = sphi 0, %s124
      %s127 = sphi 0, %s126
      %s141 = sphi 0, %s127
      %s145 = sphi 0, %s145
      %s147 = sphi 0, %s145
      %s148 = sphi 0, %s147
      %s162 = sphi 0, %s148
      %s166 = sphi 0, %s166
      %s168 = sphi 0, %s166
      %s169 = sphi 0, %s168
      %s183 = sphi 0, %s169
      %s187 = sphi 0, %s187
      %s189 = sphi 0, %s187
      %s190 = sphi 0, %s189
      %s204 = sphi 0, %s190
      %s208 = sphi 0, %s208
      %s210 = sphi 0, %s208
      %s211 = sphi 0, %s210
      %s225 = sphi 0, %s211
      %s229 = sphi 0, %s229
      %s231 = sphi 0, %s229
      %s232 = sphi 0, %s231
      %s246 = sphi 0, %s232
      %s250 = sphi 0, %s250
      %s252 = sphi 0, %s250
      %s253 = sphi 0, %s252
      %s267 = sphi 0, %s253
      %s271 = sphi 0, %s271
      %s273 = sphi 0, %s271
      %s274 = sphi 0, %s273
      %s288 = sphi 0, %s274
      %s294 = sphi 0, %s296
      %s297 = sphi 0, %s294
      %s298 = sphi 0, %s297
      %s314 = sphi 0, %s298
    $region4: #{tpu_custom_call.1} parent=1 // loop_header_branch
      %25 = sbr.rel (%p23) target = $region8
    $region5: #{tpu_custom_call.1} parent=1 // loop_body
      %s27 = ssub.s32 %s22, 1
      %s28 = ssub.s32 %s22, 2
      %s29 = sadd.s32 %s22, 1
      %s30 = ssub.s32 %s22, %s29
      %p31 = scmp.eq.s32.totalorder %s30, 0
      %s33 = sadd.s32 %s32, 1
      %s34 = scalar_select %p31, %s32, %s33
      %p37 = pneg %p31
      %p38 = scmp.eq.s32.totalorder %s22, 1
      %p39 = por %p37, %p38
      %p40 = scmp.ne.s32.totalorder %s32, %s35
      %p41 = scmp.eq.s32.totalorder %s22, 0
      %p42 = por %p40, %p41
      %p43 = scmp.ne.s32.totalorder %s32, %s35
      %p44 = scmp.eq.s32.totalorder %s27, 1
      %p45 = por %p43, %p44
      %p46 = scmp.ne.s32.totalorder %s35, %s36
      %p47 = scmp.eq.s32.totalorder %s27, 0
      %p48 = por %p46, %p47
      %p49 = scmp.ne.s32.totalorder %s35, %s36
      %p50 = scmp.eq.s32.totalorder %s28, 1
      %p51 = por %p49, %p50
      %p53 = scmp.ne.s32.totalorder %s36, %s52
      %p54 = scmp.eq.s32.totalorder %s28, 0
      %p55 = por %p53, %p54
      %s56 = ssub.s32 %s22, %s29
      %p57 = scmp.eq.s32.totalorder %s56, 0
      %s59 = sadd.s32 %s58, 1
      %s60 = scalar_select %p57, %s58, %s59
      %p63 = pneg %p57
      %p64 = scmp.eq.s32.totalorder %s22, 1
      %p65 = por %p63, %p64
      %p66 = scmp.ne.s32.totalorder %s58, %s61
      %p67 = scmp.eq.s32.totalorder %s22, 0
      %p68 = por %p66, %p67
      %p69 = scmp.ne.s32.totalorder %s58, %s61
      %p70 = scmp.eq.s32.totalorder %s27, 1
      %p71 = por %p69, %p70
      %p72 = scmp.ne.s32.totalorder %s61, %s62
      %p73 = scmp.eq.s32.totalorder %s27, 0
      %p74 = por %p72, %p73
      %p75 = scmp.ne.s32.totalorder %s61, %s62
      %p76 = scmp.eq.s32.totalorder %s28, 1
      %p77 = por %p75, %p76
      %p79 = scmp.ne.s32.totalorder %s62, %s78
      %p80 = scmp.eq.s32.totalorder %s28, 0
      %p81 = por %p79, %p80
      %s83 = sadd.s32 %s82, 1
      %p86 = scmp.eq.s32.totalorder %s22, 1
      %p87 = scmp.ne.s32.totalorder %s82, %s84
      %p88 = scmp.eq.s32.totalorder %s22, 0
      %p89 = por %p87, %p88
      %p90 = scmp.ne.s32.totalorder %s82, %s84
      %p91 = scmp.eq.s32.totalorder %s27, 1
      %p92 = por %p90, %p91
      %p93 = scmp.ne.s32.totalorder %s84, %s85
      %p94 = scmp.eq.s32.totalorder %s27, 0
      %p95 = por %p93, %p94
      %p96 = scmp.ne.s32.totalorder %s84, %s85
      %p97 = scmp.eq.s32.totalorder %s28, 1
      %p98 = por %p96, %p97
      %p100 = scmp.ne.s32.totalorder %s85, %s99
      %p101 = scmp.eq.s32.totalorder %s28, 0
      %p102 = por %p100, %p101
      %s104 = sadd.s32 %s103, 1
      %p107 = scmp.eq.s32.totalorder %s22, 1
      %p108 = scmp.ne.s32.totalorder %s103, %s105
      %p109 = scmp.eq.s32.totalorder %s22, 0
      %p110 = por %p108, %p109
      %p111 = scmp.ne.s32.totalorder %s103, %s105
      %p112 = scmp.eq.s32.totalorder %s27, 1
      %p113 = por %p111, %p112
      %p114 = scmp.ne.s32.totalorder %s105, %s106
      %p115 = scmp.eq.s32.totalorder %s27, 0
      %p116 = por %p114, %p115
      %p117 = scmp.ne.s32.totalorder %s105, %s106
      %p118 = scmp.eq.s32.totalorder %s28, 1
      %p119 = por %p117, %p118
      %p121 = scmp.ne.s32.totalorder %s106, %s120
      %p122 = scmp.eq.s32.totalorder %s28, 0
      %p123 = por %p121, %p122
      %s125 = sadd.s32 %s124, 1
      %p128 = scmp.eq.s32.totalorder %s22, 1
      %p129 = scmp.ne.s32.totalorder %s124, %s126
      %p130 = scmp.eq.s32.totalorder %s22, 0
      %p131 = por %p129, %p130
      %p132 = scmp.ne.s32.totalorder %s124, %s126
      %p133 = scmp.eq.s32.totalorder %s27, 1
      %p134 = por %p132, %p133
      %p135 = scmp.ne.s32.totalorder %s126, %s127
      %p136 = scmp.eq.s32.totalorder %s27, 0
      %p137 = por %p135, %p136
      %p138 = scmp.ne.s32.totalorder %s126, %s127
      %p139 = scmp.eq.s32.totalorder %s28, 1
      %p140 = por %p138, %p139
      %p142 = scmp.ne.s32.totalorder %s127, %s141
      %p143 = scmp.eq.s32.totalorder %s28, 0
      %p144 = por %p142, %p143
      %s146 = sadd.s32 %s145, 1
      %p149 = scmp.eq.s32.totalorder %s22, 1
      %p150 = scmp.ne.s32.totalorder %s145, %s147
      %p151 = scmp.eq.s32.totalorder %s22, 0
      %p152 = por %p150, %p151
      %p153 = scmp.ne.s32.totalorder %s145, %s147
      %p154 = scmp.eq.s32.totalorder %s27, 1
      %p155 = por %p153, %p154
      %p156 = scmp.ne.s32.totalorder %s147, %s148
      %p157 = scmp.eq.s32.totalorder %s27, 0
      %p158 = por %p156, %p157
      %p159 = scmp.ne.s32.totalorder %s147, %s148
      %p160 = scmp.eq.s32.totalorder %s28, 1
      %p161 = por %p159, %p160
      %p163 = scmp.ne.s32.totalorder %s148, %s162
      %p164 = scmp.eq.s32.totalorder %s28, 0
      %p165 = por %p163, %p164
      %s167 = sadd.s32 %s166, 1
      %p170 = scmp.eq.s32.totalorder %s22, 1
      %p171 = scmp.ne.s32.totalorder %s166, %s168
      %p172 = scmp.eq.s32.totalorder %s22, 0
      %p173 = por %p171, %p172
      %p174 = scmp.ne.s32.totalorder %s166, %s168
      %p175 = scmp.eq.s32.totalorder %s27, 1
      %p176 = por %p174, %p175
      %p177 = scmp.ne.s32.totalorder %s168, %s169
      %p178 = scmp.eq.s32.totalorder %s27, 0
      %p179 = por %p177, %p178
      %p180 = scmp.ne.s32.totalorder %s168, %s169
      %p181 = scmp.eq.s32.totalorder %s28, 1
      %p182 = por %p180, %p181
      %p184 = scmp.ne.s32.totalorder %s169, %s183
      %p185 = scmp.eq.s32.totalorder %s28, 0
      %p186 = por %p184, %p185
      %s188 = sadd.s32 %s187, 1
      %p191 = scmp.eq.s32.totalorder %s22, 1
      %p192 = scmp.ne.s32.totalorder %s187, %s189
      %p193 = scmp.eq.s32.totalorder %s22, 0
      %p194 = por %p192, %p193
      %p195 = scmp.ne.s32.totalorder %s187, %s189
      %p196 = scmp.eq.s32.totalorder %s27, 1
      %p197 = por %p195, %p196
      %p198 = scmp.ne.s32.totalorder %s189, %s190
      %p199 = scmp.eq.s32.totalorder %s27, 0
      %p200 = por %p198, %p199
      %p201 = scmp.ne.s32.totalorder %s189, %s190
      %p202 = scmp.eq.s32.totalorder %s28, 1
      %p203 = por %p201, %p202
      %p205 = scmp.ne.s32.totalorder %s190, %s204
      %p206 = scmp.eq.s32.totalorder %s28, 0
      %p207 = por %p205, %p206
      %s209 = sadd.s32 %s208, 1
      %p212 = scmp.eq.s32.totalorder %s22, 1
      %p213 = scmp.ne.s32.totalorder %s208, %s210
      %p214 = scmp.eq.s32.totalorder %s22, 0
      %p215 = por %p213, %p214
      %p216 = scmp.ne.s32.totalorder %s208, %s210
      %p217 = scmp.eq.s32.totalorder %s27, 1
      %p218 = por %p216, %p217
      %p219 = scmp.ne.s32.totalorder %s210, %s211
      %p220 = scmp.eq.s32.totalorder %s27, 0
      %p221 = por %p219, %p220
      %p222 = scmp.ne.s32.totalorder %s210, %s211
      %p223 = scmp.eq.s32.totalorder %s28, 1
      %p224 = por %p222, %p223
      %p226 = scmp.ne.s32.totalorder %s211, %s225
      %p227 = scmp.eq.s32.totalorder %s28, 0
      %p228 = por %p226, %p227
      %s230 = sadd.s32 %s229, 1
      %p233 = scmp.eq.s32.totalorder %s22, 1
      %p234 = scmp.ne.s32.totalorder %s229, %s231
      %p235 = scmp.eq.s32.totalorder %s22, 0
      %p236 = por %p234, %p235
      %p237 = scmp.ne.s32.totalorder %s229, %s231
      %p238 = scmp.eq.s32.totalorder %s27, 1
      %p239 = por %p237, %p238
      %p240 = scmp.ne.s32.totalorder %s231, %s232
      %p241 = scmp.eq.s32.totalorder %s27, 0
      %p242 = por %p240, %p241
      %p243 = scmp.ne.s32.totalorder %s231, %s232
      %p244 = scmp.eq.s32.totalorder %s28, 1
      %p245 = por %p243, %p244
      %p247 = scmp.ne.s32.totalorder %s232, %s246
      %p248 = scmp.eq.s32.totalorder %s28, 0
      %p249 = por %p247, %p248
      %s251 = sadd.s32 %s250, 1
      %p254 = scmp.eq.s32.totalorder %s22, 1
      %p255 = scmp.ne.s32.totalorder %s250, %s252
      %p256 = scmp.eq.s32.totalorder %s22, 0
      %p257 = por %p255, %p256
      %p258 = scmp.ne.s32.totalorder %s250, %s252
      %p259 = scmp.eq.s32.totalorder %s27, 1
      %p260 = por %p258, %p259
      %p261 = scmp.ne.s32.totalorder %s252, %s253
      %p262 = scmp.eq.s32.totalorder %s27, 0
      %p263 = por %p261, %p262
      %p264 = scmp.ne.s32.totalorder %s252, %s253
      %p265 = scmp.eq.s32.totalorder %s28, 1
      %p266 = por %p264, %p265
      %p268 = scmp.ne.s32.totalorder %s253, %s267
      %p269 = scmp.eq.s32.totalorder %s28, 0
      %p270 = por %p268, %p269
      %s272 = sadd.s32 %s271, 1
      %p275 = scmp.eq.s32.totalorder %s22, 1
      %p276 = scmp.ne.s32.totalorder %s271, %s273
      %p277 = scmp.eq.s32.totalorder %s22, 0
      %p278 = por %p276, %p277
      %p279 = scmp.ne.s32.totalorder %s271, %s273
      %p280 = scmp.eq.s32.totalorder %s27, 1
      %p281 = por %p279, %p280
      %p282 = scmp.ne.s32.totalorder %s273, %s274
      %p283 = scmp.eq.s32.totalorder %s27, 0
      %p284 = por %p282, %p283
      %p285 = scmp.ne.s32.totalorder %s273, %s274
      %p286 = scmp.eq.s32.totalorder %s28, 1
      %p287 = por %p285, %p286
      %p289 = scmp.ne.s32.totalorder %s274, %s288
      %p290 = scmp.eq.s32.totalorder %s28, 0
      %p291 = por %p289, %p290
      %s292 = ssub.s32 %s22, %s29
      %p293 = scmp.eq.s32.totalorder %s292, 0
      %s295 = sadd.s32 %s294, 1
      %s296 = scalar_select %p293, %s294, %s295
      %p299 = pneg %p293
      %p300 = scmp.eq.s32.totalorder %s22, 1
      %p301 = por %p299, %p300
      %p302 = scmp.ne.s32.totalorder %s294, %s297
      %p303 = scmp.eq.s32.totalorder %s22, 0
      %p304 = por %p302, %p303
      %p305 = scmp.ne.s32.totalorder %s294, %s297
      %p306 = scmp.eq.s32.totalorder %s27, 1
      %p307 = por %p305, %p306
      %p308 = scmp.ne.s32.totalorder %s297, %s298
      %p309 = scmp.eq.s32.totalorder %s27, 0
      %p310 = por %p308, %p309
      %p311 = scmp.ne.s32.totalorder %s297, %s298
      %p312 = scmp.eq.s32.totalorder %s28, 1
      %p313 = por %p311, %p312
      %p315 = scmp.ne.s32.totalorder %s298, %s314
      %p316 = scmp.eq.s32.totalorder %s28, 0
      %p317 = por %p315, %p316
      %p318 = scmp.le.s32.totalorder 1, %s22
      %p319 = scmp.lt.s32.totalorder %s22, 3
      %p320 = pnand %p318, %p319
      %p321 = pneg %p320
      // Predicated region
      $region9: #{tpu_custom_call.1} parent=5 // pred_check
        _
      $region10: #{tpu_custom_call.1} parent=5 // pred_check_branch
        %323 = sbr.rel (%p320) target = $region12
      $region11: #{tpu_custom_call.1} parent=5 // pred_region
        %s324 = ssub.s32 %s22, 1
        // Predicated region
        $region13: #{tpu_custom_call.1} parent=11 // pred_check
          %p325 = pneg %p95
        $region14: #{tpu_custom_call.1} parent=11 // pred_check_branch
          %327 = sbr.rel (%p325) target = $region16
        $region15: #{tpu_custom_call.1} parent=11 // pred_region
          _
        $region16: #{tpu_custom_call.1} parent=11 // pred_fallthru
          _
        // Predicated region
        $region17: #{tpu_custom_call.1} parent=11 // pred_check
          %p328 = pneg %p116
        $region18: #{tpu_custom_call.1} parent=11 // pred_check_branch
          %330 = sbr.rel (%p328) target = $region20
        $region19: #{tpu_custom_call.1} parent=11 // pred_region
          _
        $region20: #{tpu_custom_call.1} parent=11 // pred_fallthru
          _
        // Predicated region
        $region21: #{tpu_custom_call.1} parent=11 // pred_check
          %p331 = pneg %p137
        $region22: #{tpu_custom_call.1} parent=11 // pred_check_branch
          %333 = sbr.rel (%p331) target = $region24
        $region23: #{tpu_custom_call.1} parent=11 // pred_region
          _
        $region24: #{tpu_custom_call.1} parent=11 // pred_fallthru
          _
        // Predicated region
        $region25: #{tpu_custom_call.1} parent=11 // pred_check
          %p334 = pneg %p158
        $region26: #{tpu_custom_call.1} parent=11 // pred_check_branch
          %336 = sbr.rel (%p334) target = $region28
        $region27: #{tpu_custom_call.1} parent=11 // pred_region
          _
        $region28: #{tpu_custom_call.1} parent=11 // pred_fallthru
          _
        // Predicated region
        $region29: #{tpu_custom_call.1} parent=11 // pred_check
          %p337 = pneg %p179
        $region30: #{tpu_custom_call.1} parent=11 // pred_check_branch
          %339 = sbr.rel (%p337) target = $region32
        $region31: #{tpu_custom_call.1} parent=11 // pred_region
          _
        $region32: #{tpu_custom_call.1} parent=11 // pred_fallthru
          _
        // Predicated region
        $region33: #{tpu_custom_call.1} parent=11 // pred_check
          %p340 = pneg %p200
        $region34: #{tpu_custom_call.1} parent=11 // pred_check_branch
          %342 = sbr.rel (%p340) target = $region36
        $region35: #{tpu_custom_call.1} parent=11 // pred_region
          _
        $region36: #{tpu_custom_call.1} parent=11 // pred_fallthru
          _
        // Predicated region
        $region37: #{tpu_custom_call.1} parent=11 // pred_check
          %p343 = pneg %p221
        $region38: #{tpu_custom_call.1} parent=11 // pred_check_branch
          %345 = sbr.rel (%p343) target = $region40
        $region39: #{tpu_custom_call.1} parent=11 // pred_region
          %s347 = ssub.s32 8192, 8192
          %348 = vsyncadd [#allocation4], %s347
          %s349 = sshll.u32 [#allocation3], 4
          %s350 = int_to_ptr.vmem [resolvable:$true] %s349
          %355 = dma.hbm_to_vmem [thread:$0]  %s8, 8192, %s350, [#allocation4], 256, 256, 16
        $region40: #{tpu_custom_call.1} parent=11 // pred_fallthru
          _
        // Predicated region
        $region41: #{tpu_custom_call.1} parent=11 // pred_check
          %p356 = pneg %p242
        $region42: #{tpu_custom_call.1} parent=11 // pred_check_branch
          %358 = sbr.rel (%p356) target = $region44
        $region43: #{tpu_custom_call.1} parent=11 // pred_region
          _
        $region44: #{tpu_custom_call.1} parent=11 // pred_fallthru
          _
        // Predicated region
        $region45: #{tpu_custom_call.1} parent=11 // pred_check
          %p359 = pneg %p263
        $region46: #{tpu_custom_call.1} parent=11 // pred_check_branch
          %361 = sbr.rel (%p359) target = $region48
        $region47: #{tpu_custom_call.1} parent=11 // pred_region
          _
        $region48: #{tpu_custom_call.1} parent=11 // pred_fallthru
          _
        // Predicated region
        $region49: #{tpu_custom_call.1} parent=11 // pred_check
          %p362 = pneg %p284
        $region50: #{tpu_custom_call.1} parent=11 // pred_check_branch
          %364 = sbr.rel (%p362) target = $region52
        $region51: #{tpu_custom_call.1} parent=11 // pred_region
          _
        $region52: #{tpu_custom_call.1} parent=11 // pred_fallthru
          _
      $region12: #{tpu_custom_call.1} parent=5 // pred_fallthru
        _
      %p365 = scmp.lt.s32.totalorder %s22, 2
      // Predicated region
      $region53: #{tpu_custom_call.1} parent=5 // pred_check
        %p366 = pneg %p365
      $region54: #{tpu_custom_call.1} parent=5 // pred_check_branch
        %368 = sbr.rel (%p366) target = $region56
      $region55: #{tpu_custom_call.1} parent=5 // pred_region
        // Predicated region
        $region57: #{tpu_custom_call.1} parent=55 // pred_check
          %p369 = pneg %p42
        $region58: #{tpu_custom_call.1} parent=55 // pred_check_branch
          %371 = sbr.rel (%p369) target = $region60
        $region59: #{tpu_custom_call.1} parent=55 // pred_region
          %s372 = smul.u32 2, %s22
          %p373 = scmp.lt.s32.totalorder %s372, 3
          %s374 = scalar_select %p373, %s372, 3
          %s375 = scalar_lea.vmem %s0, %s374
          %s376 = smul.u32 2, %s22
        $region60: #{tpu_custom_call.1} parent=55 // pred_fallthru
          _
        // Predicated region
        $region61: #{tpu_custom_call.1} parent=55 // pred_check
          %p377 = pneg %p68
        $region62: #{tpu_custom_call.1} parent=55 // pred_check_branch
          %379 = sbr.rel (%p377) target = $region64
        $region63: #{tpu_custom_call.1} parent=55 // pred_region
          %s380 = sand.u32 %s58, 1
          %s381 = sand.u32 %s58, 1
          %s382 = smul.addr %s381, 16
          %s383 = scalar_lea.vmem [#allocation2], %s382
          %s384 = smul.u32 2, %s22
          %s385 = smul.addr %s384, 4
          %s386 = scalar_lea.vmem %s1, %s385
          // Predicated region
          $region65: #{tpu_custom_call.1} parent=63 // pred_check
            _
          $region66: #{tpu_custom_call.1} parent=63 // pred_check_branch
            %388 = sbr.rel (0) target = $region68
          $region67: #{tpu_custom_call.1} parent=63 // pred_region
            // Predicated region
            $region69: #{tpu_custom_call.1} parent=67 // pred_check
              _
            $region70: #{tpu_custom_call.1} parent=67 // pred_check_branch
              %390 = sbr.rel (0) target = $region72
            $region71: #{tpu_custom_call.1} parent=67 // pred_region
              // Predicated region
              $region84: #{tpu_custom_call.1} parent=71 // pred_check
                _
              $region85: #{tpu_custom_call.1} parent=71 // pred_check_branch
                %408 = sbr.rel (0) target = $region87
              $region86: #{tpu_custom_call.1} parent=71 // pred_region
                loop: start=0, step=1, limit=1
                $region88: #{tpu_custom_call.1} parent=86 // loop_pre_header
                  _
                $region89: #{tpu_custom_call.1} parent=86 // loop_header
                  %s410 = sphi 0, %s414
                  %p411 = scmp.ge.s32.totalorder %s410, 1
                  %s415 = sphi %s386, %s386
                  %s416 = sphi %s383, %s383
                $region90: #{tpu_custom_call.1} parent=86 // loop_header_branch
                  %413 = sbr.rel (%p411) target = $region94
                $region91: #{tpu_custom_call.1} parent=86 // loop_body
                  %v417 = vld [vmem:[%s415] sm:$0xff]
                  %418 = vst [vmem:[%s416] sm:$0xff] %v417
                  %v419 = vld [vmem:[%s415 + $0x10] sm:$0xff]
                  %420 = vst [vmem:[%s416 + $0x8] sm:$0xff] %v419
                $region92: #{tpu_custom_call.1} parent=86 // loop_footer
                  %s414 = sadd.s32 1, %s410
                $region93: #{tpu_custom_call.1} parent=86 // loop_footer_branch
                  %409 = sbr.rel target = $region89
                $region94: #{tpu_custom_call.1} parent=86 // loop_exit
                  _
              $region87: #{tpu_custom_call.1} parent=71 // pred_fallthru
                _
              // Predicated region
              $region95: #{tpu_custom_call.1} parent=71 // pred_check
                _
              $region96: #{tpu_custom_call.1} parent=71 // pred_check_branch
                %422 = sbr.rel target = $region98
              $region97: #{tpu_custom_call.1} parent=71 // pred_region
                _
              $region98: #{tpu_custom_call.1} parent=71 // pred_fallthru
                _
            $region72: #{tpu_custom_call.1} parent=67 // pred_fallthru
              _
            // Predicated region
            $region73: #{tpu_custom_call.1} parent=67 // pred_check
              _
            $region74: #{tpu_custom_call.1} parent=67 // pred_check_branch
              %392 = sbr.rel target = $region76
            $region75: #{tpu_custom_call.1} parent=67 // pred_region
              %s394 = ssub.s32 256, 1
              loop: start=0, step=1, limit=1
              $region77: #{tpu_custom_call.1} parent=75 // loop_pre_header
                _
              $region78: #{tpu_custom_call.1} parent=75 // loop_header
                %s396 = sphi 0, %s400
                %p397 = scmp.ge.s32.totalorder %s396, 1
                %s401 = sphi %s386, %s386
                %s402 = sphi %s383, %s383
              $region79: #{tpu_custom_call.1} parent=75 // loop_header_branch
                %399 = sbr.rel (%p397) target = $region83
              $region80: #{tpu_custom_call.1} parent=75 // loop_body
                %v403 = vld [vmem:[%s401] sm:%s394]
                %404 = vst [vmem:[%s402] sm:%s394] %v403
                %v405 = vld [vmem:[%s401 + $0x10] sm:%s394]
                %406 = vst [vmem:[%s402 + $0x8] sm:%s394] %v405
              $region81: #{tpu_custom_call.1} parent=75 // loop_footer
                %s400 = sadd.s32 1, %s396
              $region82: #{tpu_custom_call.1} parent=75 // loop_footer_branch
                %395 = sbr.rel target = $region78
              $region83: #{tpu_custom_call.1} parent=75 // loop_exit
                _
            $region76: #{tpu_custom_call.1} parent=67 // pred_fallthru
              _
          $region68: #{tpu_custom_call.1} parent=63 // pred_fallthru
            _
          %423 = vnop
        $region64: #{tpu_custom_call.1} parent=55 // pred_fallthru
          _
      $region56: #{tpu_custom_call.1} parent=5 // pred_fallthru
        _
      %p424 = scmp.le.s32.totalorder 1, %s22
      %p425 = scmp.lt.s32.totalorder %s22, 3
      %p426 = pnand %p424, %p425
      %p427 = pneg %p426
      // Predicated region
      $region99: #{tpu_custom_call.1} parent=5 // pred_check
        _
      $region100: #{tpu_custom_call.1} parent=5 // pred_check_branch
        %429 = sbr.rel (%p426) target = $region102
      $region101: #{tpu_custom_call.1} parent=5 // pred_region
        %s430 = ssub.s32 %s22, 1
        %s431 = sand.u32 %s61, 1
        %s432 = sand.u32 %s61, 1
        %s433 = smul.addr %s432, 16
        %s434 = scalar_lea.vmem [#allocation2], %s433
        // Predicated region
        $region103: #{tpu_custom_call.1} parent=101 // pred_check
          %p435 = pneg %p74
        $region104: #{tpu_custom_call.1} parent=101 // pred_check_branch
          %437 = sbr.rel (%p435) target = $region106
        $region105: #{tpu_custom_call.1} parent=101 // pred_region
          _
        $region106: #{tpu_custom_call.1} parent=101 // pred_fallthru
          _
        // Predicated region
        $region107: #{tpu_custom_call.1} parent=101 // pred_check
          %p438 = pneg %p221
        $region108: #{tpu_custom_call.1} parent=101 // pred_check_branch
          %440 = sbr.rel (%p438) target = $region110
        $region109: #{tpu_custom_call.1} parent=101 // pred_region
          %441 = dma.done [#allocation4], 8192
        $region110: #{tpu_custom_call.1} parent=101 // pred_fallthru
          _
        %s442 = smul.u32 2, %s27
        %p443 = scmp.lt.s32.totalorder %s442, 3
        %s444 = scalar_select %p443, %s442, 3
        %s445 = scalar_lea.vmem %s0, %s444
        %p446 = pneg %p48
        %p447 = pneg %p45
        %s448 = sand.u32 %s61, 1
        %s449 = sand.u32 %s61, 1
        %s450 = smul.addr %s449, 16
        %s451 = scalar_lea.vmem [#allocation2], %s450
        %p452 = pneg %p74
        %p453 = pneg %p71
        %p454 = pneg %p95
        %p455 = pneg %p92
        %p456 = pneg %p116
        %p457 = pneg %p113
        %p458 = pneg %p137
        %p459 = pneg %p134
        %p460 = pneg %p158
        %p461 = pneg %p155
        %p462 = pneg %p179
        %p463 = pneg %p176
        %p464 = pneg %p200
        %p465 = pneg %p197
        %p466 = pneg %p221
        %p467 = pneg %p218
        %p468 = pneg %p242
        %p469 = pneg %p239
        %p470 = pneg %p263
        %p471 = pneg %p260
        %p472 = pneg %p284
        %p473 = pneg %p281
        %p474 = pneg %p310
        %p475 = pneg %p307
        %s476 = sand.u32 %s297, 1
        %s477 = scalar_lea.sflag [#allocation5], %s476
        %s478 = sand.u32 %s297, 1
        %s479 = smul.addr %s478, 16
        %s480 = scalar_lea.vmem [#allocation6], %s479
        %s481 = smul.u32 2, %s27
        %p482 = scmp.lt.s32.totalorder %s481, 3
        %s483 = scalar_select %p482, %s481, 3
        %s484 = scalar_lea.vmem %s0, %s483
        %s485 = smul.u32 2, %s27
        %s486 = smul.u32 2, %s27
        %s487 = smul.u32 2, %s27
        %v489 = vld [vmem:[%s484] sm:$0x3]
        %v490 = vlaneseq
        %v491 = vshrl.u32 %v490, 7
        %v492 = vadd.s32 %v491, 8
        %v493 = vlaneseq
        %v494 = vshrl.u32 %v493, 7
        %v495 = vsub.s32 0, %v494
        %v496 = vrot.slane %v489, %v495
        %v497 = vlaneseq
        %v498 = vshrl.u32 %v497, 7
        %v499 = vsub.s32 1, %v498
        %v500 = vrot.slane %v489, %v499
        %vm501 = vcmp.eq.s32.totalorder %v491, %v496
        %vm502 = vcmp.eq.s32.totalorder %v491, %v500
        %vm503 = vcmp.eq.s32.totalorder %v492, %v496
        %vm504 = vcmp.eq.s32.totalorder %v492, %v500
        %v505 = vsel %vm501, 1.0, 0.0
        %v506 = vsel %vm502, 1.0, 0.0
        %v507 = vsel %vm503, 1.0, 0.0
        %v508 = vsel %vm504, 1.0, 0.0
        %v509 = vpack.c.bf16 %v507, %v505
        %v510 = vpack.c.bf16 %v508, %v506
        %v511 = vld [vmem:[%s3] sm:$0xf]
        %v512 = vld [vmem:[%s3 + $0x4] sm:$0xf]
        %v513 = vld [vmem:[%s3 + $0x8] sm:$0xf]
        %v514 = vld [vmem:[%s3 + $0xc] sm:$0xf]
        %v515 = vld [vmem:[%s3 + $0x10] sm:$0xf]
        %v516 = vld [vmem:[%s3 + $0x14] sm:$0xf]
        %v517 = vld [vmem:[%s3 + $0x18] sm:$0xf]
        %v518 = vld [vmem:[%s3 + $0x1c] sm:$0xf]
        %v519 = vld [vmem:[%s3 + $0x20] sm:$0xf]
        %v520 = vld [vmem:[%s3 + $0x24] sm:$0xf]
        %v521 = vld [vmem:[%s3 + $0x28] sm:$0xf]
        %v522 = vld [vmem:[%s3 + $0x2c] sm:$0xf]
        %v523 = vld [vmem:[%s3 + $0x30] sm:$0xf]
        %v524 = vld [vmem:[%s3 + $0x34] sm:$0xf]
        %v525 = vld [vmem:[%s3 + $0x38] sm:$0xf]
        %v526 = vld [vmem:[%s3 + $0x3c] sm:$0xf]
        %v527 = vld [vmem:[%s3 + $0x40] sm:$0xf]
        %v528 = vld [vmem:[%s3 + $0x44] sm:$0xf]
        %v529 = vld [vmem:[%s3 + $0x48] sm:$0xf]
        %v530 = vld [vmem:[%s3 + $0x4c] sm:$0xf]
        %v531 = vld [vmem:[%s3 + $0x50] sm:$0xf]
        %v532 = vld [vmem:[%s3 + $0x54] sm:$0xf]
        %v533 = vld [vmem:[%s3 + $0x58] sm:$0xf]
        %v534 = vld [vmem:[%s3 + $0x5c] sm:$0xf]
        %v535 = vld [vmem:[%s3 + $0x60] sm:$0xf]
        %v536 = vld [vmem:[%s3 + $0x64] sm:$0xf]
        %v537 = vld [vmem:[%s3 + $0x68] sm:$0xf]
        %v538 = vld [vmem:[%s3 + $0x6c] sm:$0xf]
        %v539 = vld [vmem:[%s3 + $0x70] sm:$0xf]
        %v540 = vld [vmem:[%s3 + $0x74] sm:$0xf]
        %v541 = vld [vmem:[%s3 + $0x78] sm:$0xf]
        %v542 = vld [vmem:[%s3 + $0x7c] sm:$0xf]
        %v543 = vld [vmem:[%s434] sm:$0xff]
        %v544 = vld [vmem:[%s434 + $0x8] sm:$0xff]
        %v545 = vld [vmem:[%s2] sm:$0xf]
        %v546 = vld [vmem:[%s2 + $0x4] sm:$0xf]
        %v547 = vld [vmem:[%s2 + $0x8] sm:$0xf]
        %v548 = vld [vmem:[%s2 + $0xc] sm:$0xf]
        %v549 = vld [vmem:[%s2 + $0x10] sm:$0xf]
        %v550 = vld [vmem:[%s2 + $0x14] sm:$0xf]
        %v551 = vld [vmem:[%s2 + $0x18] sm:$0xf]
        %v552 = vld [vmem:[%s2 + $0x1c] sm:$0xf]
        %v553 = vld [vmem:[%s2 + $0x20] sm:$0xf]
        %v554 = vld [vmem:[%s2 + $0x24] sm:$0xf]
        %v555 = vld [vmem:[%s2 + $0x28] sm:$0xf]
        %v556 = vld [vmem:[%s2 + $0x2c] sm:$0xf]
        %v557 = vld [vmem:[%s2 + $0x30] sm:$0xf]
        %v558 = vld [vmem:[%s2 + $0x34] sm:$0xf]
        %v559 = vld [vmem:[%s2 + $0x38] sm:$0xf]
        %v560 = vld [vmem:[%s2 + $0x3c] sm:$0xf]
        %v561 = vld [vmem:[%s2 + $0x40] sm:$0xf]
        %v562 = vld [vmem:[%s2 + $0x44] sm:$0xf]
        %v563 = vld [vmem:[%s2 + $0x48] sm:$0xf]
        %v564 = vld [vmem:[%s2 + $0x4c] sm:$0xf]
        %v565 = vld [vmem:[%s2 + $0x50] sm:$0xf]
        %v566 = vld [vmem:[%s2 + $0x54] sm:$0xf]
        %v567 = vld [vmem:[%s2 + $0x58] sm:$0xf]
        %v568 = vld [vmem:[%s2 + $0x5c] sm:$0xf]
        %v569 = vld [vmem:[%s2 + $0x60] sm:$0xf]
        %v570 = vld [vmem:[%s2 + $0x64] sm:$0xf]
        %v571 = vld [vmem:[%s2 + $0x68] sm:$0xf]
        %v572 = vld [vmem:[%s2 + $0x6c] sm:$0xf]
        %v573 = vld [vmem:[%s2 + $0x70] sm:$0xf]
        %v574 = vld [vmem:[%s2 + $0x74] sm:$0xf]
        %v575 = vld [vmem:[%s2 + $0x78] sm:$0xf]
        %v576 = vld [vmem:[%s2 + $0x7c] sm:$0xf]
        %v609 = vunpack.c.l.b16 %v545
        %v610 = vunpack.c.l.b16 %v546
        %v611 = vunpack.c.l.b16 %v547
        %v612 = vunpack.c.l.b16 %v548
        %v613 = vunpack.c.l.b16 %v549
        %v614 = vunpack.c.l.b16 %v550
        %v615 = vunpack.c.l.b16 %v551
        %v616 = vunpack.c.l.b16 %v552
        %v617 = vunpack.c.l.b16 %v553
        %v618 = vunpack.c.l.b16 %v554
        %v619 = vunpack.c.l.b16 %v555
        %v620 = vunpack.c.l.b16 %v556
        %v621 = vunpack.c.l.b16 %v557
        %v622 = vunpack.c.l.b16 %v558
        %v623 = vunpack.c.l.b16 %v559
        %v624 = vunpack.c.l.b16 %v560
        %v625 = vunpack.c.l.b16 %v561
        %v626 = vunpack.c.l.b16 %v562
        %v627 = vunpack.c.l.b16 %v563
        %v628 = vunpack.c.l.b16 %v564
        %v629 = vunpack.c.l.b16 %v565
        %v630 = vunpack.c.l.b16 %v566
        %v631 = vunpack.c.l.b16 %v567
        %v632 = vunpack.c.l.b16 %v568
        %v633 = vunpack.c.l.b16 %v569
        %v634 = vunpack.c.l.b16 %v570
        %v635 = vunpack.c.l.b16 %v571
        %v636 = vunpack.c.l.b16 %v572
        %v637 = vunpack.c.l.b16 %v573
        %v638 = vunpack.c.l.b16 %v574
        %v639 = vunpack.c.l.b16 %v575
        %v640 = vunpack.c.l.b16 %v576
        %v641 = vpack.c.b16 %v610, %v609
        %v642 = vpack.c.b16 %v612, %v611
        %v643 = vpack.c.b16 %v614, %v613
        %v644 = vpack.c.b16 %v616, %v615
        %v645 = vpack.c.b16 %v618, %v617
        %v646 = vpack.c.b16 %v620, %v619
        %v647 = vpack.c.b16 %v622, %v621
        %v648 = vpack.c.b16 %v624, %v623
        %v649 = vpack.c.b16 %v626, %v625
        %v650 = vpack.c.b16 %v628, %v627
        %v651 = vpack.c.b16 %v630, %v629
        %v652 = vpack.c.b16 %v632, %v631
        %v653 = vpack.c.b16 %v634, %v633
        %v654 = vpack.c.b16 %v636, %v635
        %v655 = vpack.c.b16 %v638, %v637
        %v656 = vpack.c.b16 %v640, %v639
        %vm657 = vcmask 130048
        %v659 = vsel %vm657, %v641, 0
        %v662 = vsel %vm657, %v642, 0
        %v665 = vsel %vm657, %v643, 0
        %v668 = vsel %vm657, %v644, 0
        %v671 = vsel %vm657, %v645, 0
        %v674 = vsel %vm657, %v646, 0
        %v677 = vsel %vm657, %v647, 0
        %v680 = vsel %vm657, %v648, 0
        %v683 = vsel %vm657, %v649, 0
        %v686 = vsel %vm657, %v650, 0
        %v689 = vsel %vm657, %v651, 0
        %v692 = vsel %vm657, %v652, 0
        %v695 = vsel %vm657, %v653, 0
        %v698 = vsel %vm657, %v654, 0
        %v701 = vsel %vm657, %v655, 0
        %v704 = vsel %vm657, %v656, 0
        %706 = vmatprep.subr.bf16.mxu0 0
        %707 = vmatpush1.bf16.msra.mxu0 0
        %708 = vmatprep.subr.bf16.mxu0 0
        %709 = vmatpush1.bf16.msra.mxu0 0
        %710 = vmatprep.subr.bf16.mxu0 0
        %711 = vmatpush1.bf16.msra.mxu0 0
        %712 = vmatprep.subr.bf16.mxu0 0
        %713 = vmatpush1.bf16.msra.mxu0 0
        %714 = vmatprep.subr.bf16.mxu0 0
        %715 = vmatpush1.bf16.msra.mxu0 0
        %716 = vmatprep.subr.bf16.mxu0 0
        %717 = vmatpush1.bf16.msra.mxu0 0
        %718 = vmatprep.subr.bf16.mxu0 0
        %719 = vmatpush1.bf16.msra.mxu0 0
        %720 = vmatprep.subr.bf16.mxu0 %v510
        %721 = vmatpush1.bf16.msra.mxu0 %v509
        %722 = vmatprep.subr.bf16.mxu0 0
        %723 = vmatpush2.bf16.msra.mxu0 0
        %724 = vmatprep.subr.bf16.mxu0 0
        %725 = vmatpush2.bf16.msra.mxu0 0
        %726 = vmatprep.subr.bf16.mxu0 0
        %727 = vmatpush2.bf16.msra.mxu0 0
        %728 = vmatprep.subr.bf16.mxu0 0
        %729 = vmatpush2.bf16.msra.mxu0 0
        %730 = vmatprep.subr.bf16.mxu0 0
        %731 = vmatpush2.bf16.msra.mxu0 0
        %732 = vmatprep.subr.bf16.mxu0 0
        %733 = vmatpush2.bf16.msra.mxu0 0
        %734 = vmatprep.subr.bf16.mxu0 0
        %735 = vmatpush2.bf16.msra.mxu0 0
        %736 = vmatprep.subr.bf16.mxu0 0
        %737 = vmatpush2.bf16.msra.mxu0 0
        %738 = vmatprep.mubr.bf16.mxu0 0
        %739 = vmatmul.mubr.bf16.gmra.mxu0 %v659
        %v740 = vpop.f32.mrf.mxu0
        %v741 = vadd.f32 0.0, %v740
        %v742 = vpop.f32.mrf.mxu0
        %v743 = vadd.f32 0.0, %v742
        %v744 = vpop.f32.mrf.mxu0
        %v745 = vadd.f32 0.0, %v744
        %v746 = vpop.f32.mrf.mxu0
        %v747 = vadd.f32 0.0, %v746
        %748 = vmatprep.mubr.bf16.mxu0 0
        %749 = vmatmul.mubr.bf16.gmra.mxu0 %v662
        %v750 = vpop.f32.mrf.mxu0
        %v751 = vadd.f32 0.0, %v750
        %v752 = vpop.f32.mrf.mxu0
        %v753 = vadd.f32 0.0, %v752
        %v754 = vpop.f32.mrf.mxu0
        %v755 = vadd.f32 0.0, %v754
        %v756 = vpop.f32.mrf.mxu0
        %v757 = vadd.f32 0.0, %v756
        %758 = vmatprep.mubr.bf16.mxu0 0
        %759 = vmatmul.mubr.bf16.gmra.mxu0 %v665
        %v760 = vpop.f32.mrf.mxu0
        %v761 = vadd.f32 0.0, %v760
        %v762 = vpop.f32.mrf.mxu0
        %v763 = vadd.f32 0.0, %v762
        %v764 = vpop.f32.mrf.mxu0
        %v765 = vadd.f32 0.0, %v764
        %v766 = vpop.f32.mrf.mxu0
        %v767 = vadd.f32 0.0, %v766
        %768 = vmatprep.mubr.bf16.mxu0 0
        %769 = vmatmul.mubr.bf16.gmra.mxu0 %v668
        %v770 = vpop.f32.mrf.mxu0
        %v771 = vadd.f32 0.0, %v770
        %v772 = vpop.f32.mrf.mxu0
        %v773 = vadd.f32 0.0, %v772
        %v774 = vpop.f32.mrf.mxu0
        %v775 = vadd.f32 0.0, %v774
        %v776 = vpop.f32.mrf.mxu0
        %v777 = vadd.f32 0.0, %v776
        %778 = vmatprep.mubr.bf16.mxu0 0
        %779 = vmatmul.mubr.bf16.gmra.mxu0 %v671
        %v780 = vpop.f32.mrf.mxu0
        %v781 = vadd.f32 0.0, %v780
        %v782 = vpop.f32.mrf.mxu0
        %v783 = vadd.f32 0.0, %v782
        %v784 = vpop.f32.mrf.mxu0
        %v785 = vadd.f32 0.0, %v784
        %v786 = vpop.f32.mrf.mxu0
        %v787 = vadd.f32 0.0, %v786
        %788 = vmatprep.mubr.bf16.mxu0 0
        %789 = vmatmul.mubr.bf16.gmra.mxu0 %v674
        %v790 = vpop.f32.mrf.mxu0
        %v791 = vadd.f32 0.0, %v790
        %v792 = vpop.f32.mrf.mxu0
        %v793 = vadd.f32 0.0, %v792
        %v794 = vpop.f32.mrf.mxu0
        %v795 = vadd.f32 0.0, %v794
        %v796 = vpop.f32.mrf.mxu0
        %v797 = vadd.f32 0.0, %v796
        %798 = vmatprep.mubr.bf16.mxu0 0
        %799 = vmatmul.mubr.bf16.gmra.mxu0 %v677
        %v800 = vpop.f32.mrf.mxu0
        %v801 = vadd.f32 0.0, %v800
        %v802 = vpop.f32.mrf.mxu0
        %v803 = vadd.f32 0.0, %v802
        %v804 = vpop.f32.mrf.mxu0
        %v805 = vadd.f32 0.0, %v804
        %v806 = vpop.f32.mrf.mxu0
        %v807 = vadd.f32 0.0, %v806
        %808 = vmatprep.mubr.bf16.mxu0 0
        %809 = vmatmul.mubr.bf16.gmra.mxu0 %v680
        %v810 = vpop.f32.mrf.mxu0
        %v811 = vadd.f32 0.0, %v810
        %v812 = vpop.f32.mrf.mxu0
        %v813 = vadd.f32 0.0, %v812
        %v814 = vpop.f32.mrf.mxu0
        %v815 = vadd.f32 0.0, %v814
        %v816 = vpop.f32.mrf.mxu0
        %v817 = vadd.f32 0.0, %v816
        %818 = vmatprep.mubr.bf16.mxu0 0
        %819 = vmatmul.mubr.bf16.gmra.mxu0 %v683
        %v820 = vpop.f32.mrf.mxu0
        %v821 = vadd.f32 0.0, %v820
        %v822 = vpop.f32.mrf.mxu0
        %v823 = vadd.f32 0.0, %v822
        %v824 = vpop.f32.mrf.mxu0
        %v825 = vadd.f32 0.0, %v824
        %v826 = vpop.f32.mrf.mxu0
        %v827 = vadd.f32 0.0, %v826
        %828 = vmatprep.mubr.bf16.mxu0 0
        %829 = vmatmul.mubr.bf16.gmra.mxu0 %v686
        %v830 = vpop.f32.mrf.mxu0
        %v831 = vadd.f32 0.0, %v830
        %v832 = vpop.f32.mrf.mxu0
        %v833 = vadd.f32 0.0, %v832
        %v834 = vpop.f32.mrf.mxu0
        %v835 = vadd.f32 0.0, %v834
        %v836 = vpop.f32.mrf.mxu0
        %v837 = vadd.f32 0.0, %v836
        %838 = vmatprep.mubr.bf16.mxu0 0
        %839 = vmatmul.mubr.bf16.gmra.mxu0 %v689
        %v840 = vpop.f32.mrf.mxu0
        %v841 = vadd.f32 0.0, %v840
        %v842 = vpop.f32.mrf.mxu0
        %v843 = vadd.f32 0.0, %v842
        %v844 = vpop.f32.mrf.mxu0
        %v845 = vadd.f32 0.0, %v844
        %v846 = vpop.f32.mrf.mxu0
        %v847 = vadd.f32 0.0, %v846
        %848 = vmatprep.mubr.bf16.mxu0 0
        %849 = vmatmul.mubr.bf16.gmra.mxu0 %v692
        %v850 = vpop.f32.mrf.mxu0
        %v851 = vadd.f32 0.0, %v850
        %v852 = vpop.f32.mrf.mxu0
        %v853 = vadd.f32 0.0, %v852
        %v854 = vpop.f32.mrf.mxu0
        %v855 = vadd.f32 0.0, %v854
        %v856 = vpop.f32.mrf.mxu0
        %v857 = vadd.f32 0.0, %v856
        %858 = vmatprep.mubr.bf16.mxu0 0
        %859 = vmatmul.mubr.bf16.gmra.mxu0 %v695
        %v860 = vpop.f32.mrf.mxu0
        %v861 = vadd.f32 0.0, %v860
        %v862 = vpop.f32.mrf.mxu0
        %v863 = vadd.f32 0.0, %v862
        %v864 = vpop.f32.mrf.mxu0
        %v865 = vadd.f32 0.0, %v864
        %v866 = vpop.f32.mrf.mxu0
        %v867 = vadd.f32 0.0, %v866
        %868 = vmatprep.mubr.bf16.mxu0 0
        %869 = vmatmul.mubr.bf16.gmra.mxu0 %v698
        %v870 = vpop.f32.mrf.mxu0
        %v871 = vadd.f32 0.0, %v870
        %v872 = vpop.f32.mrf.mxu0
        %v873 = vadd.f32 0.0, %v872
        %v874 = vpop.f32.mrf.mxu0
        %v875 = vadd.f32 0.0, %v874
        %v876 = vpop.f32.mrf.mxu0
        %v877 = vadd.f32 0.0, %v876
        %878 = vmatprep.mubr.bf16.mxu0 0
        %879 = vmatmul.mubr.bf16.gmra.mxu0 %v701
        %v880 = vpop.f32.mrf.mxu0
        %v881 = vadd.f32 0.0, %v880
        %v882 = vpop.f32.mrf.mxu0
        %v883 = vadd.f32 0.0, %v882
        %v884 = vpop.f32.mrf.mxu0
        %v885 = vadd.f32 0.0, %v884
        %v886 = vpop.f32.mrf.mxu0
        %v887 = vadd.f32 0.0, %v886
        %888 = vmatprep.mubr.bf16.mxu0 0
        %889 = vmatmul.mubr.bf16.gmra.mxu0 %v704
        %v890 = vpop.f32.mrf.mxu0
        %v891 = vadd.f32 0.0, %v890
        %v892 = vpop.f32.mrf.mxu0
        %v893 = vadd.f32 0.0, %v892
        %v894 = vpop.f32.mrf.mxu0
        %v895 = vadd.f32 0.0, %v894
        %v896 = vpop.f32.mrf.mxu0
        %v897 = vadd.f32 0.0, %v896
        %898 = vdwg.mxu0
        %v931 = vunpack.c.l.b16 %v511
        %v932 = vunpack.c.l.b16 %v512
        %v933 = vunpack.c.l.b16 %v513
        %v934 = vunpack.c.l.b16 %v514
        %v935 = vunpack.c.l.b16 %v515
        %v936 = vunpack.c.l.b16 %v516
        %v937 = vunpack.c.l.b16 %v517
        %v938 = vunpack.c.l.b16 %v518
        %v939 = vunpack.c.l.b16 %v519
        %v940 = vunpack.c.l.b16 %v520
        %v941 = vunpack.c.l.b16 %v521
        %v942 = vunpack.c.l.b16 %v522
        %v943 = vunpack.c.l.b16 %v523
        %v944 = vunpack.c.l.b16 %v524
        %v945 = vunpack.c.l.b16 %v525
        %v946 = vunpack.c.l.b16 %v526
        %v947 = vunpack.c.l.b16 %v527
        %v948 = vunpack.c.l.b16 %v528
        %v949 = vunpack.c.l.b16 %v529
        %v950 = vunpack.c.l.b16 %v530
        %v951 = vunpack.c.l.b16 %v531
        %v952 = vunpack.c.l.b16 %v532
        %v953 = vunpack.c.l.b16 %v533
        %v954 = vunpack.c.l.b16 %v534
        %v955 = vunpack.c.l.b16 %v535
        %v956 = vunpack.c.l.b16 %v536
        %v957 = vunpack.c.l.b16 %v537
        %v958 = vunpack.c.l.b16 %v538
        %v959 = vunpack.c.l.b16 %v539
        %v960 = vunpack.c.l.b16 %v540
        %v961 = vunpack.c.l.b16 %v541
        %v962 = vunpack.c.l.b16 %v542
        %v963 = vpack.c.b16 %v932, %v931
        %v964 = vpack.c.b16 %v934, %v933
        %v965 = vpack.c.b16 %v936, %v935
        %v966 = vpack.c.b16 %v938, %v937
        %v967 = vpack.c.b16 %v940, %v939
        %v968 = vpack.c.b16 %v942, %v941
        %v969 = vpack.c.b16 %v944, %v943
        %v970 = vpack.c.b16 %v946, %v945
        %v971 = vpack.c.b16 %v948, %v947
        %v972 = vpack.c.b16 %v950, %v949
        %v973 = vpack.c.b16 %v952, %v951
        %v974 = vpack.c.b16 %v954, %v953
        %v975 = vpack.c.b16 %v956, %v955
        %v976 = vpack.c.b16 %v958, %v957
        %v977 = vpack.c.b16 %v960, %v959
        %v978 = vpack.c.b16 %v962, %v961
        %v981 = vunpack.c.l.b16 %v543
        %v982 = vunpack.c.h.b16 %v543
        %v983 = vunpack.c.l.b16 %v544
        %v984 = vunpack.c.h.b16 %v544
        %v985 = vpack.c.b16 %v983, %v981
        %v986 = vpack.c.b16 %v984, %v982
        %v990 = vsel %vm657, %v963, 0
        %v993 = vsel %vm657, %v964, 0
        %v996 = vsel %vm657, %v965, 0
        %v999 = vsel %vm657, %v966, 0
        %v1002 = vsel %vm657, %v967, 0
        %v1005 = vsel %vm657, %v968, 0
        %v1008 = vsel %vm657, %v969, 0
        %v1011 = vsel %vm657, %v970, 0
        %v1014 = vsel %vm657, %v971, 0
        %v1017 = vsel %vm657, %v972, 0
        %v1020 = vsel %vm657, %v973, 0
        %v1023 = vsel %vm657, %v974, 0
        %v1026 = vsel %vm657, %v975, 0
        %v1029 = vsel %vm657, %v976, 0
        %v1032 = vsel %vm657, %v977, 0
        %v1035 = vsel %vm657, %v978, 0
        %1037 = vmatprep.subr.bf16.mxu0 0
        %1038 = vmatpush1.bf16.msra.mxu0 0
        %1039 = vmatprep.subr.bf16.mxu0 0
        %1040 = vmatpush1.bf16.msra.mxu0 0
        %1041 = vmatprep.subr.bf16.mxu0 0
        %1042 = vmatpush1.bf16.msra.mxu0 0
        %1043 = vmatprep.subr.bf16.mxu0 0
        %1044 = vmatpush1.bf16.msra.mxu0 0
        %1045 = vmatprep.subr.bf16.mxu0 0
        %1046 = vmatpush1.bf16.msra.mxu0 0
        %1047 = vmatprep.subr.bf16.mxu0 0
        %1048 = vmatpush1.bf16.msra.mxu0 0
        %1049 = vmatprep.subr.bf16.mxu0 0
        %1050 = vmatpush1.bf16.msra.mxu0 0
        %1051 = vmatprep.subr.bf16.mxu0 %v986
        %1052 = vmatpush1.bf16.msra.mxu0 %v985
        %1053 = vmatprep.subr.bf16.mxu0 0
        %1054 = vmatpush2.bf16.msra.mxu0 0
        %1055 = vmatprep.subr.bf16.mxu0 0
        %1056 = vmatpush2.bf16.msra.mxu0 0
        %1057 = vmatprep.subr.bf16.mxu0 0
        %1058 = vmatpush2.bf16.msra.mxu0 0
        %1059 = vmatprep.subr.bf16.mxu0 0
        %1060 = vmatpush2.bf16.msra.mxu0 0
        %1061 = vmatprep.subr.bf16.mxu0 0
        %1062 = vmatpush2.bf16.msra.mxu0 0
        %1063 = vmatprep.subr.bf16.mxu0 0
        %1064 = vmatpush2.bf16.msra.mxu0 0
        %1065 = vmatprep.subr.bf16.mxu0 0
        %1066 = vmatpush2.bf16.msra.mxu0 0
        %1067 = vmatprep.subr.bf16.mxu0 0
        %1068 = vmatpush2.bf16.msra.mxu0 0
        %1069 = vmatprep.mubr.bf16.mxu0 0
        %1070 = vmatmul.mubr.bf16.gmra.mxu0 %v990
        %v1071 = vpop.f32.mrf.mxu0
        %v1072 = vadd.f32 %v741, %v1071
        %v1073 = vpop.f32.mrf.mxu0
        %v1074 = vadd.f32 %v743, %v1073
        %v1075 = vpop.f32.mrf.mxu0
        %v1076 = vadd.f32 %v745, %v1075
        %v1077 = vpop.f32.mrf.mxu0
        %v1078 = vadd.f32 %v747, %v1077
        %1079 = vmatprep.mubr.bf16.mxu0 0
        %1080 = vmatmul.mubr.bf16.gmra.mxu0 %v993
        %v1081 = vpop.f32.mrf.mxu0
        %v1082 = vadd.f32 %v751, %v1081
        %v1083 = vpop.f32.mrf.mxu0
        %v1084 = vadd.f32 %v753, %v1083
        %v1085 = vpop.f32.mrf.mxu0
        %v1086 = vadd.f32 %v755, %v1085
        %v1087 = vpop.f32.mrf.mxu0
        %v1088 = vadd.f32 %v757, %v1087
        %1089 = vmatprep.mubr.bf16.mxu0 0
        %1090 = vmatmul.mubr.bf16.gmra.mxu0 %v996
        %v1091 = vpop.f32.mrf.mxu0
        %v1092 = vadd.f32 %v761, %v1091
        %v1093 = vpop.f32.mrf.mxu0
        %v1094 = vadd.f32 %v763, %v1093
        %v1095 = vpop.f32.mrf.mxu0
        %v1096 = vadd.f32 %v765, %v1095
        %v1097 = vpop.f32.mrf.mxu0
        %v1098 = vadd.f32 %v767, %v1097
        %1099 = vmatprep.mubr.bf16.mxu0 0
        %1100 = vmatmul.mubr.bf16.gmra.mxu0 %v999
        %v1101 = vpop.f32.mrf.mxu0
        %v1102 = vadd.f32 %v771, %v1101
        %v1103 = vpop.f32.mrf.mxu0
        %v1104 = vadd.f32 %v773, %v1103
        %v1105 = vpop.f32.mrf.mxu0
        %v1106 = vadd.f32 %v775, %v1105
        %v1107 = vpop.f32.mrf.mxu0
        %v1108 = vadd.f32 %v777, %v1107
        %1109 = vmatprep.mubr.bf16.mxu0 0
        %1110 = vmatmul.mubr.bf16.gmra.mxu0 %v1002
        %v1111 = vpop.f32.mrf.mxu0
        %v1112 = vadd.f32 %v781, %v1111
        %v1113 = vpop.f32.mrf.mxu0
        %v1114 = vadd.f32 %v783, %v1113
        %v1115 = vpop.f32.mrf.mxu0
        %v1116 = vadd.f32 %v785, %v1115
        %v1117 = vpop.f32.mrf.mxu0
        %v1118 = vadd.f32 %v787, %v1117
        %1119 = vmatprep.mubr.bf16.mxu0 0
        %1120 = vmatmul.mubr.bf16.gmra.mxu0 %v1005
        %v1121 = vpop.f32.mrf.mxu0
        %v1122 = vadd.f32 %v791, %v1121
        %v1123 = vpop.f32.mrf.mxu0
        %v1124 = vadd.f32 %v793, %v1123
        %v1125 = vpop.f32.mrf.mxu0
        %v1126 = vadd.f32 %v795, %v1125
        %v1127 = vpop.f32.mrf.mxu0
        %v1128 = vadd.f32 %v797, %v1127
        %1129 = vmatprep.mubr.bf16.mxu0 0
        %1130 = vmatmul.mubr.bf16.gmra.mxu0 %v1008
        %v1131 = vpop.f32.mrf.mxu0
        %v1132 = vadd.f32 %v801, %v1131
        %v1133 = vpop.f32.mrf.mxu0
        %v1134 = vadd.f32 %v803, %v1133
        %v1135 = vpop.f32.mrf.mxu0
        %v1136 = vadd.f32 %v805, %v1135
        %v1137 = vpop.f32.mrf.mxu0
        %v1138 = vadd.f32 %v807, %v1137
        %1139 = vmatprep.mubr.bf16.mxu0 0
        %1140 = vmatmul.mubr.bf16.gmra.mxu0 %v1011
        %v1141 = vpop.f32.mrf.mxu0
        %v1142 = vadd.f32 %v811, %v1141
        %v1143 = vpop.f32.mrf.mxu0
        %v1144 = vadd.f32 %v813, %v1143
        %v1145 = vpop.f32.mrf.mxu0
        %v1146 = vadd.f32 %v815, %v1145
        %v1147 = vpop.f32.mrf.mxu0
        %v1148 = vadd.f32 %v817, %v1147
        %1149 = vmatprep.mubr.bf16.mxu0 0
        %1150 = vmatmul.mubr.bf16.gmra.mxu0 %v1014
        %v1151 = vpop.f32.mrf.mxu0
        %v1152 = vadd.f32 %v821, %v1151
        %v1153 = vpop.f32.mrf.mxu0
        %v1154 = vadd.f32 %v823, %v1153
        %v1155 = vpop.f32.mrf.mxu0
        %v1156 = vadd.f32 %v825, %v1155
        %v1157 = vpop.f32.mrf.mxu0
        %v1158 = vadd.f32 %v827, %v1157
        %1159 = vmatprep.mubr.bf16.mxu0 0
        %1160 = vmatmul.mubr.bf16.gmra.mxu0 %v1017
        %v1161 = vpop.f32.mrf.mxu0
        %v1162 = vadd.f32 %v831, %v1161
        %v1163 = vpop.f32.mrf.mxu0
        %v1164 = vadd.f32 %v833, %v1163
        %v1165 = vpop.f32.mrf.mxu0
        %v1166 = vadd.f32 %v835, %v1165
        %v1167 = vpop.f32.mrf.mxu0
        %v1168 = vadd.f32 %v837, %v1167
        %1169 = vmatprep.mubr.bf16.mxu0 0
        %1170 = vmatmul.mubr.bf16.gmra.mxu0 %v1020
        %v1171 = vpop.f32.mrf.mxu0
        %v1172 = vadd.f32 %v841, %v1171
        %v1173 = vpop.f32.mrf.mxu0
        %v1174 = vadd.f32 %v843, %v1173
        %v1175 = vpop.f32.mrf.mxu0
        %v1176 = vadd.f32 %v845, %v1175
        %v1177 = vpop.f32.mrf.mxu0
        %v1178 = vadd.f32 %v847, %v1177
        %1179 = vmatprep.mubr.bf16.mxu0 0
        %1180 = vmatmul.mubr.bf16.gmra.mxu0 %v1023
        %v1181 = vpop.f32.mrf.mxu0
        %v1182 = vadd.f32 %v851, %v1181
        %v1183 = vpop.f32.mrf.mxu0
        %v1184 = vadd.f32 %v853, %v1183
        %v1185 = vpop.f32.mrf.mxu0
        %v1186 = vadd.f32 %v855, %v1185
        %v1187 = vpop.f32.mrf.mxu0
        %v1188 = vadd.f32 %v857, %v1187
        %1189 = vmatprep.mubr.bf16.mxu0 0
        %1190 = vmatmul.mubr.bf16.gmra.mxu0 %v1026
        %v1191 = vpop.f32.mrf.mxu0
        %v1192 = vadd.f32 %v861, %v1191
        %v1193 = vpop.f32.mrf.mxu0
        %v1194 = vadd.f32 %v863, %v1193
        %v1195 = vpop.f32.mrf.mxu0
        %v1196 = vadd.f32 %v865, %v1195
        %v1197 = vpop.f32.mrf.mxu0
        %v1198 = vadd.f32 %v867, %v1197
        %1199 = vmatprep.mubr.bf16.mxu0 0
        %1200 = vmatmul.mubr.bf16.gmra.mxu0 %v1029
        %v1201 = vpop.f32.mrf.mxu0
        %v1202 = vadd.f32 %v871, %v1201
        %v1203 = vpop.f32.mrf.mxu0
        %v1204 = vadd.f32 %v873, %v1203
        %v1205 = vpop.f32.mrf.mxu0
        %v1206 = vadd.f32 %v875, %v1205
        %v1207 = vpop.f32.mrf.mxu0
        %v1208 = vadd.f32 %v877, %v1207
        %1209 = vmatprep.mubr.bf16.mxu0 0
        %1210 = vmatmul.mubr.bf16.gmra.mxu0 %v1032
        %v1211 = vpop.f32.mrf.mxu0
        %v1212 = vadd.f32 %v881, %v1211
        %v1213 = vpop.f32.mrf.mxu0
        %v1214 = vadd.f32 %v883, %v1213
        %v1215 = vpop.f32.mrf.mxu0
        %v1216 = vadd.f32 %v885, %v1215
        %v1217 = vpop.f32.mrf.mxu0
        %v1218 = vadd.f32 %v887, %v1217
        %1219 = vmatprep.mubr.bf16.mxu0 0
        %1220 = vmatmul.mubr.bf16.gmra.mxu0 %v1035
        %v1221 = vpop.f32.mrf.mxu0
        %v1222 = vadd.f32 %v891, %v1221
        %v1223 = vpop.f32.mrf.mxu0
        %v1224 = vadd.f32 %v893, %v1223
        %v1225 = vpop.f32.mrf.mxu0
        %v1226 = vadd.f32 %v895, %v1225
        %v1227 = vpop.f32.mrf.mxu0
        %v1228 = vadd.f32 %v897, %v1227
        %1229 = vdwg.mxu0
        %v1230 = vpack.c.bf16 %v1076, %v1072
        %v1231 = vpack.c.bf16 %v1078, %v1074
        %v1232 = vpack.c.bf16 %v1086, %v1082
        %v1233 = vpack.c.bf16 %v1088, %v1084
        %v1234 = vpack.c.bf16 %v1096, %v1092
        %v1235 = vpack.c.bf16 %v1098, %v1094
        %v1236 = vpack.c.bf16 %v1106, %v1102
        %v1237 = vpack.c.bf16 %v1108, %v1104
        %v1238 = vpack.c.bf16 %v1116, %v1112
        %v1239 = vpack.c.bf16 %v1118, %v1114
        %v1240 = vpack.c.bf16 %v1126, %v1122
        %v1241 = vpack.c.bf16 %v1128, %v1124
        %v1242 = vpack.c.bf16 %v1136, %v1132
        %v1243 = vpack.c.bf16 %v1138, %v1134
        %v1244 = vpack.c.bf16 %v1146, %v1142
        %v1245 = vpack.c.bf16 %v1148, %v1144
        %v1246 = vpack.c.bf16 %v1156, %v1152
        %v1247 = vpack.c.bf16 %v1158, %v1154
        %v1248 = vpack.c.bf16 %v1166, %v1162
        %v1249 = vpack.c.bf16 %v1168, %v1164
        %v1250 = vpack.c.bf16 %v1176, %v1172
        %v1251 = vpack.c.bf16 %v1178, %v1174
        %v1252 = vpack.c.bf16 %v1186, %v1182
        %v1253 = vpack.c.bf16 %v1188, %v1184
        %v1254 = vpack.c.bf16 %v1196, %v1192
        %v1255 = vpack.c.bf16 %v1198, %v1194
        %v1256 = vpack.c.bf16 %v1206, %v1202
        %v1257 = vpack.c.bf16 %v1208, %v1204
        %v1258 = vpack.c.bf16 %v1216, %v1212
        %v1259 = vpack.c.bf16 %v1218, %v1214
        %v1260 = vpack.c.bf16 %v1226, %v1222
        %v1261 = vpack.c.bf16 %v1228, %v1224
        %v1262 = vmax.bf16 %v1230, 0
        %v1263 = vmax.bf16 %v1231, 0
        %v1264 = vmax.bf16 %v1232, 0
        %v1265 = vmax.bf16 %v1233, 0
        %v1266 = vmax.bf16 %v1234, 0
        %v1267 = vmax.bf16 %v1235, 0
        %v1268 = vmax.bf16 %v1236, 0
        %v1269 = vmax.bf16 %v1237, 0
        %v1270 = vmax.bf16 %v1238, 0
        %v1271 = vmax.bf16 %v1239, 0
        %v1272 = vmax.bf16 %v1240, 0
        %v1273 = vmax.bf16 %v1241, 0
        %v1274 = vmax.bf16 %v1242, 0
        %v1275 = vmax.bf16 %v1243, 0
        %v1276 = vmax.bf16 %v1244, 0
        %v1277 = vmax.bf16 %v1245, 0
        %v1278 = vmax.bf16 %v1246, 0
        %v1279 = vmax.bf16 %v1247, 0
        %v1280 = vmax.bf16 %v1248, 0
        %v1281 = vmax.bf16 %v1249, 0
        %v1282 = vmax.bf16 %v1250, 0
        %v1283 = vmax.bf16 %v1251, 0
        %v1284 = vmax.bf16 %v1252, 0
        %v1285 = vmax.bf16 %v1253, 0
        %v1286 = vmax.bf16 %v1254, 0
        %v1287 = vmax.bf16 %v1255, 0
        %v1288 = vmax.bf16 %v1256, 0
        %v1289 = vmax.bf16 %v1257, 0
        %v1290 = vmax.bf16 %v1258, 0
        %v1291 = vmax.bf16 %v1259, 0
        %v1292 = vmax.bf16 %v1260, 0
        %v1293 = vmax.bf16 %v1261, 0
        %v1294 = vld [vmem:[%s4] sm:$0xff]
        %v1295 = vld [vmem:[%s4 + $0x8] sm:$0xff]
        %v1296 = vld [vmem:[%s4 + $0x10] sm:$0xff]
        %v1297 = vld [vmem:[%s4 + $0x18] sm:$0xff]
        %v1298 = vld [vmem:[%s4 + $0x20] sm:$0xff]
        %v1299 = vld [vmem:[%s4 + $0x28] sm:$0xff]
        %v1300 = vld [vmem:[%s4 + $0x30] sm:$0xff]
        %v1301 = vld [vmem:[%s4 + $0x38] sm:$0xff]
        %v1302 = vld [vmem:[%s4 + $0x40] sm:$0xff]
        %v1303 = vld [vmem:[%s4 + $0x48] sm:$0xff]
        %v1304 = vld [vmem:[%s4 + $0x50] sm:$0xff]
        %v1305 = vld [vmem:[%s4 + $0x58] sm:$0xff]
        %v1306 = vld [vmem:[%s4 + $0x60] sm:$0xff]
        %v1307 = vld [vmem:[%s4 + $0x68] sm:$0xff]
        %v1308 = vld [vmem:[%s4 + $0x70] sm:$0xff]
        %v1309 = vld [vmem:[%s4 + $0x78] sm:$0xff]
        %v1310 = vld [vmem:[%s4 + $0x80] sm:$0xff]
        %v1311 = vld [vmem:[%s4 + $0x88] sm:$0xff]
        %v1312 = vld [vmem:[%s4 + $0x90] sm:$0xff]
        %v1313 = vld [vmem:[%s4 + $0x98] sm:$0xff]
        %v1314 = vld [vmem:[%s4 + $0xa0] sm:$0xff]
        %v1315 = vld [vmem:[%s4 + $0xa8] sm:$0xff]
        %v1316 = vld [vmem:[%s4 + $0xb0] sm:$0xff]
        %v1317 = vld [vmem:[%s4 + $0xb8] sm:$0xff]
        %v1318 = vld [vmem:[%s4 + $0xc0] sm:$0xff]
        %v1319 = vld [vmem:[%s4 + $0xc8] sm:$0xff]
        %v1320 = vld [vmem:[%s4 + $0xd0] sm:$0xff]
        %v1321 = vld [vmem:[%s4 + $0xd8] sm:$0xff]
        %v1322 = vld [vmem:[%s4 + $0xe0] sm:$0xff]
        %v1323 = vld [vmem:[%s4 + $0xe8] sm:$0xff]
        %v1324 = vld [vmem:[%s4 + $0xf0] sm:$0xff]
        %v1325 = vld [vmem:[%s4 + $0xf8] sm:$0xff]
        %v1326 = vld [vmem:[%s4 + $0x100] sm:$0xff]
        %v1327 = vld [vmem:[%s4 + $0x108] sm:$0xff]
        %v1328 = vld [vmem:[%s4 + $0x110] sm:$0xff]
        %v1329 = vld [vmem:[%s4 + $0x118] sm:$0xff]
        %v1330 = vld [vmem:[%s4 + $0x120] sm:$0xff]
        %v1331 = vld [vmem:[%s4 + $0x128] sm:$0xff]
        %v1332 = vld [vmem:[%s4 + $0x130] sm:$0xff]
        %v1333 = vld [vmem:[%s4 + $0x138] sm:$0xff]
        %v1334 = vld [vmem:[%s4 + $0x140] sm:$0xff]
        %v1335 = vld [vmem:[%s4 + $0x148] sm:$0xff]
        %v1336 = vld [vmem:[%s4 + $0x150] sm:$0xff]
        %v1337 = vld [vmem:[%s4 + $0x158] sm:$0xff]
        %v1338 = vld [vmem:[%s4 + $0x160] sm:$0xff]
        %v1339 = vld [vmem:[%s4 + $0x168] sm:$0xff]
        %v1340 = vld [vmem:[%s4 + $0x170] sm:$0xff]
        %v1341 = vld [vmem:[%s4 + $0x178] sm:$0xff]
        %v1342 = vld [vmem:[%s4 + $0x180] sm:$0xff]
        %v1343 = vld [vmem:[%s4 + $0x188] sm:$0xff]
        %v1344 = vld [vmem:[%s4 + $0x190] sm:$0xff]
        %v1345 = vld [vmem:[%s4 + $0x198] sm:$0xff]
        %v1346 = vld [vmem:[%s4 + $0x1a0] sm:$0xff]
        %v1347 = vld [vmem:[%s4 + $0x1a8] sm:$0xff]
        %v1348 = vld [vmem:[%s4 + $0x1b0] sm:$0xff]
        %v1349 = vld [vmem:[%s4 + $0x1b8] sm:$0xff]
        %v1350 = vld [vmem:[%s4 + $0x1c0] sm:$0xff]
        %v1351 = vld [vmem:[%s4 + $0x1c8] sm:$0xff]
        %v1352 = vld [vmem:[%s4 + $0x1d0] sm:$0xff]
        %v1353 = vld [vmem:[%s4 + $0x1d8] sm:$0xff]
        %v1354 = vld [vmem:[%s4 + $0x1e0] sm:$0xff]
        %v1355 = vld [vmem:[%s4 + $0x1e8] sm:$0xff]
        %v1356 = vld [vmem:[%s4 + $0x1f0] sm:$0xff]
        %v1357 = vld [vmem:[%s4 + $0x1f8] sm:$0xff]
        %v1422 = vunpack.c.l.b16 %v1294
        %v1423 = vunpack.c.h.b16 %v1294
        %v1424 = vunpack.c.l.b16 %v1295
        %v1425 = vunpack.c.h.b16 %v1295
        %v1426 = vunpack.c.l.b16 %v1296
        %v1427 = vunpack.c.h.b16 %v1296
        %v1428 = vunpack.c.l.b16 %v1297
        %v1429 = vunpack.c.h.b16 %v1297
        %v1430 = vunpack.c.l.b16 %v1298
        %v1431 = vunpack.c.h.b16 %v1298
        %v1432 = vunpack.c.l.b16 %v1299
        %v1433 = vunpack.c.h.b16 %v1299
        %v1434 = vunpack.c.l.b16 %v1300
        %v1435 = vunpack.c.h.b16 %v1300
        %v1436 = vunpack.c.l.b16 %v1301
        %v1437 = vunpack.c.h.b16 %v1301
        %v1438 = vunpack.c.l.b16 %v1302
        %v1439 = vunpack.c.h.b16 %v1302
        %v1440 = vunpack.c.l.b16 %v1303
        %v1441 = vunpack.c.h.b16 %v1303
        %v1442 = vunpack.c.l.b16 %v1304
        %v1443 = vunpack.c.h.b16 %v1304
        %v1444 = vunpack.c.l.b16 %v1305
        %v1445 = vunpack.c.h.b16 %v1305
        %v1446 = vunpack.c.l.b16 %v1306
        %v1447 = vunpack.c.h.b16 %v1306
        %v1448 = vunpack.c.l.b16 %v1307
        %v1449 = vunpack.c.h.b16 %v1307
        %v1450 = vunpack.c.l.b16 %v1308
        %v1451 = vunpack.c.h.b16 %v1308
        %v1452 = vunpack.c.l.b16 %v1309
        %v1453 = vunpack.c.h.b16 %v1309
        %v1454 = vunpack.c.l.b16 %v1310
        %v1455 = vunpack.c.h.b16 %v1310
        %v1456 = vunpack.c.l.b16 %v1311
        %v1457 = vunpack.c.h.b16 %v1311
        %v1458 = vunpack.c.l.b16 %v1312
        %v1459 = vunpack.c.h.b16 %v1312
        %v1460 = vunpack.c.l.b16 %v1313
        %v1461 = vunpack.c.h.b16 %v1313
        %v1462 = vunpack.c.l.b16 %v1314
        %v1463 = vunpack.c.h.b16 %v1314
        %v1464 = vunpack.c.l.b16 %v1315
        %v1465 = vunpack.c.h.b16 %v1315
        %v1466 = vunpack.c.l.b16 %v1316
        %v1467 = vunpack.c.h.b16 %v1316
        %v1468 = vunpack.c.l.b16 %v1317
        %v1469 = vunpack.c.h.b16 %v1317
        %v1470 = vunpack.c.l.b16 %v1318
        %v1471 = vunpack.c.h.b16 %v1318
        %v1472 = vunpack.c.l.b16 %v1319
        %v1473 = vunpack.c.h.b16 %v1319
        %v1474 = vunpack.c.l.b16 %v1320
        %v1475 = vunpack.c.h.b16 %v1320
        %v1476 = vunpack.c.l.b16 %v1321
        %v1477 = vunpack.c.h.b16 %v1321
        %v1478 = vunpack.c.l.b16 %v1322
        %v1479 = vunpack.c.h.b16 %v1322
        %v1480 = vunpack.c.l.b16 %v1323
        %v1481 = vunpack.c.h.b16 %v1323
        %v1482 = vunpack.c.l.b16 %v1324
        %v1483 = vunpack.c.h.b16 %v1324
        %v1484 = vunpack.c.l.b16 %v1325
        %v1485 = vunpack.c.h.b16 %v1325
        %v1486 = vunpack.c.l.b16 %v1326
        %v1487 = vunpack.c.h.b16 %v1326
        %v1488 = vunpack.c.l.b16 %v1327
        %v1489 = vunpack.c.h.b16 %v1327
        %v1490 = vunpack.c.l.b16 %v1328
        %v1491 = vunpack.c.h.b16 %v1328
        %v1492 = vunpack.c.l.b16 %v1329
        %v1493 = vunpack.c.h.b16 %v1329
        %v1494 = vunpack.c.l.b16 %v1330
        %v1495 = vunpack.c.h.b16 %v1330
        %v1496 = vunpack.c.l.b16 %v1331
        %v1497 = vunpack.c.h.b16 %v1331
        %v1498 = vunpack.c.l.b16 %v1332
        %v1499 = vunpack.c.h.b16 %v1332
        %v1500 = vunpack.c.l.b16 %v1333
        %v1501 = vunpack.c.h.b16 %v1333
        %v1502 = vunpack.c.l.b16 %v1334
        %v1503 = vunpack.c.h.b16 %v1334
        %v1504 = vunpack.c.l.b16 %v1335
        %v1505 = vunpack.c.h.b16 %v1335
        %v1506 = vunpack.c.l.b16 %v1336
        %v1507 = vunpack.c.h.b16 %v1336
        %v1508 = vunpack.c.l.b16 %v1337
        %v1509 = vunpack.c.h.b16 %v1337
        %v1510 = vunpack.c.l.b16 %v1338
        %v1511 = vunpack.c.h.b16 %v1338
        %v1512 = vunpack.c.l.b16 %v1339
        %v1513 = vunpack.c.h.b16 %v1339
        %v1514 = vunpack.c.l.b16 %v1340
        %v1515 = vunpack.c.h.b16 %v1340
        %v1516 = vunpack.c.l.b16 %v1341
        %v1517 = vunpack.c.h.b16 %v1341
        %v1518 = vunpack.c.l.b16 %v1342
        %v1519 = vunpack.c.h.b16 %v1342
        %v1520 = vunpack.c.l.b16 %v1343
        %v1521 = vunpack.c.h.b16 %v1343
        %v1522 = vunpack.c.l.b16 %v1344
        %v1523 = vunpack.c.h.b16 %v1344
        %v1524 = vunpack.c.l.b16 %v1345
        %v1525 = vunpack.c.h.b16 %v1345
        %v1526 = vunpack.c.l.b16 %v1346
        %v1527 = vunpack.c.h.b16 %v1346
        %v1528 = vunpack.c.l.b16 %v1347
        %v1529 = vunpack.c.h.b16 %v1347
        %v1530 = vunpack.c.l.b16 %v1348
        %v1531 = vunpack.c.h.b16 %v1348
        %v1532 = vunpack.c.l.b16 %v1349
        %v1533 = vunpack.c.h.b16 %v1349
        %v1534 = vunpack.c.l.b16 %v1350
        %v1535 = vunpack.c.h.b16 %v1350
        %v1536 = vunpack.c.l.b16 %v1351
        %v1537 = vunpack.c.h.b16 %v1351
        %v1538 = vunpack.c.l.b16 %v1352
        %v1539 = vunpack.c.h.b16 %v1352
        %v1540 = vunpack.c.l.b16 %v1353
        %v1541 = vunpack.c.h.b16 %v1353
        %v1542 = vunpack.c.l.b16 %v1354
        %v1543 = vunpack.c.h.b16 %v1354
        %v1544 = vunpack.c.l.b16 %v1355
        %v1545 = vunpack.c.h.b16 %v1355
        %v1546 = vunpack.c.l.b16 %v1356
        %v1547 = vunpack.c.h.b16 %v1356
        %v1548 = vunpack.c.l.b16 %v1357
        %v1549 = vunpack.c.h.b16 %v1357
        %v1550 = vpack.c.b16 %v1424, %v1422
        %v1551 = vpack.c.b16 %v1425, %v1423
        %v1552 = vpack.c.b16 %v1428, %v1426
        %v1553 = vpack.c.b16 %v1429, %v1427
        %v1554 = vpack.c.b16 %v1432, %v1430
        %v1555 = vpack.c.b16 %v1433, %v1431
        %v1556 = vpack.c.b16 %v1436, %v1434
        %v1557 = vpack.c.b16 %v1437, %v1435
        %v1558 = vpack.c.b16 %v1440, %v1438
        %v1559 = vpack.c.b16 %v1441, %v1439
        %v1560 = vpack.c.b16 %v1444, %v1442
        %v1561 = vpack.c.b16 %v1445, %v1443
        %v1562 = vpack.c.b16 %v1448, %v1446
        %v1563 = vpack.c.b16 %v1449, %v1447
        %v1564 = vpack.c.b16 %v1452, %v1450
        %v1565 = vpack.c.b16 %v1453, %v1451
        %v1566 = vpack.c.b16 %v1456, %v1454
        %v1567 = vpack.c.b16 %v1457, %v1455
        %v1568 = vpack.c.b16 %v1460, %v1458
        %v1569 = vpack.c.b16 %v1461, %v1459
        %v1570 = vpack.c.b16 %v1464, %v1462
        %v1571 = vpack.c.b16 %v1465, %v1463
        %v1572 = vpack.c.b16 %v1468, %v1466
        %v1573 = vpack.c.b16 %v1469, %v1467
        %v1574 = vpack.c.b16 %v1472, %v1470
        %v1575 = vpack.c.b16 %v1473, %v1471
        %v1576 = vpack.c.b16 %v1476, %v1474
        %v1577 = vpack.c.b16 %v1477, %v1475
        %v1578 = vpack.c.b16 %v1480, %v1478
        %v1579 = vpack.c.b16 %v1481, %v1479
        %v1580 = vpack.c.b16 %v1484, %v1482
        %v1581 = vpack.c.b16 %v1485, %v1483
        %v1582 = vpack.c.b16 %v1488, %v1486
        %v1583 = vpack.c.b16 %v1489, %v1487
        %v1584 = vpack.c.b16 %v1492, %v1490
        %v1585 = vpack.c.b16 %v1493, %v1491
        %v1586 = vpack.c.b16 %v1496, %v1494
        %v1587 = vpack.c.b16 %v1497, %v1495
        %v1588 = vpack.c.b16 %v1500, %v1498
        %v1589 = vpack.c.b16 %v1501, %v1499
        %v1590 = vpack.c.b16 %v1504, %v1502
        %v1591 = vpack.c.b16 %v1505, %v1503
        %v1592 = vpack.c.b16 %v1508, %v1506
        %v1593 = vpack.c.b16 %v1509, %v1507
        %v1594 = vpack.c.b16 %v1512, %v1510
        %v1595 = vpack.c.b16 %v1513, %v1511
        %v1596 = vpack.c.b16 %v1516, %v1514
        %v1597 = vpack.c.b16 %v1517, %v1515
        %v1598 = vpack.c.b16 %v1520, %v1518
        %v1599 = vpack.c.b16 %v1521, %v1519
        %v1600 = vpack.c.b16 %v1524, %v1522
        %v1601 = vpack.c.b16 %v1525, %v1523
        %v1602 = vpack.c.b16 %v1528, %v1526
        %v1603 = vpack.c.b16 %v1529, %v1527
        %v1604 = vpack.c.b16 %v1532, %v1530
        %v1605 = vpack.c.b16 %v1533, %v1531
        %v1606 = vpack.c.b16 %v1536, %v1534
        %v1607 = vpack.c.b16 %v1537, %v1535
        %v1608 = vpack.c.b16 %v1540, %v1538
        %v1609 = vpack.c.b16 %v1541, %v1539
        %v1610 = vpack.c.b16 %v1544, %v1542
        %v1611 = vpack.c.b16 %v1545, %v1543
        %v1612 = vpack.c.b16 %v1548, %v1546
        %v1613 = vpack.c.b16 %v1549, %v1547
        %1678 = vmatprep.subr.bf16.mxu0 %v1277
        %1679 = vmatpush1.bf16.msra.mxu0 %v1276
        %1680 = vmatprep.subr.bf16.mxu0 %v1275
        %1681 = vmatpush1.bf16.msra.mxu0 %v1274
        %1682 = vmatprep.subr.bf16.mxu0 %v1273
        %1683 = vmatpush1.bf16.msra.mxu0 %v1272
        %1684 = vmatprep.subr.bf16.mxu0 %v1271
        %1685 = vmatpush1.bf16.msra.mxu0 %v1270
        %1686 = vmatprep.subr.bf16.mxu0 %v1269
        %1687 = vmatpush1.bf16.msra.mxu0 %v1268
        %1688 = vmatprep.subr.bf16.mxu0 %v1267
        %1689 = vmatpush1.bf16.msra.mxu0 %v1266
        %1690 = vmatprep.subr.bf16.mxu0 %v1265
        %1691 = vmatpush1.bf16.msra.mxu0 %v1264
        %1692 = vmatprep.subr.bf16.mxu0 %v1263
        %1693 = vmatpush1.bf16.msra.mxu0 %v1262
        %1694 = vmatprep.subr.bf16.mxu0 %v1293
        %1695 = vmatpush2.bf16.msra.mxu0 %v1292
        %1696 = vmatprep.subr.bf16.mxu0 %v1291
        %1697 = vmatpush2.bf16.msra.mxu0 %v1290
        %1698 = vmatprep.subr.bf16.mxu0 %v1289
        %1699 = vmatpush2.bf16.msra.mxu0 %v1288
        %1700 = vmatprep.subr.bf16.mxu0 %v1287
        %1701 = vmatpush2.bf16.msra.mxu0 %v1286
        %1702 = vmatprep.subr.bf16.mxu0 %v1285
        %1703 = vmatpush2.bf16.msra.mxu0 %v1284
        %1704 = vmatprep.subr.bf16.mxu0 %v1283
        %1705 = vmatpush2.bf16.msra.mxu0 %v1282
        %1706 = vmatprep.subr.bf16.mxu0 %v1281
        %1707 = vmatpush2.bf16.msra.mxu0 %v1280
        %1708 = vmatprep.subr.bf16.mxu0 %v1279
        %1709 = vmatpush2.bf16.msra.mxu0 %v1278
        %1710 = vmatprep.mubr.bf16.mxu0 %v1551
        %1711 = vmatmul.mubr.bf16.gmra.mxu0 %v1550
        %v1712 = vpop.f32.mrf.mxu0
        %v1713 = vadd.f32 0.0, %v1712
        %v1714 = vpop.f32.mrf.mxu0
        %v1715 = vadd.f32 0.0, %v1714
        %v1716 = vpop.f32.mrf.mxu0
        %v1717 = vadd.f32 0.0, %v1716
        %v1718 = vpop.f32.mrf.mxu0
        %v1719 = vadd.f32 0.0, %v1718
        %1720 = vmatprep.mubr.bf16.mxu0 %v1553
        %1721 = vmatmul.mubr.bf16.gmra.mxu0 %v1552
        %v1722 = vpop.f32.mrf.mxu0
        %v1723 = vadd.f32 0.0, %v1722
        %v1724 = vpop.f32.mrf.mxu0
        %v1725 = vadd.f32 0.0, %v1724
        %v1726 = vpop.f32.mrf.mxu0
        %v1727 = vadd.f32 0.0, %v1726
        %v1728 = vpop.f32.mrf.mxu0
        %v1729 = vadd.f32 0.0, %v1728
        %1730 = vmatprep.mubr.bf16.mxu0 %v1555
        %1731 = vmatmul.mubr.bf16.gmra.mxu0 %v1554
        %v1732 = vpop.f32.mrf.mxu0
        %v1733 = vadd.f32 0.0, %v1732
        %v1734 = vpop.f32.mrf.mxu0
        %v1735 = vadd.f32 0.0, %v1734
        %v1736 = vpop.f32.mrf.mxu0
        %v1737 = vadd.f32 0.0, %v1736
        %v1738 = vpop.f32.mrf.mxu0
        %v1739 = vadd.f32 0.0, %v1738
        %1740 = vmatprep.mubr.bf16.mxu0 %v1557
        %1741 = vmatmul.mubr.bf16.gmra.mxu0 %v1556
        %v1742 = vpop.f32.mrf.mxu0
        %v1743 = vadd.f32 0.0, %v1742
        %v1744 = vpop.f32.mrf.mxu0
        %v1745 = vadd.f32 0.0, %v1744
        %v1746 = vpop.f32.mrf.mxu0
        %v1747 = vadd.f32 0.0, %v1746
        %v1748 = vpop.f32.mrf.mxu0
        %v1749 = vadd.f32 0.0, %v1748
        %1750 = vmatprep.mubr.bf16.mxu0 %v1559
        %1751 = vmatmul.mubr.bf16.gmra.mxu0 %v1558
        %v1752 = vpop.f32.mrf.mxu0
        %v1753 = vadd.f32 0.0, %v1752
        %v1754 = vpop.f32.mrf.mxu0
        %v1755 = vadd.f32 0.0, %v1754
        %v1756 = vpop.f32.mrf.mxu0
        %v1757 = vadd.f32 0.0, %v1756
        %v1758 = vpop.f32.mrf.mxu0
        %v1759 = vadd.f32 0.0, %v1758
        %1760 = vmatprep.mubr.bf16.mxu0 %v1561
        %1761 = vmatmul.mubr.bf16.gmra.mxu0 %v1560
        %v1762 = vpop.f32.mrf.mxu0
        %v1763 = vadd.f32 0.0, %v1762
        %v1764 = vpop.f32.mrf.mxu0
        %v1765 = vadd.f32 0.0, %v1764
        %v1766 = vpop.f32.mrf.mxu0
        %v1767 = vadd.f32 0.0, %v1766
        %v1768 = vpop.f32.mrf.mxu0
        %v1769 = vadd.f32 0.0, %v1768
        %1770 = vmatprep.mubr.bf16.mxu0 %v1563
        %1771 = vmatmul.mubr.bf16.gmra.mxu0 %v1562
        %v1772 = vpop.f32.mrf.mxu0
        %v1773 = vadd.f32 0.0, %v1772
        %v1774 = vpop.f32.mrf.mxu0
        %v1775 = vadd.f32 0.0, %v1774
        %v1776 = vpop.f32.mrf.mxu0
        %v1777 = vadd.f32 0.0, %v1776
        %v1778 = vpop.f32.mrf.mxu0
        %v1779 = vadd.f32 0.0, %v1778
        %1780 = vmatprep.mubr.bf16.mxu0 %v1565
        %1781 = vmatmul.mubr.bf16.gmra.mxu0 %v1564
        %v1782 = vpop.f32.mrf.mxu0
        %v1783 = vadd.f32 0.0, %v1782
        %v1784 = vpop.f32.mrf.mxu0
        %v1785 = vadd.f32 0.0, %v1784
        %v1786 = vpop.f32.mrf.mxu0
        %v1787 = vadd.f32 0.0, %v1786
        %v1788 = vpop.f32.mrf.mxu0
        %v1789 = vadd.f32 0.0, %v1788
        %1790 = vmatprep.mubr.bf16.mxu0 %v1567
        %1791 = vmatmul.mubr.bf16.gmra.mxu0 %v1566
        %v1792 = vpop.f32.mrf.mxu0
        %v1793 = vadd.f32 0.0, %v1792
        %v1794 = vpop.f32.mrf.mxu0
        %v1795 = vadd.f32 0.0, %v1794
        %v1796 = vpop.f32.mrf.mxu0
        %v1797 = vadd.f32 0.0, %v1796
        %v1798 = vpop.f32.mrf.mxu0
        %v1799 = vadd.f32 0.0, %v1798
        %1800 = vmatprep.mubr.bf16.mxu0 %v1569
        %1801 = vmatmul.mubr.bf16.gmra.mxu0 %v1568
        %v1802 = vpop.f32.mrf.mxu0
        %v1803 = vadd.f32 0.0, %v1802
        %v1804 = vpop.f32.mrf.mxu0
        %v1805 = vadd.f32 0.0, %v1804
        %v1806 = vpop.f32.mrf.mxu0
        %v1807 = vadd.f32 0.0, %v1806
        %v1808 = vpop.f32.mrf.mxu0
        %v1809 = vadd.f32 0.0, %v1808
        %1810 = vmatprep.mubr.bf16.mxu0 %v1571
        %1811 = vmatmul.mubr.bf16.gmra.mxu0 %v1570
        %v1812 = vpop.f32.mrf.mxu0
        %v1813 = vadd.f32 0.0, %v1812
        %v1814 = vpop.f32.mrf.mxu0
        %v1815 = vadd.f32 0.0, %v1814
        %v1816 = vpop.f32.mrf.mxu0
        %v1817 = vadd.f32 0.0, %v1816
        %v1818 = vpop.f32.mrf.mxu0
        %v1819 = vadd.f32 0.0, %v1818
        %1820 = vmatprep.mubr.bf16.mxu0 %v1573
        %1821 = vmatmul.mubr.bf16.gmra.mxu0 %v1572
        %v1822 = vpop.f32.mrf.mxu0
        %v1823 = vadd.f32 0.0, %v1822
        %v1824 = vpop.f32.mrf.mxu0
        %v1825 = vadd.f32 0.0, %v1824
        %v1826 = vpop.f32.mrf.mxu0
        %v1827 = vadd.f32 0.0, %v1826
        %v1828 = vpop.f32.mrf.mxu0
        %v1829 = vadd.f32 0.0, %v1828
        %1830 = vmatprep.mubr.bf16.mxu0 %v1575
        %1831 = vmatmul.mubr.bf16.gmra.mxu0 %v1574
        %v1832 = vpop.f32.mrf.mxu0
        %v1833 = vadd.f32 0.0, %v1832
        %v1834 = vpop.f32.mrf.mxu0
        %v1835 = vadd.f32 0.0, %v1834
        %v1836 = vpop.f32.mrf.mxu0
        %v1837 = vadd.f32 0.0, %v1836
        %v1838 = vpop.f32.mrf.mxu0
        %v1839 = vadd.f32 0.0, %v1838
        %1840 = vmatprep.mubr.bf16.mxu0 %v1577
        %1841 = vmatmul.mubr.bf16.gmra.mxu0 %v1576
        %v1842 = vpop.f32.mrf.mxu0
        %v1843 = vadd.f32 0.0, %v1842
        %v1844 = vpop.f32.mrf.mxu0
        %v1845 = vadd.f32 0.0, %v1844
        %v1846 = vpop.f32.mrf.mxu0
        %v1847 = vadd.f32 0.0, %v1846
        %v1848 = vpop.f32.mrf.mxu0
        %v1849 = vadd.f32 0.0, %v1848
        %1850 = vmatprep.mubr.bf16.mxu0 %v1579
        %1851 = vmatmul.mubr.bf16.gmra.mxu0 %v1578
        %v1852 = vpop.f32.mrf.mxu0
        %v1853 = vadd.f32 0.0, %v1852
        %v1854 = vpop.f32.mrf.mxu0
        %v1855 = vadd.f32 0.0, %v1854
        %v1856 = vpop.f32.mrf.mxu0
        %v1857 = vadd.f32 0.0, %v1856
        %v1858 = vpop.f32.mrf.mxu0
        %v1859 = vadd.f32 0.0, %v1858
        %1860 = vmatprep.mubr.bf16.mxu0 %v1581
        %1861 = vmatmul.mubr.bf16.gmra.mxu0 %v1580
        %v1862 = vpop.f32.mrf.mxu0
        %v1863 = vadd.f32 0.0, %v1862
        %v1864 = vpop.f32.mrf.mxu0
        %v1865 = vadd.f32 0.0, %v1864
        %v1866 = vpop.f32.mrf.mxu0
        %v1867 = vadd.f32 0.0, %v1866
        %v1868 = vpop.f32.mrf.mxu0
        %v1869 = vadd.f32 0.0, %v1868
        %1870 = vmatprep.mubr.bf16.mxu0 %v1583
        %1871 = vmatmul.mubr.bf16.gmra.mxu0 %v1582
        %v1872 = vpop.f32.mrf.mxu0
        %v1873 = vadd.f32 0.0, %v1872
        %v1874 = vpop.f32.mrf.mxu0
        %v1875 = vadd.f32 0.0, %v1874
        %v1876 = vpop.f32.mrf.mxu0
        %v1877 = vadd.f32 0.0, %v1876
        %v1878 = vpop.f32.mrf.mxu0
        %v1879 = vadd.f32 0.0, %v1878
        %1880 = vmatprep.mubr.bf16.mxu0 %v1585
        %1881 = vmatmul.mubr.bf16.gmra.mxu0 %v1584
        %v1882 = vpop.f32.mrf.mxu0
        %v1883 = vadd.f32 0.0, %v1882
        %v1884 = vpop.f32.mrf.mxu0
        %v1885 = vadd.f32 0.0, %v1884
        %v1886 = vpop.f32.mrf.mxu0
        %v1887 = vadd.f32 0.0, %v1886
        %v1888 = vpop.f32.mrf.mxu0
        %v1889 = vadd.f32 0.0, %v1888
        %1890 = vmatprep.mubr.bf16.mxu0 %v1587
        %1891 = vmatmul.mubr.bf16.gmra.mxu0 %v1586
        %v1892 = vpop.f32.mrf.mxu0
        %v1893 = vadd.f32 0.0, %v1892
        %v1894 = vpop.f32.mrf.mxu0
        %v1895 = vadd.f32 0.0, %v1894
        %v1896 = vpop.f32.mrf.mxu0
        %v1897 = vadd.f32 0.0, %v1896
        %v1898 = vpop.f32.mrf.mxu0
        %v1899 = vadd.f32 0.0, %v1898
        %1900 = vmatprep.mubr.bf16.mxu0 %v1589
        %1901 = vmatmul.mubr.bf16.gmra.mxu0 %v1588
        %v1902 = vpop.f32.mrf.mxu0
        %v1903 = vadd.f32 0.0, %v1902
        %v1904 = vpop.f32.mrf.mxu0
        %v1905 = vadd.f32 0.0, %v1904
        %v1906 = vpop.f32.mrf.mxu0
        %v1907 = vadd.f32 0.0, %v1906
        %v1908 = vpop.f32.mrf.mxu0
        %v1909 = vadd.f32 0.0, %v1908
        %1910 = vmatprep.mubr.bf16.mxu0 %v1591
        %1911 = vmatmul.mubr.bf16.gmra.mxu0 %v1590
        %v1912 = vpop.f32.mrf.mxu0
        %v1913 = vadd.f32 0.0, %v1912
        %v1914 = vpop.f32.mrf.mxu0
        %v1915 = vadd.f32 0.0, %v1914
        %v1916 = vpop.f32.mrf.mxu0
        %v1917 = vadd.f32 0.0, %v1916
        %v1918 = vpop.f32.mrf.mxu0
        %v1919 = vadd.f32 0.0, %v1918
        %1920 = vmatprep.mubr.bf16.mxu0 %v1593
        %1921 = vmatmul.mubr.bf16.gmra.mxu0 %v1592
        %v1922 = vpop.f32.mrf.mxu0
        %v1923 = vadd.f32 0.0, %v1922
        %v1924 = vpop.f32.mrf.mxu0
        %v1925 = vadd.f32 0.0, %v1924
        %v1926 = vpop.f32.mrf.mxu0
        %v1927 = vadd.f32 0.0, %v1926
        %v1928 = vpop.f32.mrf.mxu0
        %v1929 = vadd.f32 0.0, %v1928
        %1930 = vmatprep.mubr.bf16.mxu0 %v1595
        %1931 = vmatmul.mubr.bf16.gmra.mxu0 %v1594
        %v1932 = vpop.f32.mrf.mxu0
        %v1933 = vadd.f32 0.0, %v1932
        %v1934 = vpop.f32.mrf.mxu0
        %v1935 = vadd.f32 0.0, %v1934
        %v1936 = vpop.f32.mrf.mxu0
        %v1937 = vadd.f32 0.0, %v1936
        %v1938 = vpop.f32.mrf.mxu0
        %v1939 = vadd.f32 0.0, %v1938
        %1940 = vmatprep.mubr.bf16.mxu0 %v1597
        %1941 = vmatmul.mubr.bf16.gmra.mxu0 %v1596
        %v1942 = vpop.f32.mrf.mxu0
        %v1943 = vadd.f32 0.0, %v1942
        %v1944 = vpop.f32.mrf.mxu0
        %v1945 = vadd.f32 0.0, %v1944
        %v1946 = vpop.f32.mrf.mxu0
        %v1947 = vadd.f32 0.0, %v1946
        %v1948 = vpop.f32.mrf.mxu0
        %v1949 = vadd.f32 0.0, %v1948
        %1950 = vmatprep.mubr.bf16.mxu0 %v1599
        %1951 = vmatmul.mubr.bf16.gmra.mxu0 %v1598
        %v1952 = vpop.f32.mrf.mxu0
        %v1953 = vadd.f32 0.0, %v1952
        %v1954 = vpop.f32.mrf.mxu0
        %v1955 = vadd.f32 0.0, %v1954
        %v1956 = vpop.f32.mrf.mxu0
        %v1957 = vadd.f32 0.0, %v1956
        %v1958 = vpop.f32.mrf.mxu0
        %v1959 = vadd.f32 0.0, %v1958
        %1960 = vmatprep.mubr.bf16.mxu0 %v1601
        %1961 = vmatmul.mubr.bf16.gmra.mxu0 %v1600
        %v1962 = vpop.f32.mrf.mxu0
        %v1963 = vadd.f32 0.0, %v1962
        %v1964 = vpop.f32.mrf.mxu0
        %v1965 = vadd.f32 0.0, %v1964
        %v1966 = vpop.f32.mrf.mxu0
        %v1967 = vadd.f32 0.0, %v1966
        %v1968 = vpop.f32.mrf.mxu0
        %v1969 = vadd.f32 0.0, %v1968
        %1970 = vmatprep.mubr.bf16.mxu0 %v1603
        %1971 = vmatmul.mubr.bf16.gmra.mxu0 %v1602
        %v1972 = vpop.f32.mrf.mxu0
        %v1973 = vadd.f32 0.0, %v1972
        %v1974 = vpop.f32.mrf.mxu0
        %v1975 = vadd.f32 0.0, %v1974
        %v1976 = vpop.f32.mrf.mxu0
        %v1977 = vadd.f32 0.0, %v1976
        %v1978 = vpop.f32.mrf.mxu0
        %v1979 = vadd.f32 0.0, %v1978
        %1980 = vmatprep.mubr.bf16.mxu0 %v1605
        %1981 = vmatmul.mubr.bf16.gmra.mxu0 %v1604
        %v1982 = vpop.f32.mrf.mxu0
        %v1983 = vadd.f32 0.0, %v1982
        %v1984 = vpop.f32.mrf.mxu0
        %v1985 = vadd.f32 0.0, %v1984
        %v1986 = vpop.f32.mrf.mxu0
        %v1987 = vadd.f32 0.0, %v1986
        %v1988 = vpop.f32.mrf.mxu0
        %v1989 = vadd.f32 0.0, %v1988
        %1990 = vmatprep.mubr.bf16.mxu0 %v1607
        %1991 = vmatmul.mubr.bf16.gmra.mxu0 %v1606
        %v1992 = vpop.f32.mrf.mxu0
        %v1993 = vadd.f32 0.0, %v1992
        %v1994 = vpop.f32.mrf.mxu0
        %v1995 = vadd.f32 0.0, %v1994
        %v1996 = vpop.f32.mrf.mxu0
        %v1997 = vadd.f32 0.0, %v1996
        %v1998 = vpop.f32.mrf.mxu0
        %v1999 = vadd.f32 0.0, %v1998
        %2000 = vmatprep.mubr.bf16.mxu0 %v1609
        %2001 = vmatmul.mubr.bf16.gmra.mxu0 %v1608
        %v2002 = vpop.f32.mrf.mxu0
        %v2003 = vadd.f32 0.0, %v2002
        %v2004 = vpop.f32.mrf.mxu0
        %v2005 = vadd.f32 0.0, %v2004
        %v2006 = vpop.f32.mrf.mxu0
        %v2007 = vadd.f32 0.0, %v2006
        %v2008 = vpop.f32.mrf.mxu0
        %v2009 = vadd.f32 0.0, %v2008
        %2010 = vmatprep.mubr.bf16.mxu0 %v1611
        %2011 = vmatmul.mubr.bf16.gmra.mxu0 %v1610
        %v2012 = vpop.f32.mrf.mxu0
        %v2013 = vadd.f32 0.0, %v2012
        %v2014 = vpop.f32.mrf.mxu0
        %v2015 = vadd.f32 0.0, %v2014
        %v2016 = vpop.f32.mrf.mxu0
        %v2017 = vadd.f32 0.0, %v2016
        %v2018 = vpop.f32.mrf.mxu0
        %v2019 = vadd.f32 0.0, %v2018
        %2020 = vmatprep.mubr.bf16.mxu0 %v1613
        %2021 = vmatmul.mubr.bf16.gmra.mxu0 %v1612
        %v2022 = vpop.f32.mrf.mxu0
        %v2023 = vadd.f32 0.0, %v2022
        %v2024 = vpop.f32.mrf.mxu0
        %v2025 = vadd.f32 0.0, %v2024
        %v2026 = vpop.f32.mrf.mxu0
        %v2027 = vadd.f32 0.0, %v2026
        %v2028 = vpop.f32.mrf.mxu0
        %v2029 = vadd.f32 0.0, %v2028
        %2030 = vdwg.mxu0
        %v2031 = vld [vmem:[%s5] sm:$0xff]
        %v2032 = vld [vmem:[%s5 + $0x8] sm:$0xff]
        %v2033 = vld [vmem:[%s5 + $0x10] sm:$0xff]
        %v2034 = vld [vmem:[%s5 + $0x18] sm:$0xff]
        %v2035 = vld [vmem:[%s5 + $0x20] sm:$0xff]
        %v2036 = vld [vmem:[%s5 + $0x28] sm:$0xff]
        %v2037 = vld [vmem:[%s5 + $0x30] sm:$0xff]
        %v2038 = vld [vmem:[%s5 + $0x38] sm:$0xff]
        %v2039 = vld [vmem:[%s5 + $0x40] sm:$0xff]
        %v2040 = vld [vmem:[%s5 + $0x48] sm:$0xff]
        %v2041 = vld [vmem:[%s5 + $0x50] sm:$0xff]
        %v2042 = vld [vmem:[%s5 + $0x58] sm:$0xff]
        %v2043 = vld [vmem:[%s5 + $0x60] sm:$0xff]
        %v2044 = vld [vmem:[%s5 + $0x68] sm:$0xff]
        %v2045 = vld [vmem:[%s5 + $0x70] sm:$0xff]
        %v2046 = vld [vmem:[%s5 + $0x78] sm:$0xff]
        %v2047 = vld [vmem:[%s5 + $0x80] sm:$0xff]
        %v2048 = vld [vmem:[%s5 + $0x88] sm:$0xff]
        %v2049 = vld [vmem:[%s5 + $0x90] sm:$0xff]
        %v2050 = vld [vmem:[%s5 + $0x98] sm:$0xff]
        %v2051 = vld [vmem:[%s5 + $0xa0] sm:$0xff]
        %v2052 = vld [vmem:[%s5 + $0xa8] sm:$0xff]
        %v2053 = vld [vmem:[%s5 + $0xb0] sm:$0xff]
        %v2054 = vld [vmem:[%s5 + $0xb8] sm:$0xff]
        %v2055 = vld [vmem:[%s5 + $0xc0] sm:$0xff]
        %v2056 = vld [vmem:[%s5 + $0xc8] sm:$0xff]
        %v2057 = vld [vmem:[%s5 + $0xd0] sm:$0xff]
        %v2058 = vld [vmem:[%s5 + $0xd8] sm:$0xff]
        %v2059 = vld [vmem:[%s5 + $0xe0] sm:$0xff]
        %v2060 = vld [vmem:[%s5 + $0xe8] sm:$0xff]
        %v2061 = vld [vmem:[%s5 + $0xf0] sm:$0xff]
        %v2062 = vld [vmem:[%s5 + $0xf8] sm:$0xff]
        %v2063 = vld [vmem:[%s5 + $0x100] sm:$0xff]
        %v2064 = vld [vmem:[%s5 + $0x108] sm:$0xff]
        %v2065 = vld [vmem:[%s5 + $0x110] sm:$0xff]
        %v2066 = vld [vmem:[%s5 + $0x118] sm:$0xff]
        %v2067 = vld [vmem:[%s5 + $0x120] sm:$0xff]
        %v2068 = vld [vmem:[%s5 + $0x128] sm:$0xff]
        %v2069 = vld [vmem:[%s5 + $0x130] sm:$0xff]
        %v2070 = vld [vmem:[%s5 + $0x138] sm:$0xff]
        %v2071 = vld [vmem:[%s5 + $0x140] sm:$0xff]
        %v2072 = vld [vmem:[%s5 + $0x148] sm:$0xff]
        %v2073 = vld [vmem:[%s5 + $0x150] sm:$0xff]
        %v2074 = vld [vmem:[%s5 + $0x158] sm:$0xff]
        %v2075 = vld [vmem:[%s5 + $0x160] sm:$0xff]
        %v2076 = vld [vmem:[%s5 + $0x168] sm:$0xff]
        %v2077 = vld [vmem:[%s5 + $0x170] sm:$0xff]
        %v2078 = vld [vmem:[%s5 + $0x178] sm:$0xff]
        %v2079 = vld [vmem:[%s5 + $0x180] sm:$0xff]
        %v2080 = vld [vmem:[%s5 + $0x188] sm:$0xff]
        %v2081 = vld [vmem:[%s5 + $0x190] sm:$0xff]
        %v2082 = vld [vmem:[%s5 + $0x198] sm:$0xff]
        %v2083 = vld [vmem:[%s5 + $0x1a0] sm:$0xff]
        %v2084 = vld [vmem:[%s5 + $0x1a8] sm:$0xff]
        %v2085 = vld [vmem:[%s5 + $0x1b0] sm:$0xff]
        %v2086 = vld [vmem:[%s5 + $0x1b8] sm:$0xff]
        %v2087 = vld [vmem:[%s5 + $0x1c0] sm:$0xff]
        %v2088 = vld [vmem:[%s5 + $0x1c8] sm:$0xff]
        %v2089 = vld [vmem:[%s5 + $0x1d0] sm:$0xff]
        %v2090 = vld [vmem:[%s5 + $0x1d8] sm:$0xff]
        %v2091 = vld [vmem:[%s5 + $0x1e0] sm:$0xff]
        %v2092 = vld [vmem:[%s5 + $0x1e8] sm:$0xff]
        %v2093 = vld [vmem:[%s5 + $0x1f0] sm:$0xff]
        %v2094 = vld [vmem:[%s5 + $0x1f8] sm:$0xff]
        %v2095 = vpack.c.bf16 %v1717, %v1713
        %v2096 = vpack.c.bf16 %v1719, %v1715
        %v2097 = vpack.c.bf16 %v1727, %v1723
        %v2098 = vpack.c.bf16 %v1729, %v1725
        %v2099 = vpack.c.bf16 %v1737, %v1733
        %v2100 = vpack.c.bf16 %v1739, %v1735
        %v2101 = vpack.c.bf16 %v1747, %v1743
        %v2102 = vpack.c.bf16 %v1749, %v1745
        %v2103 = vpack.c.bf16 %v1757, %v1753
        %v2104 = vpack.c.bf16 %v1759, %v1755
        %v2105 = vpack.c.bf16 %v1767, %v1763
        %v2106 = vpack.c.bf16 %v1769, %v1765
        %v2107 = vpack.c.bf16 %v1777, %v1773
        %v2108 = vpack.c.bf16 %v1779, %v1775
        %v2109 = vpack.c.bf16 %v1787, %v1783
        %v2110 = vpack.c.bf16 %v1789, %v1785
        %v2111 = vpack.c.bf16 %v1797, %v1793
        %v2112 = vpack.c.bf16 %v1799, %v1795
        %v2113 = vpack.c.bf16 %v1807, %v1803
        %v2114 = vpack.c.bf16 %v1809, %v1805
        %v2115 = vpack.c.bf16 %v1817, %v1813
        %v2116 = vpack.c.bf16 %v1819, %v1815
        %v2117 = vpack.c.bf16 %v1827, %v1823
        %v2118 = vpack.c.bf16 %v1829, %v1825
        %v2119 = vpack.c.bf16 %v1837, %v1833
        %v2120 = vpack.c.bf16 %v1839, %v1835
        %v2121 = vpack.c.bf16 %v1847, %v1843
        %v2122 = vpack.c.bf16 %v1849, %v1845
        %v2123 = vpack.c.bf16 %v1857, %v1853
        %v2124 = vpack.c.bf16 %v1859, %v1855
        %v2125 = vpack.c.bf16 %v1867, %v1863
        %v2126 = vpack.c.bf16 %v1869, %v1865
        %v2127 = vpack.c.bf16 %v1877, %v1873
        %v2128 = vpack.c.bf16 %v1879, %v1875
        %v2129 = vpack.c.bf16 %v1887, %v1883
        %v2130 = vpack.c.bf16 %v1889, %v1885
        %v2131 = vpack.c.bf16 %v1897, %v1893
        %v2132 = vpack.c.bf16 %v1899, %v1895
        %v2133 = vpack.c.bf16 %v1907, %v1903
        %v2134 = vpack.c.bf16 %v1909, %v1905
        %v2135 = vpack.c.bf16 %v1917, %v1913
        %v2136 = vpack.c.bf16 %v1919, %v1915
        %v2137 = vpack.c.bf16 %v1927, %v1923
        %v2138 = vpack.c.bf16 %v1929, %v1925
        %v2139 = vpack.c.bf16 %v1937, %v1933
        %v2140 = vpack.c.bf16 %v1939, %v1935
        %v2141 = vpack.c.bf16 %v1947, %v1943
        %v2142 = vpack.c.bf16 %v1949, %v1945
        %v2143 = vpack.c.bf16 %v1957, %v1953
        %v2144 = vpack.c.bf16 %v1959, %v1955
        %v2145 = vpack.c.bf16 %v1967, %v1963
        %v2146 = vpack.c.bf16 %v1969, %v1965
        %v2147 = vpack.c.bf16 %v1977, %v1973
        %v2148 = vpack.c.bf16 %v1979, %v1975
        %v2149 = vpack.c.bf16 %v1987, %v1983
        %v2150 = vpack.c.bf16 %v1989, %v1985
        %v2151 = vpack.c.bf16 %v1997, %v1993
        %v2152 = vpack.c.bf16 %v1999, %v1995
        %v2153 = vpack.c.bf16 %v2007, %v2003
        %v2154 = vpack.c.bf16 %v2009, %v2005
        %v2155 = vpack.c.bf16 %v2017, %v2013
        %v2156 = vpack.c.bf16 %v2019, %v2015
        %v2157 = vpack.c.bf16 %v2027, %v2023
        %v2158 = vpack.c.bf16 %v2029, %v2025
        %v2159 = vpack.c.bf16 %v2032, %v2031
        %v2160 = vpack.c.bf16 %v2034, %v2033
        %v2161 = vpack.c.bf16 %v2036, %v2035
        %v2162 = vpack.c.bf16 %v2038, %v2037
        %v2163 = vpack.c.bf16 %v2040, %v2039
        %v2164 = vpack.c.bf16 %v2042, %v2041
        %v2165 = vpack.c.bf16 %v2044, %v2043
        %v2166 = vpack.c.bf16 %v2046, %v2045
        %v2167 = vpack.c.bf16 %v2048, %v2047
        %v2168 = vpack.c.bf16 %v2050, %v2049
        %v2169 = vpack.c.bf16 %v2052, %v2051
        %v2170 = vpack.c.bf16 %v2054, %v2053
        %v2171 = vpack.c.bf16 %v2056, %v2055
        %v2172 = vpack.c.bf16 %v2058, %v2057
        %v2173 = vpack.c.bf16 %v2060, %v2059
        %v2174 = vpack.c.bf16 %v2062, %v2061
        %v2175 = vpack.c.bf16 %v2064, %v2063
        %v2176 = vpack.c.bf16 %v2066, %v2065
        %v2177 = vpack.c.bf16 %v2068, %v2067
        %v2178 = vpack.c.bf16 %v2070, %v2069
        %v2179 = vpack.c.bf16 %v2072, %v2071
        %v2180 = vpack.c.bf16 %v2074, %v2073
        %v2181 = vpack.c.bf16 %v2076, %v2075
        %v2182 = vpack.c.bf16 %v2078, %v2077
        %v2183 = vpack.c.bf16 %v2080, %v2079
        %v2184 = vpack.c.bf16 %v2082, %v2081
        %v2185 = vpack.c.bf16 %v2084, %v2083
        %v2186 = vpack.c.bf16 %v2086, %v2085
        %v2187 = vpack.c.bf16 %v2088, %v2087
        %v2188 = vpack.c.bf16 %v2090, %v2089
        %v2189 = vpack.c.bf16 %v2092, %v2091
        %v2190 = vpack.c.bf16 %v2094, %v2093
        %2192 = vset.pattern.permute.xlu0 0
        %2193 = vperm.xlu0 %2192, %v2159
        %v2194 = vpop.permute.xlu0 %2193
        %2197 = vset.pattern.permute.xlu0 0
        %2198 = vperm.xlu0 %2197, %v2160
        %v2199 = vpop.permute.xlu0 %2198
        %2202 = vset.pattern.permute.xlu0 0
        %2203 = vperm.xlu0 %2202, %v2161
        %v2204 = vpop.permute.xlu0 %2203
        %2207 = vset.pattern.permute.xlu0 0
        %2208 = vperm.xlu0 %2207, %v2162
        %v2209 = vpop.permute.xlu0 %2208
        %2212 = vset.pattern.permute.xlu0 0
        %2213 = vperm.xlu0 %2212, %v2163
        %v2214 = vpop.permute.xlu0 %2213
        %2217 = vset.pattern.permute.xlu0 0
        %2218 = vperm.xlu0 %2217, %v2164
        %v2219 = vpop.permute.xlu0 %2218
        %2222 = vset.pattern.permute.xlu0 0
        %2223 = vperm.xlu0 %2222, %v2165
        %v2224 = vpop.permute.xlu0 %2223
        %2227 = vset.pattern.permute.xlu0 0
        %2228 = vperm.xlu0 %2227, %v2166
        %v2229 = vpop.permute.xlu0 %2228
        %2232 = vset.pattern.permute.xlu0 0
        %2233 = vperm.xlu0 %2232, %v2167
        %v2234 = vpop.permute.xlu0 %2233
        %2237 = vset.pattern.permute.xlu0 0
        %2238 = vperm.xlu0 %2237, %v2168
        %v2239 = vpop.permute.xlu0 %2238
        %2242 = vset.pattern.permute.xlu0 0
        %2243 = vperm.xlu0 %2242, %v2169
        %v2244 = vpop.permute.xlu0 %2243
        %2247 = vset.pattern.permute.xlu0 0
        %2248 = vperm.xlu0 %2247, %v2170
        %v2249 = vpop.permute.xlu0 %2248
        %2252 = vset.pattern.permute.xlu0 0
        %2253 = vperm.xlu0 %2252, %v2171
        %v2254 = vpop.permute.xlu0 %2253
        %2257 = vset.pattern.permute.xlu0 0
        %2258 = vperm.xlu0 %2257, %v2172
        %v2259 = vpop.permute.xlu0 %2258
        %2262 = vset.pattern.permute.xlu0 0
        %2263 = vperm.xlu0 %2262, %v2173
        %v2264 = vpop.permute.xlu0 %2263
        %2267 = vset.pattern.permute.xlu0 0
        %2268 = vperm.xlu0 %2267, %v2174
        %v2269 = vpop.permute.xlu0 %2268
        %2272 = vset.pattern.permute.xlu0 0
        %2273 = vperm.xlu0 %2272, %v2175
        %v2274 = vpop.permute.xlu0 %2273
        %2277 = vset.pattern.permute.xlu0 0
        %2278 = vperm.xlu0 %2277, %v2176
        %v2279 = vpop.permute.xlu0 %2278
        %2282 = vset.pattern.permute.xlu0 0
        %2283 = vperm.xlu0 %2282, %v2177
        %v2284 = vpop.permute.xlu0 %2283
        %2287 = vset.pattern.permute.xlu0 0
        %2288 = vperm.xlu0 %2287, %v2178
        %v2289 = vpop.permute.xlu0 %2288
        %2292 = vset.pattern.permute.xlu0 0
        %2293 = vperm.xlu0 %2292, %v2179
        %v2294 = vpop.permute.xlu0 %2293
        %2297 = vset.pattern.permute.xlu0 0
        %2298 = vperm.xlu0 %2297, %v2180
        %v2299 = vpop.permute.xlu0 %2298
        %2302 = vset.pattern.permute.xlu0 0
        %2303 = vperm.xlu0 %2302, %v2181
        %v2304 = vpop.permute.xlu0 %2303
        %2307 = vset.pattern.permute.xlu0 0
        %2308 = vperm.xlu0 %2307, %v2182
        %v2309 = vpop.permute.xlu0 %2308
        %2312 = vset.pattern.permute.xlu0 0
        %2313 = vperm.xlu0 %2312, %v2183
        %v2314 = vpop.permute.xlu0 %2313
        %2317 = vset.pattern.permute.xlu0 0
        %2318 = vperm.xlu0 %2317, %v2184
        %v2319 = vpop.permute.xlu0 %2318
        %2322 = vset.pattern.permute.xlu0 0
        %2323 = vperm.xlu0 %2322, %v2185
        %v2324 = vpop.permute.xlu0 %2323
        %2327 = vset.pattern.permute.xlu0 0
        %2328 = vperm.xlu0 %2327, %v2186
        %v2329 = vpop.permute.xlu0 %2328
        %2332 = vset.pattern.permute.xlu0 0
        %2333 = vperm.xlu0 %2332, %v2187
        %v2334 = vpop.permute.xlu0 %2333
        %2337 = vset.pattern.permute.xlu0 0
        %2338 = vperm.xlu0 %2337, %v2188
        %v2339 = vpop.permute.xlu0 %2338
        %2342 = vset.pattern.permute.xlu0 0
        %2343 = vperm.xlu0 %2342, %v2189
        %v2344 = vpop.permute.xlu0 %2343
        %2347 = vset.pattern.permute.xlu0 0
        %2348 = vperm.xlu0 %2347, %v2190
        %v2349 = vpop.permute.xlu0 %2348
        %v2351 = vadd.bf16 %v2095, %v2194
        %v2352 = vadd.bf16 %v2096, %v2194
        %v2353 = vadd.bf16 %v2097, %v2199
        %v2354 = vadd.bf16 %v2098, %v2199
        %v2355 = vadd.bf16 %v2099, %v2204
        %v2356 = vadd.bf16 %v2100, %v2204
        %v2357 = vadd.bf16 %v2101, %v2209
        %v2358 = vadd.bf16 %v2102, %v2209
        %v2359 = vadd.bf16 %v2103, %v2214
        %v2360 = vadd.bf16 %v2104, %v2214
        %v2361 = vadd.bf16 %v2105, %v2219
        %v2362 = vadd.bf16 %v2106, %v2219
        %v2363 = vadd.bf16 %v2107, %v2224
        %v2364 = vadd.bf16 %v2108, %v2224
        %v2365 = vadd.bf16 %v2109, %v2229
        %v2366 = vadd.bf16 %v2110, %v2229
        %v2367 = vadd.bf16 %v2111, %v2234
        %v2368 = vadd.bf16 %v2112, %v2234
        %v2369 = vadd.bf16 %v2113, %v2239
        %v2370 = vadd.bf16 %v2114, %v2239
        %v2371 = vadd.bf16 %v2115, %v2244
        %v2372 = vadd.bf16 %v2116, %v2244
        %v2373 = vadd.bf16 %v2117, %v2249
        %v2374 = vadd.bf16 %v2118, %v2249
        %v2375 = vadd.bf16 %v2119, %v2254
        %v2376 = vadd.bf16 %v2120, %v2254
        %v2377 = vadd.bf16 %v2121, %v2259
        %v2378 = vadd.bf16 %v2122, %v2259
        %v2379 = vadd.bf16 %v2123, %v2264
        %v2380 = vadd.bf16 %v2124, %v2264
        %v2381 = vadd.bf16 %v2125, %v2269
        %v2382 = vadd.bf16 %v2126, %v2269
        %v2383 = vadd.bf16 %v2127, %v2274
        %v2384 = vadd.bf16 %v2128, %v2274
        %v2385 = vadd.bf16 %v2129, %v2279
        %v2386 = vadd.bf16 %v2130, %v2279
        %v2387 = vadd.bf16 %v2131, %v2284
        %v2388 = vadd.bf16 %v2132, %v2284
        %v2389 = vadd.bf16 %v2133, %v2289
        %v2390 = vadd.bf16 %v2134, %v2289
        %v2391 = vadd.bf16 %v2135, %v2294
        %v2392 = vadd.bf16 %v2136, %v2294
        %v2393 = vadd.bf16 %v2137, %v2299
        %v2394 = vadd.bf16 %v2138, %v2299
        %v2395 = vadd.bf16 %v2139, %v2304
        %v2396 = vadd.bf16 %v2140, %v2304
        %v2397 = vadd.bf16 %v2141, %v2309
        %v2398 = vadd.bf16 %v2142, %v2309
        %v2399 = vadd.bf16 %v2143, %v2314
        %v2400 = vadd.bf16 %v2144, %v2314
        %v2401 = vadd.bf16 %v2145, %v2319
        %v2402 = vadd.bf16 %v2146, %v2319
        %v2403 = vadd.bf16 %v2147, %v2324
        %v2404 = vadd.bf16 %v2148, %v2324
        %v2405 = vadd.bf16 %v2149, %v2329
        %v2406 = vadd.bf16 %v2150, %v2329
        %v2407 = vadd.bf16 %v2151, %v2334
        %v2408 = vadd.bf16 %v2152, %v2334
        %v2409 = vadd.bf16 %v2153, %v2339
        %v2410 = vadd.bf16 %v2154, %v2339
        %v2411 = vadd.bf16 %v2155, %v2344
        %v2412 = vadd.bf16 %v2156, %v2344
        %v2413 = vadd.bf16 %v2157, %v2349
        %v2414 = vadd.bf16 %v2158, %v2349
        %v2415 = vmax.bf16 %v2351, 0
        %v2416 = vmax.bf16 %v2352, 0
        %v2417 = vmax.bf16 %v2353, 0
        %v2418 = vmax.bf16 %v2354, 0
        %v2419 = vmax.bf16 %v2355, 0
        %v2420 = vmax.bf16 %v2356, 0
        %v2421 = vmax.bf16 %v2357, 0
        %v2422 = vmax.bf16 %v2358, 0
        %v2423 = vmax.bf16 %v2359, 0
        %v2424 = vmax.bf16 %v2360, 0
        %v2425 = vmax.bf16 %v2361, 0
        %v2426 = vmax.bf16 %v2362, 0
        %v2427 = vmax.bf16 %v2363, 0
        %v2428 = vmax.bf16 %v2364, 0
        %v2429 = vmax.bf16 %v2365, 0
        %v2430 = vmax.bf16 %v2366, 0
        %v2431 = vmax.bf16 %v2367, 0
        %v2432 = vmax.bf16 %v2368, 0
        %v2433 = vmax.bf16 %v2369, 0
        %v2434 = vmax.bf16 %v2370, 0
        %v2435 = vmax.bf16 %v2371, 0
        %v2436 = vmax.bf16 %v2372, 0
        %v2437 = vmax.bf16 %v2373, 0
        %v2438 = vmax.bf16 %v2374, 0
        %v2439 = vmax.bf16 %v2375, 0
        %v2440 = vmax.bf16 %v2376, 0
        %v2441 = vmax.bf16 %v2377, 0
        %v2442 = vmax.bf16 %v2378, 0
        %v2443 = vmax.bf16 %v2379, 0
        %v2444 = vmax.bf16 %v2380, 0
        %v2445 = vmax.bf16 %v2381, 0
        %v2446 = vmax.bf16 %v2382, 0
        %v2447 = vmax.bf16 %v2383, 0
        %v2448 = vmax.bf16 %v2384, 0
        %v2449 = vmax.bf16 %v2385, 0
        %v2450 = vmax.bf16 %v2386, 0
        %v2451 = vmax.bf16 %v2387, 0
        %v2452 = vmax.bf16 %v2388, 0
        %v2453 = vmax.bf16 %v2389, 0
        %v2454 = vmax.bf16 %v2390, 0
        %v2455 = vmax.bf16 %v2391, 0
        %v2456 = vmax.bf16 %v2392, 0
        %v2457 = vmax.bf16 %v2393, 0
        %v2458 = vmax.bf16 %v2394, 0
        %v2459 = vmax.bf16 %v2395, 0
        %v2460 = vmax.bf16 %v2396, 0
        %v2461 = vmax.bf16 %v2397, 0
        %v2462 = vmax.bf16 %v2398, 0
        %v2463 = vmax.bf16 %v2399, 0
        %v2464 = vmax.bf16 %v2400, 0
        %v2465 = vmax.bf16 %v2401, 0
        %v2466 = vmax.bf16 %v2402, 0
        %v2467 = vmax.bf16 %v2403, 0
        %v2468 = vmax.bf16 %v2404, 0
        %v2469 = vmax.bf16 %v2405, 0
        %v2470 = vmax.bf16 %v2406, 0
        %v2471 = vmax.bf16 %v2407, 0
        %v2472 = vmax.bf16 %v2408, 0
        %v2473 = vmax.bf16 %v2409, 0
        %v2474 = vmax.bf16 %v2410, 0
        %v2475 = vmax.bf16 %v2411, 0
        %v2476 = vmax.bf16 %v2412, 0
        %v2477 = vmax.bf16 %v2413, 0
        %v2478 = vmax.bf16 %v2414, 0
        %v2479 = vld [vmem:[%s6] sm:$0xff]
        %v2480 = vld [vmem:[%s6 + $0x8] sm:$0xff]
        %v2481 = vld [vmem:[%s6 + $0x10] sm:$0xff]
        %v2482 = vld [vmem:[%s6 + $0x18] sm:$0xff]
        %v2483 = vld [vmem:[%s6 + $0x20] sm:$0xff]
        %v2484 = vld [vmem:[%s6 + $0x28] sm:$0xff]
        %v2485 = vld [vmem:[%s6 + $0x30] sm:$0xff]
        %v2486 = vld [vmem:[%s6 + $0x38] sm:$0xff]
        %v2487 = vld [vmem:[%s6 + $0x40] sm:$0xff]
        %v2488 = vld [vmem:[%s6 + $0x48] sm:$0xff]
        %v2489 = vld [vmem:[%s6 + $0x50] sm:$0xff]
        %v2490 = vld [vmem:[%s6 + $0x58] sm:$0xff]
        %v2491 = vld [vmem:[%s6 + $0x60] sm:$0xff]
        %v2492 = vld [vmem:[%s6 + $0x68] sm:$0xff]
        %v2493 = vld [vmem:[%s6 + $0x70] sm:$0xff]
        %v2494 = vld [vmem:[%s6 + $0x78] sm:$0xff]
        %v2495 = vld [vmem:[%s6 + $0x80] sm:$0xff]
        %v2496 = vld [vmem:[%s6 + $0x88] sm:$0xff]
        %v2497 = vld [vmem:[%s6 + $0x90] sm:$0xff]
        %v2498 = vld [vmem:[%s6 + $0x98] sm:$0xff]
        %v2499 = vld [vmem:[%s6 + $0xa0] sm:$0xff]
        %v2500 = vld [vmem:[%s6 + $0xa8] sm:$0xff]
        %v2501 = vld [vmem:[%s6 + $0xb0] sm:$0xff]
        %v2502 = vld [vmem:[%s6 + $0xb8] sm:$0xff]
        %v2503 = vld [vmem:[%s6 + $0xc0] sm:$0xff]
        %v2504 = vld [vmem:[%s6 + $0xc8] sm:$0xff]
        %v2505 = vld [vmem:[%s6 + $0xd0] sm:$0xff]
        %v2506 = vld [vmem:[%s6 + $0xd8] sm:$0xff]
        %v2507 = vld [vmem:[%s6 + $0xe0] sm:$0xff]
        %v2508 = vld [vmem:[%s6 + $0xe8] sm:$0xff]
        %v2509 = vld [vmem:[%s6 + $0xf0] sm:$0xff]
        %v2510 = vld [vmem:[%s6 + $0xf8] sm:$0xff]
        %v2511 = vld [vmem:[%s6 + $0x100] sm:$0xff]
        %v2512 = vld [vmem:[%s6 + $0x108] sm:$0xff]
        %v2513 = vld [vmem:[%s6 + $0x110] sm:$0xff]
        %v2514 = vld [vmem:[%s6 + $0x118] sm:$0xff]
        %v2515 = vld [vmem:[%s6 + $0x120] sm:$0xff]
        %v2516 = vld [vmem:[%s6 + $0x128] sm:$0xff]
        %v2517 = vld [vmem:[%s6 + $0x130] sm:$0xff]
        %v2518 = vld [vmem:[%s6 + $0x138] sm:$0xff]
        %v2519 = vld [vmem:[%s6 + $0x140] sm:$0xff]
        %v2520 = vld [vmem:[%s6 + $0x148] sm:$0xff]
        %v2521 = vld [vmem:[%s6 + $0x150] sm:$0xff]
        %v2522 = vld [vmem:[%s6 + $0x158] sm:$0xff]
        %v2523 = vld [vmem:[%s6 + $0x160] sm:$0xff]
        %v2524 = vld [vmem:[%s6 + $0x168] sm:$0xff]
        %v2525 = vld [vmem:[%s6 + $0x170] sm:$0xff]
        %v2526 = vld [vmem:[%s6 + $0x178] sm:$0xff]
        %v2527 = vld [vmem:[%s6 + $0x180] sm:$0xff]
        %v2528 = vld [vmem:[%s6 + $0x188] sm:$0xff]
        %v2529 = vld [vmem:[%s6 + $0x190] sm:$0xff]
        %v2530 = vld [vmem:[%s6 + $0x198] sm:$0xff]
        %v2531 = vld [vmem:[%s6 + $0x1a0] sm:$0xff]
        %v2532 = vld [vmem:[%s6 + $0x1a8] sm:$0xff]
        %v2533 = vld [vmem:[%s6 + $0x1b0] sm:$0xff]
        %v2534 = vld [vmem:[%s6 + $0x1b8] sm:$0xff]
        %v2535 = vld [vmem:[%s6 + $0x1c0] sm:$0xff]
        %v2536 = vld [vmem:[%s6 + $0x1c8] sm:$0xff]
        %v2537 = vld [vmem:[%s6 + $0x1d0] sm:$0xff]
        %v2538 = vld [vmem:[%s6 + $0x1d8] sm:$0xff]
        %v2539 = vld [vmem:[%s6 + $0x1e0] sm:$0xff]
        %v2540 = vld [vmem:[%s6 + $0x1e8] sm:$0xff]
        %v2541 = vld [vmem:[%s6 + $0x1f0] sm:$0xff]
        %v2542 = vld [vmem:[%s6 + $0x1f8] sm:$0xff]
        %v2543 = vld [vmem:[%s6 + $0x200] sm:$0xff]
        %v2544 = vld [vmem:[%s6 + $0x208] sm:$0xff]
        %v2545 = vld [vmem:[%s6 + $0x210] sm:$0xff]
        %v2546 = vld [vmem:[%s6 + $0x218] sm:$0xff]
        %v2547 = vld [vmem:[%s6 + $0x220] sm:$0xff]
        %v2548 = vld [vmem:[%s6 + $0x228] sm:$0xff]
        %v2549 = vld [vmem:[%s6 + $0x230] sm:$0xff]
        %v2550 = vld [vmem:[%s6 + $0x238] sm:$0xff]
        %v2551 = vld [vmem:[%s6 + $0x240] sm:$0xff]
        %v2552 = vld [vmem:[%s6 + $0x248] sm:$0xff]
        %v2553 = vld [vmem:[%s6 + $0x250] sm:$0xff]
        %v2554 = vld [vmem:[%s6 + $0x258] sm:$0xff]
        %v2555 = vld [vmem:[%s6 + $0x260] sm:$0xff]
        %v2556 = vld [vmem:[%s6 + $0x268] sm:$0xff]
        %v2557 = vld [vmem:[%s6 + $0x270] sm:$0xff]
        %v2558 = vld [vmem:[%s6 + $0x278] sm:$0xff]
        %v2559 = vld [vmem:[%s6 + $0x280] sm:$0xff]
        %v2560 = vld [vmem:[%s6 + $0x288] sm:$0xff]
        %v2561 = vld [vmem:[%s6 + $0x290] sm:$0xff]
        %v2562 = vld [vmem:[%s6 + $0x298] sm:$0xff]
        %v2563 = vld [vmem:[%s6 + $0x2a0] sm:$0xff]
        %v2564 = vld [vmem:[%s6 + $0x2a8] sm:$0xff]
        %v2565 = vld [vmem:[%s6 + $0x2b0] sm:$0xff]
        %v2566 = vld [vmem:[%s6 + $0x2b8] sm:$0xff]
        %v2567 = vld [vmem:[%s6 + $0x2c0] sm:$0xff]
        %v2568 = vld [vmem:[%s6 + $0x2c8] sm:$0xff]
        %v2569 = vld [vmem:[%s6 + $0x2d0] sm:$0xff]
        %v2570 = vld [vmem:[%s6 + $0x2d8] sm:$0xff]
        %v2571 = vld [vmem:[%s6 + $0x2e0] sm:$0xff]
        %v2572 = vld [vmem:[%s6 + $0x2e8] sm:$0xff]
        %v2573 = vld [vmem:[%s6 + $0x2f0] sm:$0xff]
        %v2574 = vld [vmem:[%s6 + $0x2f8] sm:$0xff]
        %v2575 = vld [vmem:[%s6 + $0x300] sm:$0xff]
        %v2576 = vld [vmem:[%s6 + $0x308] sm:$0xff]
        %v2577 = vld [vmem:[%s6 + $0x310] sm:$0xff]
        %v2578 = vld [vmem:[%s6 + $0x318] sm:$0xff]
        %v2579 = vld [vmem:[%s6 + $0x320] sm:$0xff]
        %v2580 = vld [vmem:[%s6 + $0x328] sm:$0xff]
        %v2581 = vld [vmem:[%s6 + $0x330] sm:$0xff]
        %v2582 = vld [vmem:[%s6 + $0x338] sm:$0xff]
        %v2583 = vld [vmem:[%s6 + $0x340] sm:$0xff]
        %v2584 = vld [vmem:[%s6 + $0x348] sm:$0xff]
        %v2585 = vld [vmem:[%s6 + $0x350] sm:$0xff]
        %v2586 = vld [vmem:[%s6 + $0x358] sm:$0xff]
        %v2587 = vld [vmem:[%s6 + $0x360] sm:$0xff]
        %v2588 = vld [vmem:[%s6 + $0x368] sm:$0xff]
        %v2589 = vld [vmem:[%s6 + $0x370] sm:$0xff]
        %v2590 = vld [vmem:[%s6 + $0x378] sm:$0xff]
        %v2591 = vld [vmem:[%s6 + $0x380] sm:$0xff]
        %v2592 = vld [vmem:[%s6 + $0x388] sm:$0xff]
        %v2593 = vld [vmem:[%s6 + $0x390] sm:$0xff]
        %v2594 = vld [vmem:[%s6 + $0x398] sm:$0xff]
        %v2595 = vld [vmem:[%s6 + $0x3a0] sm:$0xff]
        %v2596 = vld [vmem:[%s6 + $0x3a8] sm:$0xff]
        %v2597 = vld [vmem:[%s6 + $0x3b0] sm:$0xff]
        %v2598 = vld [vmem:[%s6 + $0x3b8] sm:$0xff]
        %v2599 = vld [vmem:[%s6 + $0x3c0] sm:$0xff]
        %v2600 = vld [vmem:[%s6 + $0x3c8] sm:$0xff]
        %v2601 = vld [vmem:[%s6 + $0x3d0] sm:$0xff]
        %v2602 = vld [vmem:[%s6 + $0x3d8] sm:$0xff]
        %v2603 = vld [vmem:[%s6 + $0x3e0] sm:$0xff]
        %v2604 = vld [vmem:[%s6 + $0x3e8] sm:$0xff]
        %v2605 = vld [vmem:[%s6 + $0x3f0] sm:$0xff]
        %v2606 = vld [vmem:[%s6 + $0x3f8] sm:$0xff]
        %v2735 = vunpack.c.l.b16 %v2479
        %v2736 = vunpack.c.h.b16 %v2479
        %v2737 = vunpack.c.l.b16 %v2480
        %v2738 = vunpack.c.h.b16 %v2480
        %v2739 = vunpack.c.l.b16 %v2481
        %v2740 = vunpack.c.h.b16 %v2481
        %v2741 = vunpack.c.l.b16 %v2482
        %v2742 = vunpack.c.h.b16 %v2482
        %v2743 = vunpack.c.l.b16 %v2483
        %v2744 = vunpack.c.h.b16 %v2483
        %v2745 = vunpack.c.l.b16 %v2484
        %v2746 = vunpack.c.h.b16 %v2484
        %v2747 = vunpack.c.l.b16 %v2485
        %v2748 = vunpack.c.h.b16 %v2485
        %v2749 = vunpack.c.l.b16 %v2486
        %v2750 = vunpack.c.h.b16 %v2486
        %v2751 = vunpack.c.l.b16 %v2487
        %v2752 = vunpack.c.h.b16 %v2487
        %v2753 = vunpack.c.l.b16 %v2488
        %v2754 = vunpack.c.h.b16 %v2488
        %v2755 = vunpack.c.l.b16 %v2489
        %v2756 = vunpack.c.h.b16 %v2489
        %v2757 = vunpack.c.l.b16 %v2490
        %v2758 = vunpack.c.h.b16 %v2490
        %v2759 = vunpack.c.l.b16 %v2491
        %v2760 = vunpack.c.h.b16 %v2491
        %v2761 = vunpack.c.l.b16 %v2492
        %v2762 = vunpack.c.h.b16 %v2492
        %v2763 = vunpack.c.l.b16 %v2493
        %v2764 = vunpack.c.h.b16 %v2493
        %v2765 = vunpack.c.l.b16 %v2494
        %v2766 = vunpack.c.h.b16 %v2494
        %v2767 = vunpack.c.l.b16 %v2495
        %v2768 = vunpack.c.h.b16 %v2495
        %v2769 = vunpack.c.l.b16 %v2496
        %v2770 = vunpack.c.h.b16 %v2496
        %v2771 = vunpack.c.l.b16 %v2497
        %v2772 = vunpack.c.h.b16 %v2497
        %v2773 = vunpack.c.l.b16 %v2498
        %v2774 = vunpack.c.h.b16 %v2498
        %v2775 = vunpack.c.l.b16 %v2499
        %v2776 = vunpack.c.h.b16 %v2499
        %v2777 = vunpack.c.l.b16 %v2500
        %v2778 = vunpack.c.h.b16 %v2500
        %v2779 = vunpack.c.l.b16 %v2501
        %v2780 = vunpack.c.h.b16 %v2501
        %v2781 = vunpack.c.l.b16 %v2502
        %v2782 = vunpack.c.h.b16 %v2502
        %v2783 = vunpack.c.l.b16 %v2503
        %v2784 = vunpack.c.h.b16 %v2503
        %v2785 = vunpack.c.l.b16 %v2504
        %v2786 = vunpack.c.h.b16 %v2504
        %v2787 = vunpack.c.l.b16 %v2505
        %v2788 = vunpack.c.h.b16 %v2505
        %v2789 = vunpack.c.l.b16 %v2506
        %v2790 = vunpack.c.h.b16 %v2506
        %v2791 = vunpack.c.l.b16 %v2507
        %v2792 = vunpack.c.h.b16 %v2507
        %v2793 = vunpack.c.l.b16 %v2508
        %v2794 = vunpack.c.h.b16 %v2508
        %v2795 = vunpack.c.l.b16 %v2509
        %v2796 = vunpack.c.h.b16 %v2509
        %v2797 = vunpack.c.l.b16 %v2510
        %v2798 = vunpack.c.h.b16 %v2510
        %v2799 = vunpack.c.l.b16 %v2511
        %v2800 = vunpack.c.h.b16 %v2511
        %v2801 = vunpack.c.l.b16 %v2512
        %v2802 = vunpack.c.h.b16 %v2512
        %v2803 = vunpack.c.l.b16 %v2513
        %v2804 = vunpack.c.h.b16 %v2513
        %v2805 = vunpack.c.l.b16 %v2514
        %v2806 = vunpack.c.h.b16 %v2514
        %v2807 = vunpack.c.l.b16 %v2515
        %v2808 = vunpack.c.h.b16 %v2515
        %v2809 = vunpack.c.l.b16 %v2516
        %v2810 = vunpack.c.h.b16 %v2516
        %v2811 = vunpack.c.l.b16 %v2517
        %v2812 = vunpack.c.h.b16 %v2517
        %v2813 = vunpack.c.l.b16 %v2518
        %v2814 = vunpack.c.h.b16 %v2518
        %v2815 = vunpack.c.l.b16 %v2519
        %v2816 = vunpack.c.h.b16 %v2519
        %v2817 = vunpack.c.l.b16 %v2520
        %v2818 = vunpack.c.h.b16 %v2520
        %v2819 = vunpack.c.l.b16 %v2521
        %v2820 = vunpack.c.h.b16 %v2521
        %v2821 = vunpack.c.l.b16 %v2522
        %v2822 = vunpack.c.h.b16 %v2522
        %v2823 = vunpack.c.l.b16 %v2523
        %v2824 = vunpack.c.h.b16 %v2523
        %v2825 = vunpack.c.l.b16 %v2524
        %v2826 = vunpack.c.h.b16 %v2524
        %v2827 = vunpack.c.l.b16 %v2525
        %v2828 = vunpack.c.h.b16 %v2525
        %v2829 = vunpack.c.l.b16 %v2526
        %v2830 = vunpack.c.h.b16 %v2526
        %v2831 = vunpack.c.l.b16 %v2527
        %v2832 = vunpack.c.h.b16 %v2527
        %v2833 = vunpack.c.l.b16 %v2528
        %v2834 = vunpack.c.h.b16 %v2528
        %v2835 = vunpack.c.l.b16 %v2529
        %v2836 = vunpack.c.h.b16 %v2529
        %v2837 = vunpack.c.l.b16 %v2530
        %v2838 = vunpack.c.h.b16 %v2530
        %v2839 = vunpack.c.l.b16 %v2531
        %v2840 = vunpack.c.h.b16 %v2531
        %v2841 = vunpack.c.l.b16 %v2532
        %v2842 = vunpack.c.h.b16 %v2532
        %v2843 = vunpack.c.l.b16 %v2533
        %v2844 = vunpack.c.h.b16 %v2533
        %v2845 = vunpack.c.l.b16 %v2534
        %v2846 = vunpack.c.h.b16 %v2534
        %v2847 = vunpack.c.l.b16 %v2535
        %v2848 = vunpack.c.h.b16 %v2535
        %v2849 = vunpack.c.l.b16 %v2536
        %v2850 = vunpack.c.h.b16 %v2536
        %v2851 = vunpack.c.l.b16 %v2537
        %v2852 = vunpack.c.h.b16 %v2537
        %v2853 = vunpack.c.l.b16 %v2538
        %v2854 = vunpack.c.h.b16 %v2538
        %v2855 = vunpack.c.l.b16 %v2539
        %v2856 = vunpack.c.h.b16 %v2539
        %v2857 = vunpack.c.l.b16 %v2540
        %v2858 = vunpack.c.h.b16 %v2540
        %v2859 = vunpack.c.l.b16 %v2541
        %v2860 = vunpack.c.h.b16 %v2541
        %v2861 = vunpack.c.l.b16 %v2542
        %v2862 = vunpack.c.h.b16 %v2542
        %v2863 = vunpack.c.l.b16 %v2543
        %v2864 = vunpack.c.h.b16 %v2543
        %v2865 = vunpack.c.l.b16 %v2544
        %v2866 = vunpack.c.h.b16 %v2544
        %v2867 = vunpack.c.l.b16 %v2545
        %v2868 = vunpack.c.h.b16 %v2545
        %v2869 = vunpack.c.l.b16 %v2546
        %v2870 = vunpack.c.h.b16 %v2546
        %v2871 = vunpack.c.l.b16 %v2547
        %v2872 = vunpack.c.h.b16 %v2547
        %v2873 = vunpack.c.l.b16 %v2548
        %v2874 = vunpack.c.h.b16 %v2548
        %v2875 = vunpack.c.l.b16 %v2549
        %v2876 = vunpack.c.h.b16 %v2549
        %v2877 = vunpack.c.l.b16 %v2550
        %v2878 = vunpack.c.h.b16 %v2550
        %v2879 = vunpack.c.l.b16 %v2551
        %v2880 = vunpack.c.h.b16 %v2551
        %v2881 = vunpack.c.l.b16 %v2552
        %v2882 = vunpack.c.h.b16 %v2552
        %v2883 = vunpack.c.l.b16 %v2553
        %v2884 = vunpack.c.h.b16 %v2553
        %v2885 = vunpack.c.l.b16 %v2554
        %v2886 = vunpack.c.h.b16 %v2554
        %v2887 = vunpack.c.l.b16 %v2555
        %v2888 = vunpack.c.h.b16 %v2555
        %v2889 = vunpack.c.l.b16 %v2556
        %v2890 = vunpack.c.h.b16 %v2556
        %v2891 = vunpack.c.l.b16 %v2557
        %v2892 = vunpack.c.h.b16 %v2557
        %v2893 = vunpack.c.l.b16 %v2558
        %v2894 = vunpack.c.h.b16 %v2558
        %v2895 = vunpack.c.l.b16 %v2559
        %v2896 = vunpack.c.h.b16 %v2559
        %v2897 = vunpack.c.l.b16 %v2560
        %v2898 = vunpack.c.h.b16 %v2560
        %v2899 = vunpack.c.l.b16 %v2561
        %v2900 = vunpack.c.h.b16 %v2561
        %v2901 = vunpack.c.l.b16 %v2562
        %v2902 = vunpack.c.h.b16 %v2562
        %v2903 = vunpack.c.l.b16 %v2563
        %v2904 = vunpack.c.h.b16 %v2563
        %v2905 = vunpack.c.l.b16 %v2564
        %v2906 = vunpack.c.h.b16 %v2564
        %v2907 = vunpack.c.l.b16 %v2565
        %v2908 = vunpack.c.h.b16 %v2565
        %v2909 = vunpack.c.l.b16 %v2566
        %v2910 = vunpack.c.h.b16 %v2566
        %v2911 = vunpack.c.l.b16 %v2567
        %v2912 = vunpack.c.h.b16 %v2567
        %v2913 = vunpack.c.l.b16 %v2568
        %v2914 = vunpack.c.h.b16 %v2568
        %v2915 = vunpack.c.l.b16 %v2569
        %v2916 = vunpack.c.h.b16 %v2569
        %v2917 = vunpack.c.l.b16 %v2570
        %v2918 = vunpack.c.h.b16 %v2570
        %v2919 = vunpack.c.l.b16 %v2571
        %v2920 = vunpack.c.h.b16 %v2571
        %v2921 = vunpack.c.l.b16 %v2572
        %v2922 = vunpack.c.h.b16 %v2572
        %v2923 = vunpack.c.l.b16 %v2573
        %v2924 = vunpack.c.h.b16 %v2573
        %v2925 = vunpack.c.l.b16 %v2574
        %v2926 = vunpack.c.h.b16 %v2574
        %v2927 = vunpack.c.l.b16 %v2575
        %v2928 = vunpack.c.h.b16 %v2575
        %v2929 = vunpack.c.l.b16 %v2576
        %v2930 = vunpack.c.h.b16 %v2576
        %v2931 = vunpack.c.l.b16 %v2577
        %v2932 = vunpack.c.h.b16 %v2577
        %v2933 = vunpack.c.l.b16 %v2578
        %v2934 = vunpack.c.h.b16 %v2578
        %v2935 = vunpack.c.l.b16 %v2579
        %v2936 = vunpack.c.h.b16 %v2579
        %v2937 = vunpack.c.l.b16 %v2580
        %v2938 = vunpack.c.h.b16 %v2580
        %v2939 = vunpack.c.l.b16 %v2581
        %v2940 = vunpack.c.h.b16 %v2581
        %v2941 = vunpack.c.l.b16 %v2582
        %v2942 = vunpack.c.h.b16 %v2582
        %v2943 = vunpack.c.l.b16 %v2583
        %v2944 = vunpack.c.h.b16 %v2583
        %v2945 = vunpack.c.l.b16 %v2584
        %v2946 = vunpack.c.h.b16 %v2584
        %v2947 = vunpack.c.l.b16 %v2585
        %v2948 = vunpack.c.h.b16 %v2585
        %v2949 = vunpack.c.l.b16 %v2586
        %v2950 = vunpack.c.h.b16 %v2586
        %v2951 = vunpack.c.l.b16 %v2587
        %v2952 = vunpack.c.h.b16 %v2587
        %v2953 = vunpack.c.l.b16 %v2588
        %v2954 = vunpack.c.h.b16 %v2588
        %v2955 = vunpack.c.l.b16 %v2589
        %v2956 = vunpack.c.h.b16 %v2589
        %v2957 = vunpack.c.l.b16 %v2590
        %v2958 = vunpack.c.h.b16 %v2590
        %v2959 = vunpack.c.l.b16 %v2591
        %v2960 = vunpack.c.h.b16 %v2591
        %v2961 = vunpack.c.l.b16 %v2592
        %v2962 = vunpack.c.h.b16 %v2592
        %v2963 = vunpack.c.l.b16 %v2593
        %v2964 = vunpack.c.h.b16 %v2593
        %v2965 = vunpack.c.l.b16 %v2594
        %v2966 = vunpack.c.h.b16 %v2594
        %v2967 = vunpack.c.l.b16 %v2595
        %v2968 = vunpack.c.h.b16 %v2595
        %v2969 = vunpack.c.l.b16 %v2596
        %v2970 = vunpack.c.h.b16 %v2596
        %v2971 = vunpack.c.l.b16 %v2597
        %v2972 = vunpack.c.h.b16 %v2597
        %v2973 = vunpack.c.l.b16 %v2598
        %v2974 = vunpack.c.h.b16 %v2598
        %v2975 = vunpack.c.l.b16 %v2599
        %v2976 = vunpack.c.h.b16 %v2599
        %v2977 = vunpack.c.l.b16 %v2600
        %v2978 = vunpack.c.h.b16 %v2600
        %v2979 = vunpack.c.l.b16 %v2601
        %v2980 = vunpack.c.h.b16 %v2601
        %v2981 = vunpack.c.l.b16 %v2602
        %v2982 = vunpack.c.h.b16 %v2602
        %v2983 = vunpack.c.l.b16 %v2603
        %v2984 = vunpack.c.h.b16 %v2603
        %v2985 = vunpack.c.l.b16 %v2604
        %v2986 = vunpack.c.h.b16 %v2604
        %v2987 = vunpack.c.l.b16 %v2605
        %v2988 = vunpack.c.h.b16 %v2605
        %v2989 = vunpack.c.l.b16 %v2606
        %v2990 = vunpack.c.h.b16 %v2606
        %v2991 = vpack.c.b16 %v2739, %v2735
        %v2992 = vpack.c.b16 %v2740, %v2736
        %v2993 = vpack.c.b16 %v2741, %v2737
        %v2994 = vpack.c.b16 %v2742, %v2738
        %v2995 = vpack.c.b16 %v2747, %v2743
        %v2996 = vpack.c.b16 %v2748, %v2744
        %v2997 = vpack.c.b16 %v2749, %v2745
        %v2998 = vpack.c.b16 %v2750, %v2746
        %v2999 = vpack.c.b16 %v2755, %v2751
        %v3000 = vpack.c.b16 %v2756, %v2752
        %v3001 = vpack.c.b16 %v2757, %v2753
        %v3002 = vpack.c.b16 %v2758, %v2754
        %v3003 = vpack.c.b16 %v2763, %v2759
        %v3004 = vpack.c.b16 %v2764, %v2760
        %v3005 = vpack.c.b16 %v2765, %v2761
        %v3006 = vpack.c.b16 %v2766, %v2762
        %v3007 = vpack.c.b16 %v2771, %v2767
        %v3008 = vpack.c.b16 %v2772, %v2768
        %v3009 = vpack.c.b16 %v2773, %v2769
        %v3010 = vpack.c.b16 %v2774, %v2770
        %v3011 = vpack.c.b16 %v2779, %v2775
        %v3012 = vpack.c.b16 %v2780, %v2776
        %v3013 = vpack.c.b16 %v2781, %v2777
        %v3014 = vpack.c.b16 %v2782, %v2778
        %v3015 = vpack.c.b16 %v2787, %v2783
        %v3016 = vpack.c.b16 %v2788, %v2784
        %v3017 = vpack.c.b16 %v2789, %v2785
        %v3018 = vpack.c.b16 %v2790, %v2786
        %v3019 = vpack.c.b16 %v2795, %v2791
        %v3020 = vpack.c.b16 %v2796, %v2792
        %v3021 = vpack.c.b16 %v2797, %v2793
        %v3022 = vpack.c.b16 %v2798, %v2794
        %v3023 = vpack.c.b16 %v2803, %v2799
        %v3024 = vpack.c.b16 %v2804, %v2800
        %v3025 = vpack.c.b16 %v2805, %v2801
        %v3026 = vpack.c.b16 %v2806, %v2802
        %v3027 = vpack.c.b16 %v2811, %v2807
        %v3028 = vpack.c.b16 %v2812, %v2808
        %v3029 = vpack.c.b16 %v2813, %v2809
        %v3030 = vpack.c.b16 %v2814, %v2810
        %v3031 = vpack.c.b16 %v2819, %v2815
        %v3032 = vpack.c.b16 %v2820, %v2816
        %v3033 = vpack.c.b16 %v2821, %v2817
        %v3034 = vpack.c.b16 %v2822, %v2818
        %v3035 = vpack.c.b16 %v2827, %v2823
        %v3036 = vpack.c.b16 %v2828, %v2824
        %v3037 = vpack.c.b16 %v2829, %v2825
        %v3038 = vpack.c.b16 %v2830, %v2826
        %v3039 = vpack.c.b16 %v2835, %v2831
        %v3040 = vpack.c.b16 %v2836, %v2832
        %v3041 = vpack.c.b16 %v2837, %v2833
        %v3042 = vpack.c.b16 %v2838, %v2834
        %v3043 = vpack.c.b16 %v2843, %v2839
        %v3044 = vpack.c.b16 %v2844, %v2840
        %v3045 = vpack.c.b16 %v2845, %v2841
        %v3046 = vpack.c.b16 %v2846, %v2842
        %v3047 = vpack.c.b16 %v2851, %v2847
        %v3048 = vpack.c.b16 %v2852, %v2848
        %v3049 = vpack.c.b16 %v2853, %v2849
        %v3050 = vpack.c.b16 %v2854, %v2850
        %v3051 = vpack.c.b16 %v2859, %v2855
        %v3052 = vpack.c.b16 %v2860, %v2856
        %v3053 = vpack.c.b16 %v2861, %v2857
        %v3054 = vpack.c.b16 %v2862, %v2858
        %v3055 = vpack.c.b16 %v2867, %v2863
        %v3056 = vpack.c.b16 %v2868, %v2864
        %v3057 = vpack.c.b16 %v2869, %v2865
        %v3058 = vpack.c.b16 %v2870, %v2866
        %v3059 = vpack.c.b16 %v2875, %v2871
        %v3060 = vpack.c.b16 %v2876, %v2872
        %v3061 = vpack.c.b16 %v2877, %v2873
        %v3062 = vpack.c.b16 %v2878, %v2874
        %v3063 = vpack.c.b16 %v2883, %v2879
        %v3064 = vpack.c.b16 %v2884, %v2880
        %v3065 = vpack.c.b16 %v2885, %v2881
        %v3066 = vpack.c.b16 %v2886, %v2882
        %v3067 = vpack.c.b16 %v2891, %v2887
        %v3068 = vpack.c.b16 %v2892, %v2888
        %v3069 = vpack.c.b16 %v2893, %v2889
        %v3070 = vpack.c.b16 %v2894, %v2890
        %v3071 = vpack.c.b16 %v2899, %v2895
        %v3072 = vpack.c.b16 %v2900, %v2896
        %v3073 = vpack.c.b16 %v2901, %v2897
        %v3074 = vpack.c.b16 %v2902, %v2898
        %v3075 = vpack.c.b16 %v2907, %v2903
        %v3076 = vpack.c.b16 %v2908, %v2904
        %v3077 = vpack.c.b16 %v2909, %v2905
        %v3078 = vpack.c.b16 %v2910, %v2906
        %v3079 = vpack.c.b16 %v2915, %v2911
        %v3080 = vpack.c.b16 %v2916, %v2912
        %v3081 = vpack.c.b16 %v2917, %v2913
        %v3082 = vpack.c.b16 %v2918, %v2914
        %v3083 = vpack.c.b16 %v2923, %v2919
        %v3084 = vpack.c.b16 %v2924, %v2920
        %v3085 = vpack.c.b16 %v2925, %v2921
        %v3086 = vpack.c.b16 %v2926, %v2922
        %v3087 = vpack.c.b16 %v2931, %v2927
        %v3088 = vpack.c.b16 %v2932, %v2928
        %v3089 = vpack.c.b16 %v2933, %v2929
        %v3090 = vpack.c.b16 %v2934, %v2930
        %v3091 = vpack.c.b16 %v2939, %v2935
        %v3092 = vpack.c.b16 %v2940, %v2936
        %v3093 = vpack.c.b16 %v2941, %v2937
        %v3094 = vpack.c.b16 %v2942, %v2938
        %v3095 = vpack.c.b16 %v2947, %v2943
        %v3096 = vpack.c.b16 %v2948, %v2944
        %v3097 = vpack.c.b16 %v2949, %v2945
        %v3098 = vpack.c.b16 %v2950, %v2946
        %v3099 = vpack.c.b16 %v2955, %v2951
        %v3100 = vpack.c.b16 %v2956, %v2952
        %v3101 = vpack.c.b16 %v2957, %v2953
        %v3102 = vpack.c.b16 %v2958, %v2954
        %v3103 = vpack.c.b16 %v2963, %v2959
        %v3104 = vpack.c.b16 %v2964, %v2960
        %v3105 = vpack.c.b16 %v2965, %v2961
        %v3106 = vpack.c.b16 %v2966, %v2962
        %v3107 = vpack.c.b16 %v2971, %v2967
        %v3108 = vpack.c.b16 %v2972, %v2968
        %v3109 = vpack.c.b16 %v2973, %v2969
        %v3110 = vpack.c.b16 %v2974, %v2970
        %v3111 = vpack.c.b16 %v2979, %v2975
        %v3112 = vpack.c.b16 %v2980, %v2976
        %v3113 = vpack.c.b16 %v2981, %v2977
        %v3114 = vpack.c.b16 %v2982, %v2978
        %v3115 = vpack.c.b16 %v2987, %v2983
        %v3116 = vpack.c.b16 %v2988, %v2984
        %v3117 = vpack.c.b16 %v2989, %v2985
        %v3118 = vpack.c.b16 %v2990, %v2986
        %3247 = vmatprep.subr.bf16.mxu0 %v2430
        %3248 = vmatpush1.bf16.msra.mxu0 %v2429
        %3249 = vmatprep.subr.bf16.mxu0 %v2428
        %3250 = vmatpush1.bf16.msra.mxu0 %v2427
        %3251 = vmatprep.subr.bf16.mxu0 %v2426
        %3252 = vmatpush1.bf16.msra.mxu0 %v2425
        %3253 = vmatprep.subr.bf16.mxu0 %v2424
        %3254 = vmatpush1.bf16.msra.mxu0 %v2423
        %3255 = vmatprep.subr.bf16.mxu0 %v2422
        %3256 = vmatpush1.bf16.msra.mxu0 %v2421
        %3257 = vmatprep.subr.bf16.mxu0 %v2420
        %3258 = vmatpush1.bf16.msra.mxu0 %v2419
        %3259 = vmatprep.subr.bf16.mxu0 %v2418
        %3260 = vmatpush1.bf16.msra.mxu0 %v2417
        %3261 = vmatprep.subr.bf16.mxu0 %v2416
        %3262 = vmatpush1.bf16.msra.mxu0 %v2415
        %3263 = vmatprep.subr.bf16.mxu0 %v2446
        %3264 = vmatpush2.bf16.msra.mxu0 %v2445
        %3265 = vmatprep.subr.bf16.mxu0 %v2444
        %3266 = vmatpush2.bf16.msra.mxu0 %v2443
        %3267 = vmatprep.subr.bf16.mxu0 %v2442
        %3268 = vmatpush2.bf16.msra.mxu0 %v2441
        %3269 = vmatprep.subr.bf16.mxu0 %v2440
        %3270 = vmatpush2.bf16.msra.mxu0 %v2439
        %3271 = vmatprep.subr.bf16.mxu0 %v2438
        %3272 = vmatpush2.bf16.msra.mxu0 %v2437
        %3273 = vmatprep.subr.bf16.mxu0 %v2436
        %3274 = vmatpush2.bf16.msra.mxu0 %v2435
        %3275 = vmatprep.subr.bf16.mxu0 %v2434
        %3276 = vmatpush2.bf16.msra.mxu0 %v2433
        %3277 = vmatprep.subr.bf16.mxu0 %v2432
        %3278 = vmatpush2.bf16.msra.mxu0 %v2431
        %3279 = vmatprep.mubr.bf16.mxu0 %v2992
        %3280 = vmatmul.mubr.bf16.gmra.mxu0 %v2991
        %v3281 = vpop.f32.mrf.mxu0
        %v3282 = vadd.f32 0.0, %v3281
        %v3283 = vpop.f32.mrf.mxu0
        %v3284 = vadd.f32 0.0, %v3283
        %v3285 = vpop.f32.mrf.mxu0
        %v3286 = vadd.f32 0.0, %v3285
        %v3287 = vpop.f32.mrf.mxu0
        %v3288 = vadd.f32 0.0, %v3287
        %3289 = vmatprep.mubr.bf16.mxu0 %v2996
        %3290 = vmatmul.mubr.bf16.gmra.mxu0 %v2995
        %v3291 = vpop.f32.mrf.mxu0
        %v3292 = vadd.f32 0.0, %v3291
        %v3293 = vpop.f32.mrf.mxu0
        %v3294 = vadd.f32 0.0, %v3293
        %v3295 = vpop.f32.mrf.mxu0
        %v3296 = vadd.f32 0.0, %v3295
        %v3297 = vpop.f32.mrf.mxu0
        %v3298 = vadd.f32 0.0, %v3297
        %3299 = vmatprep.mubr.bf16.mxu0 %v3000
        %3300 = vmatmul.mubr.bf16.gmra.mxu0 %v2999
        %v3301 = vpop.f32.mrf.mxu0
        %v3302 = vadd.f32 0.0, %v3301
        %v3303 = vpop.f32.mrf.mxu0
        %v3304 = vadd.f32 0.0, %v3303
        %v3305 = vpop.f32.mrf.mxu0
        %v3306 = vadd.f32 0.0, %v3305
        %v3307 = vpop.f32.mrf.mxu0
        %v3308 = vadd.f32 0.0, %v3307
        %3309 = vmatprep.mubr.bf16.mxu0 %v3004
        %3310 = vmatmul.mubr.bf16.gmra.mxu0 %v3003
        %v3311 = vpop.f32.mrf.mxu0
        %v3312 = vadd.f32 0.0, %v3311
        %v3313 = vpop.f32.mrf.mxu0
        %v3314 = vadd.f32 0.0, %v3313
        %v3315 = vpop.f32.mrf.mxu0
        %v3316 = vadd.f32 0.0, %v3315
        %v3317 = vpop.f32.mrf.mxu0
        %v3318 = vadd.f32 0.0, %v3317
        %3319 = vmatprep.mubr.bf16.mxu0 %v3008
        %3320 = vmatmul.mubr.bf16.gmra.mxu0 %v3007
        %v3321 = vpop.f32.mrf.mxu0
        %v3322 = vadd.f32 0.0, %v3321
        %v3323 = vpop.f32.mrf.mxu0
        %v3324 = vadd.f32 0.0, %v3323
        %v3325 = vpop.f32.mrf.mxu0
        %v3326 = vadd.f32 0.0, %v3325
        %v3327 = vpop.f32.mrf.mxu0
        %v3328 = vadd.f32 0.0, %v3327
        %3329 = vmatprep.mubr.bf16.mxu0 %v3012
        %3330 = vmatmul.mubr.bf16.gmra.mxu0 %v3011
        %v3331 = vpop.f32.mrf.mxu0
        %v3332 = vadd.f32 0.0, %v3331
        %v3333 = vpop.f32.mrf.mxu0
        %v3334 = vadd.f32 0.0, %v3333
        %v3335 = vpop.f32.mrf.mxu0
        %v3336 = vadd.f32 0.0, %v3335
        %v3337 = vpop.f32.mrf.mxu0
        %v3338 = vadd.f32 0.0, %v3337
        %3339 = vmatprep.mubr.bf16.mxu0 %v3016
        %3340 = vmatmul.mubr.bf16.gmra.mxu0 %v3015
        %v3341 = vpop.f32.mrf.mxu0
        %v3342 = vadd.f32 0.0, %v3341
        %v3343 = vpop.f32.mrf.mxu0
        %v3344 = vadd.f32 0.0, %v3343
        %v3345 = vpop.f32.mrf.mxu0
        %v3346 = vadd.f32 0.0, %v3345
        %v3347 = vpop.f32.mrf.mxu0
        %v3348 = vadd.f32 0.0, %v3347
        %3349 = vmatprep.mubr.bf16.mxu0 %v3020
        %3350 = vmatmul.mubr.bf16.gmra.mxu0 %v3019
        %v3351 = vpop.f32.mrf.mxu0
        %v3352 = vadd.f32 0.0, %v3351
        %v3353 = vpop.f32.mrf.mxu0
        %v3354 = vadd.f32 0.0, %v3353
        %v3355 = vpop.f32.mrf.mxu0
        %v3356 = vadd.f32 0.0, %v3355
        %v3357 = vpop.f32.mrf.mxu0
        %v3358 = vadd.f32 0.0, %v3357
        %3359 = vmatprep.mubr.bf16.mxu0 %v3024
        %3360 = vmatmul.mubr.bf16.gmra.mxu0 %v3023
        %v3361 = vpop.f32.mrf.mxu0
        %v3362 = vadd.f32 0.0, %v3361
        %v3363 = vpop.f32.mrf.mxu0
        %v3364 = vadd.f32 0.0, %v3363
        %v3365 = vpop.f32.mrf.mxu0
        %v3366 = vadd.f32 0.0, %v3365
        %v3367 = vpop.f32.mrf.mxu0
        %v3368 = vadd.f32 0.0, %v3367
        %3369 = vmatprep.mubr.bf16.mxu0 %v3028
        %3370 = vmatmul.mubr.bf16.gmra.mxu0 %v3027
        %v3371 = vpop.f32.mrf.mxu0
        %v3372 = vadd.f32 0.0, %v3371
        %v3373 = vpop.f32.mrf.mxu0
        %v3374 = vadd.f32 0.0, %v3373
        %v3375 = vpop.f32.mrf.mxu0
        %v3376 = vadd.f32 0.0, %v3375
        %v3377 = vpop.f32.mrf.mxu0
        %v3378 = vadd.f32 0.0, %v3377
        %3379 = vmatprep.mubr.bf16.mxu0 %v3032
        %3380 = vmatmul.mubr.bf16.gmra.mxu0 %v3031
        %v3381 = vpop.f32.mrf.mxu0
        %v3382 = vadd.f32 0.0, %v3381
        %v3383 = vpop.f32.mrf.mxu0
        %v3384 = vadd.f32 0.0, %v3383
        %v3385 = vpop.f32.mrf.mxu0
        %v3386 = vadd.f32 0.0, %v3385
        %v3387 = vpop.f32.mrf.mxu0
        %v3388 = vadd.f32 0.0, %v3387
        %3389 = vmatprep.mubr.bf16.mxu0 %v3036
        %3390 = vmatmul.mubr.bf16.gmra.mxu0 %v3035
        %v3391 = vpop.f32.mrf.mxu0
        %v3392 = vadd.f32 0.0, %v3391
        %v3393 = vpop.f32.mrf.mxu0
        %v3394 = vadd.f32 0.0, %v3393
        %v3395 = vpop.f32.mrf.mxu0
        %v3396 = vadd.f32 0.0, %v3395
        %v3397 = vpop.f32.mrf.mxu0
        %v3398 = vadd.f32 0.0, %v3397
        %3399 = vmatprep.mubr.bf16.mxu0 %v3040
        %3400 = vmatmul.mubr.bf16.gmra.mxu0 %v3039
        %v3401 = vpop.f32.mrf.mxu0
        %v3402 = vadd.f32 0.0, %v3401
        %v3403 = vpop.f32.mrf.mxu0
        %v3404 = vadd.f32 0.0, %v3403
        %v3405 = vpop.f32.mrf.mxu0
        %v3406 = vadd.f32 0.0, %v3405
        %v3407 = vpop.f32.mrf.mxu0
        %v3408 = vadd.f32 0.0, %v3407
        %3409 = vmatprep.mubr.bf16.mxu0 %v3044
        %3410 = vmatmul.mubr.bf16.gmra.mxu0 %v3043
        %v3411 = vpop.f32.mrf.mxu0
        %v3412 = vadd.f32 0.0, %v3411
        %v3413 = vpop.f32.mrf.mxu0
        %v3414 = vadd.f32 0.0, %v3413
        %v3415 = vpop.f32.mrf.mxu0
        %v3416 = vadd.f32 0.0, %v3415
        %v3417 = vpop.f32.mrf.mxu0
        %v3418 = vadd.f32 0.0, %v3417
        %3419 = vmatprep.mubr.bf16.mxu0 %v3048
        %3420 = vmatmul.mubr.bf16.gmra.mxu0 %v3047
        %v3421 = vpop.f32.mrf.mxu0
        %v3422 = vadd.f32 0.0, %v3421
        %v3423 = vpop.f32.mrf.mxu0
        %v3424 = vadd.f32 0.0, %v3423
        %v3425 = vpop.f32.mrf.mxu0
        %v3426 = vadd.f32 0.0, %v3425
        %v3427 = vpop.f32.mrf.mxu0
        %v3428 = vadd.f32 0.0, %v3427
        %3429 = vmatprep.mubr.bf16.mxu0 %v3052
        %3430 = vmatmul.mubr.bf16.gmra.mxu0 %v3051
        %v3431 = vpop.f32.mrf.mxu0
        %v3432 = vadd.f32 0.0, %v3431
        %v3433 = vpop.f32.mrf.mxu0
        %v3434 = vadd.f32 0.0, %v3433
        %v3435 = vpop.f32.mrf.mxu0
        %v3436 = vadd.f32 0.0, %v3435
        %v3437 = vpop.f32.mrf.mxu0
        %v3438 = vadd.f32 0.0, %v3437
        %3439 = vmatprep.mubr.bf16.mxu0 %v3056
        %3440 = vmatmul.mubr.bf16.gmra.mxu0 %v3055
        %v3441 = vpop.f32.mrf.mxu0
        %v3442 = vadd.f32 0.0, %v3441
        %v3443 = vpop.f32.mrf.mxu0
        %v3444 = vadd.f32 0.0, %v3443
        %v3445 = vpop.f32.mrf.mxu0
        %v3446 = vadd.f32 0.0, %v3445
        %v3447 = vpop.f32.mrf.mxu0
        %v3448 = vadd.f32 0.0, %v3447
        %3449 = vmatprep.mubr.bf16.mxu0 %v3060
        %3450 = vmatmul.mubr.bf16.gmra.mxu0 %v3059
        %v3451 = vpop.f32.mrf.mxu0
        %v3452 = vadd.f32 0.0, %v3451
        %v3453 = vpop.f32.mrf.mxu0
        %v3454 = vadd.f32 0.0, %v3453
        %v3455 = vpop.f32.mrf.mxu0
        %v3456 = vadd.f32 0.0, %v3455
        %v3457 = vpop.f32.mrf.mxu0
        %v3458 = vadd.f32 0.0, %v3457
        %3459 = vmatprep.mubr.bf16.mxu0 %v3064
        %3460 = vmatmul.mubr.bf16.gmra.mxu0 %v3063
        %v3461 = vpop.f32.mrf.mxu0
        %v3462 = vadd.f32 0.0, %v3461
        %v3463 = vpop.f32.mrf.mxu0
        %v3464 = vadd.f32 0.0, %v3463
        %v3465 = vpop.f32.mrf.mxu0
        %v3466 = vadd.f32 0.0, %v3465
        %v3467 = vpop.f32.mrf.mxu0
        %v3468 = vadd.f32 0.0, %v3467
        %3469 = vmatprep.mubr.bf16.mxu0 %v3068
        %3470 = vmatmul.mubr.bf16.gmra.mxu0 %v3067
        %v3471 = vpop.f32.mrf.mxu0
        %v3472 = vadd.f32 0.0, %v3471
        %v3473 = vpop.f32.mrf.mxu0
        %v3474 = vadd.f32 0.0, %v3473
        %v3475 = vpop.f32.mrf.mxu0
        %v3476 = vadd.f32 0.0, %v3475
        %v3477 = vpop.f32.mrf.mxu0
        %v3478 = vadd.f32 0.0, %v3477
        %3479 = vmatprep.mubr.bf16.mxu0 %v3072
        %3480 = vmatmul.mubr.bf16.gmra.mxu0 %v3071
        %v3481 = vpop.f32.mrf.mxu0
        %v3482 = vadd.f32 0.0, %v3481
        %v3483 = vpop.f32.mrf.mxu0
        %v3484 = vadd.f32 0.0, %v3483
        %v3485 = vpop.f32.mrf.mxu0
        %v3486 = vadd.f32 0.0, %v3485
        %v3487 = vpop.f32.mrf.mxu0
        %v3488 = vadd.f32 0.0, %v3487
        %3489 = vmatprep.mubr.bf16.mxu0 %v3076
        %3490 = vmatmul.mubr.bf16.gmra.mxu0 %v3075
        %v3491 = vpop.f32.mrf.mxu0
        %v3492 = vadd.f32 0.0, %v3491
        %v3493 = vpop.f32.mrf.mxu0
        %v3494 = vadd.f32 0.0, %v3493
        %v3495 = vpop.f32.mrf.mxu0
        %v3496 = vadd.f32 0.0, %v3495
        %v3497 = vpop.f32.mrf.mxu0
        %v3498 = vadd.f32 0.0, %v3497
        %3499 = vmatprep.mubr.bf16.mxu0 %v3080
        %3500 = vmatmul.mubr.bf16.gmra.mxu0 %v3079
        %v3501 = vpop.f32.mrf.mxu0
        %v3502 = vadd.f32 0.0, %v3501
        %v3503 = vpop.f32.mrf.mxu0
        %v3504 = vadd.f32 0.0, %v3503
        %v3505 = vpop.f32.mrf.mxu0
        %v3506 = vadd.f32 0.0, %v3505
        %v3507 = vpop.f32.mrf.mxu0
        %v3508 = vadd.f32 0.0, %v3507
        %3509 = vmatprep.mubr.bf16.mxu0 %v3084
        %3510 = vmatmul.mubr.bf16.gmra.mxu0 %v3083
        %v3511 = vpop.f32.mrf.mxu0
        %v3512 = vadd.f32 0.0, %v3511
        %v3513 = vpop.f32.mrf.mxu0
        %v3514 = vadd.f32 0.0, %v3513
        %v3515 = vpop.f32.mrf.mxu0
        %v3516 = vadd.f32 0.0, %v3515
        %v3517 = vpop.f32.mrf.mxu0
        %v3518 = vadd.f32 0.0, %v3517
        %3519 = vmatprep.mubr.bf16.mxu0 %v3088
        %3520 = vmatmul.mubr.bf16.gmra.mxu0 %v3087
        %v3521 = vpop.f32.mrf.mxu0
        %v3522 = vadd.f32 0.0, %v3521
        %v3523 = vpop.f32.mrf.mxu0
        %v3524 = vadd.f32 0.0, %v3523
        %v3525 = vpop.f32.mrf.mxu0
        %v3526 = vadd.f32 0.0, %v3525
        %v3527 = vpop.f32.mrf.mxu0
        %v3528 = vadd.f32 0.0, %v3527
        %3529 = vmatprep.mubr.bf16.mxu0 %v3092
        %3530 = vmatmul.mubr.bf16.gmra.mxu0 %v3091
        %v3531 = vpop.f32.mrf.mxu0
        %v3532 = vadd.f32 0.0, %v3531
        %v3533 = vpop.f32.mrf.mxu0
        %v3534 = vadd.f32 0.0, %v3533
        %v3535 = vpop.f32.mrf.mxu0
        %v3536 = vadd.f32 0.0, %v3535
        %v3537 = vpop.f32.mrf.mxu0
        %v3538 = vadd.f32 0.0, %v3537
        %3539 = vmatprep.mubr.bf16.mxu0 %v3096
        %3540 = vmatmul.mubr.bf16.gmra.mxu0 %v3095
        %v3541 = vpop.f32.mrf.mxu0
        %v3542 = vadd.f32 0.0, %v3541
        %v3543 = vpop.f32.mrf.mxu0
        %v3544 = vadd.f32 0.0, %v3543
        %v3545 = vpop.f32.mrf.mxu0
        %v3546 = vadd.f32 0.0, %v3545
        %v3547 = vpop.f32.mrf.mxu0
        %v3548 = vadd.f32 0.0, %v3547
        %3549 = vmatprep.mubr.bf16.mxu0 %v3100
        %3550 = vmatmul.mubr.bf16.gmra.mxu0 %v3099
        %v3551 = vpop.f32.mrf.mxu0
        %v3552 = vadd.f32 0.0, %v3551
        %v3553 = vpop.f32.mrf.mxu0
        %v3554 = vadd.f32 0.0, %v3553
        %v3555 = vpop.f32.mrf.mxu0
        %v3556 = vadd.f32 0.0, %v3555
        %v3557 = vpop.f32.mrf.mxu0
        %v3558 = vadd.f32 0.0, %v3557
        %3559 = vmatprep.mubr.bf16.mxu0 %v3104
        %3560 = vmatmul.mubr.bf16.gmra.mxu0 %v3103
        %v3561 = vpop.f32.mrf.mxu0
        %v3562 = vadd.f32 0.0, %v3561
        %v3563 = vpop.f32.mrf.mxu0
        %v3564 = vadd.f32 0.0, %v3563
        %v3565 = vpop.f32.mrf.mxu0
        %v3566 = vadd.f32 0.0, %v3565
        %v3567 = vpop.f32.mrf.mxu0
        %v3568 = vadd.f32 0.0, %v3567
        %3569 = vmatprep.mubr.bf16.mxu0 %v3108
        %3570 = vmatmul.mubr.bf16.gmra.mxu0 %v3107
        %v3571 = vpop.f32.mrf.mxu0
        %v3572 = vadd.f32 0.0, %v3571
        %v3573 = vpop.f32.mrf.mxu0
        %v3574 = vadd.f32 0.0, %v3573
        %v3575 = vpop.f32.mrf.mxu0
        %v3576 = vadd.f32 0.0, %v3575
        %v3577 = vpop.f32.mrf.mxu0
        %v3578 = vadd.f32 0.0, %v3577
        %3579 = vmatprep.mubr.bf16.mxu0 %v3112
        %3580 = vmatmul.mubr.bf16.gmra.mxu0 %v3111
        %v3581 = vpop.f32.mrf.mxu0
        %v3582 = vadd.f32 0.0, %v3581
        %v3583 = vpop.f32.mrf.mxu0
        %v3584 = vadd.f32 0.0, %v3583
        %v3585 = vpop.f32.mrf.mxu0
        %v3586 = vadd.f32 0.0, %v3585
        %v3587 = vpop.f32.mrf.mxu0
        %v3588 = vadd.f32 0.0, %v3587
        %3589 = vmatprep.mubr.bf16.mxu0 %v3116
        %3590 = vmatmul.mubr.bf16.gmra.mxu0 %v3115
        %v3591 = vpop.f32.mrf.mxu0
        %v3592 = vadd.f32 0.0, %v3591
        %v3593 = vpop.f32.mrf.mxu0
        %v3594 = vadd.f32 0.0, %v3593
        %v3595 = vpop.f32.mrf.mxu0
        %v3596 = vadd.f32 0.0, %v3595
        %v3597 = vpop.f32.mrf.mxu0
        %v3598 = vadd.f32 0.0, %v3597
        %3599 = vdwg.mxu0
        %3600 = vmatprep.subr.bf16.mxu0 %v2462
        %3601 = vmatpush1.bf16.msra.mxu0 %v2461
        %3602 = vmatprep.subr.bf16.mxu0 %v2460
        %3603 = vmatpush1.bf16.msra.mxu0 %v2459
        %3604 = vmatprep.subr.bf16.mxu0 %v2458
        %3605 = vmatpush1.bf16.msra.mxu0 %v2457
        %3606 = vmatprep.subr.bf16.mxu0 %v2456
        %3607 = vmatpush1.bf16.msra.mxu0 %v2455
        %3608 = vmatprep.subr.bf16.mxu0 %v2454
        %3609 = vmatpush1.bf16.msra.mxu0 %v2453
        %3610 = vmatprep.subr.bf16.mxu0 %v2452
        %3611 = vmatpush1.bf16.msra.mxu0 %v2451
        %3612 = vmatprep.subr.bf16.mxu0 %v2450
        %3613 = vmatpush1.bf16.msra.mxu0 %v2449
        %3614 = vmatprep.subr.bf16.mxu0 %v2448
        %3615 = vmatpush1.bf16.msra.mxu0 %v2447
        %3616 = vmatprep.subr.bf16.mxu0 %v2478
        %3617 = vmatpush2.bf16.msra.mxu0 %v2477
        %3618 = vmatprep.subr.bf16.mxu0 %v2476
        %3619 = vmatpush2.bf16.msra.mxu0 %v2475
        %3620 = vmatprep.subr.bf16.mxu0 %v2474
        %3621 = vmatpush2.bf16.msra.mxu0 %v2473
        %3622 = vmatprep.subr.bf16.mxu0 %v2472
        %3623 = vmatpush2.bf16.msra.mxu0 %v2471
        %3624 = vmatprep.subr.bf16.mxu0 %v2470
        %3625 = vmatpush2.bf16.msra.mxu0 %v2469
        %3626 = vmatprep.subr.bf16.mxu0 %v2468
        %3627 = vmatpush2.bf16.msra.mxu0 %v2467
        %3628 = vmatprep.subr.bf16.mxu0 %v2466
        %3629 = vmatpush2.bf16.msra.mxu0 %v2465
        %3630 = vmatprep.subr.bf16.mxu0 %v2464
        %3631 = vmatpush2.bf16.msra.mxu0 %v2463
        %3632 = vmatprep.mubr.bf16.mxu0 %v2994
        %3633 = vmatmul.mubr.bf16.gmra.mxu0 %v2993
        %v3634 = vpop.f32.mrf.mxu0
        %v3635 = vadd.f32 %v3282, %v3634
        %v3636 = vpop.f32.mrf.mxu0
        %v3637 = vadd.f32 %v3284, %v3636
        %v3638 = vpop.f32.mrf.mxu0
        %v3639 = vadd.f32 %v3286, %v3638
        %v3640 = vpop.f32.mrf.mxu0
        %v3641 = vadd.f32 %v3288, %v3640
        %3642 = vmatprep.mubr.bf16.mxu0 %v2998
        %3643 = vmatmul.mubr.bf16.gmra.mxu0 %v2997
        %v3644 = vpop.f32.mrf.mxu0
        %v3645 = vadd.f32 %v3292, %v3644
        %v3646 = vpop.f32.mrf.mxu0
        %v3647 = vadd.f32 %v3294, %v3646
        %v3648 = vpop.f32.mrf.mxu0
        %v3649 = vadd.f32 %v3296, %v3648
        %v3650 = vpop.f32.mrf.mxu0
        %v3651 = vadd.f32 %v3298, %v3650
        %3652 = vmatprep.mubr.bf16.mxu0 %v3002
        %3653 = vmatmul.mubr.bf16.gmra.mxu0 %v3001
        %v3654 = vpop.f32.mrf.mxu0
        %v3655 = vadd.f32 %v3302, %v3654
        %v3656 = vpop.f32.mrf.mxu0
        %v3657 = vadd.f32 %v3304, %v3656
        %v3658 = vpop.f32.mrf.mxu0
        %v3659 = vadd.f32 %v3306, %v3658
        %v3660 = vpop.f32.mrf.mxu0
        %v3661 = vadd.f32 %v3308, %v3660
        %3662 = vmatprep.mubr.bf16.mxu0 %v3006
        %3663 = vmatmul.mubr.bf16.gmra.mxu0 %v3005
        %v3664 = vpop.f32.mrf.mxu0
        %v3665 = vadd.f32 %v3312, %v3664
        %v3666 = vpop.f32.mrf.mxu0
        %v3667 = vadd.f32 %v3314, %v3666
        %v3668 = vpop.f32.mrf.mxu0
        %v3669 = vadd.f32 %v3316, %v3668
        %v3670 = vpop.f32.mrf.mxu0
        %v3671 = vadd.f32 %v3318, %v3670
        %3672 = vmatprep.mubr.bf16.mxu0 %v3010
        %3673 = vmatmul.mubr.bf16.gmra.mxu0 %v3009
        %v3674 = vpop.f32.mrf.mxu0
        %v3675 = vadd.f32 %v3322, %v3674
        %v3676 = vpop.f32.mrf.mxu0
        %v3677 = vadd.f32 %v3324, %v3676
        %v3678 = vpop.f32.mrf.mxu0
        %v3679 = vadd.f32 %v3326, %v3678
        %v3680 = vpop.f32.mrf.mxu0
        %v3681 = vadd.f32 %v3328, %v3680
        %3682 = vmatprep.mubr.bf16.mxu0 %v3014
        %3683 = vmatmul.mubr.bf16.gmra.mxu0 %v3013
        %v3684 = vpop.f32.mrf.mxu0
        %v3685 = vadd.f32 %v3332, %v3684
        %v3686 = vpop.f32.mrf.mxu0
        %v3687 = vadd.f32 %v3334, %v3686
        %v3688 = vpop.f32.mrf.mxu0
        %v3689 = vadd.f32 %v3336, %v3688
        %v3690 = vpop.f32.mrf.mxu0
        %v3691 = vadd.f32 %v3338, %v3690
        %3692 = vmatprep.mubr.bf16.mxu0 %v3018
        %3693 = vmatmul.mubr.bf16.gmra.mxu0 %v3017
        %v3694 = vpop.f32.mrf.mxu0
        %v3695 = vadd.f32 %v3342, %v3694
        %v3696 = vpop.f32.mrf.mxu0
        %v3697 = vadd.f32 %v3344, %v3696
        %v3698 = vpop.f32.mrf.mxu0
        %v3699 = vadd.f32 %v3346, %v3698
        %v3700 = vpop.f32.mrf.mxu0
        %v3701 = vadd.f32 %v3348, %v3700
        %3702 = vmatprep.mubr.bf16.mxu0 %v3022
        %3703 = vmatmul.mubr.bf16.gmra.mxu0 %v3021
        %v3704 = vpop.f32.mrf.mxu0
        %v3705 = vadd.f32 %v3352, %v3704
        %v3706 = vpop.f32.mrf.mxu0
        %v3707 = vadd.f32 %v3354, %v3706
        %v3708 = vpop.f32.mrf.mxu0
        %v3709 = vadd.f32 %v3356, %v3708
        %v3710 = vpop.f32.mrf.mxu0
        %v3711 = vadd.f32 %v3358, %v3710
        %3712 = vmatprep.mubr.bf16.mxu0 %v3026
        %3713 = vmatmul.mubr.bf16.gmra.mxu0 %v3025
        %v3714 = vpop.f32.mrf.mxu0
        %v3715 = vadd.f32 %v3362, %v3714
        %v3716 = vpop.f32.mrf.mxu0
        %v3717 = vadd.f32 %v3364, %v3716
        %v3718 = vpop.f32.mrf.mxu0
        %v3719 = vadd.f32 %v3366, %v3718
        %v3720 = vpop.f32.mrf.mxu0
        %v3721 = vadd.f32 %v3368, %v3720
        %3722 = vmatprep.mubr.bf16.mxu0 %v3030
        %3723 = vmatmul.mubr.bf16.gmra.mxu0 %v3029
        %v3724 = vpop.f32.mrf.mxu0
        %v3725 = vadd.f32 %v3372, %v3724
        %v3726 = vpop.f32.mrf.mxu0
        %v3727 = vadd.f32 %v3374, %v3726
        %v3728 = vpop.f32.mrf.mxu0
        %v3729 = vadd.f32 %v3376, %v3728
        %v3730 = vpop.f32.mrf.mxu0
        %v3731 = vadd.f32 %v3378, %v3730
        %3732 = vmatprep.mubr.bf16.mxu0 %v3034
        %3733 = vmatmul.mubr.bf16.gmra.mxu0 %v3033
        %v3734 = vpop.f32.mrf.mxu0
        %v3735 = vadd.f32 %v3382, %v3734
        %v3736 = vpop.f32.mrf.mxu0
        %v3737 = vadd.f32 %v3384, %v3736
        %v3738 = vpop.f32.mrf.mxu0
        %v3739 = vadd.f32 %v3386, %v3738
        %v3740 = vpop.f32.mrf.mxu0
        %v3741 = vadd.f32 %v3388, %v3740
        %3742 = vmatprep.mubr.bf16.mxu0 %v3038
        %3743 = vmatmul.mubr.bf16.gmra.mxu0 %v3037
        %v3744 = vpop.f32.mrf.mxu0
        %v3745 = vadd.f32 %v3392, %v3744
        %v3746 = vpop.f32.mrf.mxu0
        %v3747 = vadd.f32 %v3394, %v3746
        %v3748 = vpop.f32.mrf.mxu0
        %v3749 = vadd.f32 %v3396, %v3748
        %v3750 = vpop.f32.mrf.mxu0
        %v3751 = vadd.f32 %v3398, %v3750
        %3752 = vmatprep.mubr.bf16.mxu0 %v3042
        %3753 = vmatmul.mubr.bf16.gmra.mxu0 %v3041
        %v3754 = vpop.f32.mrf.mxu0
        %v3755 = vadd.f32 %v3402, %v3754
        %v3756 = vpop.f32.mrf.mxu0
        %v3757 = vadd.f32 %v3404, %v3756
        %v3758 = vpop.f32.mrf.mxu0
        %v3759 = vadd.f32 %v3406, %v3758
        %v3760 = vpop.f32.mrf.mxu0
        %v3761 = vadd.f32 %v3408, %v3760
        %3762 = vmatprep.mubr.bf16.mxu0 %v3046
        %3763 = vmatmul.mubr.bf16.gmra.mxu0 %v3045
        %v3764 = vpop.f32.mrf.mxu0
        %v3765 = vadd.f32 %v3412, %v3764
        %v3766 = vpop.f32.mrf.mxu0
        %v3767 = vadd.f32 %v3414, %v3766
        %v3768 = vpop.f32.mrf.mxu0
        %v3769 = vadd.f32 %v3416, %v3768
        %v3770 = vpop.f32.mrf.mxu0
        %v3771 = vadd.f32 %v3418, %v3770
        %3772 = vmatprep.mubr.bf16.mxu0 %v3050
        %3773 = vmatmul.mubr.bf16.gmra.mxu0 %v3049
        %v3774 = vpop.f32.mrf.mxu0
        %v3775 = vadd.f32 %v3422, %v3774
        %v3776 = vpop.f32.mrf.mxu0
        %v3777 = vadd.f32 %v3424, %v3776
        %v3778 = vpop.f32.mrf.mxu0
        %v3779 = vadd.f32 %v3426, %v3778
        %v3780 = vpop.f32.mrf.mxu0
        %v3781 = vadd.f32 %v3428, %v3780
        %3782 = vmatprep.mubr.bf16.mxu0 %v3054
        %3783 = vmatmul.mubr.bf16.gmra.mxu0 %v3053
        %v3784 = vpop.f32.mrf.mxu0
        %v3785 = vadd.f32 %v3432, %v3784
        %v3786 = vpop.f32.mrf.mxu0
        %v3787 = vadd.f32 %v3434, %v3786
        %v3788 = vpop.f32.mrf.mxu0
        %v3789 = vadd.f32 %v3436, %v3788
        %v3790 = vpop.f32.mrf.mxu0
        %v3791 = vadd.f32 %v3438, %v3790
        %3792 = vmatprep.mubr.bf16.mxu0 %v3058
        %3793 = vmatmul.mubr.bf16.gmra.mxu0 %v3057
        %v3794 = vpop.f32.mrf.mxu0
        %v3795 = vadd.f32 %v3442, %v3794
        %v3796 = vpop.f32.mrf.mxu0
        %v3797 = vadd.f32 %v3444, %v3796
        %v3798 = vpop.f32.mrf.mxu0
        %v3799 = vadd.f32 %v3446, %v3798
        %v3800 = vpop.f32.mrf.mxu0
        %v3801 = vadd.f32 %v3448, %v3800
        %3802 = vmatprep.mubr.bf16.mxu0 %v3062
        %3803 = vmatmul.mubr.bf16.gmra.mxu0 %v3061
        %v3804 = vpop.f32.mrf.mxu0
        %v3805 = vadd.f32 %v3452, %v3804
        %v3806 = vpop.f32.mrf.mxu0
        %v3807 = vadd.f32 %v3454, %v3806
        %v3808 = vpop.f32.mrf.mxu0
        %v3809 = vadd.f32 %v3456, %v3808
        %v3810 = vpop.f32.mrf.mxu0
        %v3811 = vadd.f32 %v3458, %v3810
        %3812 = vmatprep.mubr.bf16.mxu0 %v3066
        %3813 = vmatmul.mubr.bf16.gmra.mxu0 %v3065
        %v3814 = vpop.f32.mrf.mxu0
        %v3815 = vadd.f32 %v3462, %v3814
        %v3816 = vpop.f32.mrf.mxu0
        %v3817 = vadd.f32 %v3464, %v3816
        %v3818 = vpop.f32.mrf.mxu0
        %v3819 = vadd.f32 %v3466, %v3818
        %v3820 = vpop.f32.mrf.mxu0
        %v3821 = vadd.f32 %v3468, %v3820
        %3822 = vmatprep.mubr.bf16.mxu0 %v3070
        %3823 = vmatmul.mubr.bf16.gmra.mxu0 %v3069
        %v3824 = vpop.f32.mrf.mxu0
        %v3825 = vadd.f32 %v3472, %v3824
        %v3826 = vpop.f32.mrf.mxu0
        %v3827 = vadd.f32 %v3474, %v3826
        %v3828 = vpop.f32.mrf.mxu0
        %v3829 = vadd.f32 %v3476, %v3828
        %v3830 = vpop.f32.mrf.mxu0
        %v3831 = vadd.f32 %v3478, %v3830
        %3832 = vmatprep.mubr.bf16.mxu0 %v3074
        %3833 = vmatmul.mubr.bf16.gmra.mxu0 %v3073
        %v3834 = vpop.f32.mrf.mxu0
        %v3835 = vadd.f32 %v3482, %v3834
        %v3836 = vpop.f32.mrf.mxu0
        %v3837 = vadd.f32 %v3484, %v3836
        %v3838 = vpop.f32.mrf.mxu0
        %v3839 = vadd.f32 %v3486, %v3838
        %v3840 = vpop.f32.mrf.mxu0
        %v3841 = vadd.f32 %v3488, %v3840
        %3842 = vmatprep.mubr.bf16.mxu0 %v3078
        %3843 = vmatmul.mubr.bf16.gmra.mxu0 %v3077
        %v3844 = vpop.f32.mrf.mxu0
        %v3845 = vadd.f32 %v3492, %v3844
        %v3846 = vpop.f32.mrf.mxu0
        %v3847 = vadd.f32 %v3494, %v3846
        %v3848 = vpop.f32.mrf.mxu0
        %v3849 = vadd.f32 %v3496, %v3848
        %v3850 = vpop.f32.mrf.mxu0
        %v3851 = vadd.f32 %v3498, %v3850
        %3852 = vmatprep.mubr.bf16.mxu0 %v3082
        %3853 = vmatmul.mubr.bf16.gmra.mxu0 %v3081
        %v3854 = vpop.f32.mrf.mxu0
        %v3855 = vadd.f32 %v3502, %v3854
        %v3856 = vpop.f32.mrf.mxu0
        %v3857 = vadd.f32 %v3504, %v3856
        %v3858 = vpop.f32.mrf.mxu0
        %v3859 = vadd.f32 %v3506, %v3858
        %v3860 = vpop.f32.mrf.mxu0
        %v3861 = vadd.f32 %v3508, %v3860
        %3862 = vmatprep.mubr.bf16.mxu0 %v3086
        %3863 = vmatmul.mubr.bf16.gmra.mxu0 %v3085
        %v3864 = vpop.f32.mrf.mxu0
        %v3865 = vadd.f32 %v3512, %v3864
        %v3866 = vpop.f32.mrf.mxu0
        %v3867 = vadd.f32 %v3514, %v3866
        %v3868 = vpop.f32.mrf.mxu0
        %v3869 = vadd.f32 %v3516, %v3868
        %v3870 = vpop.f32.mrf.mxu0
        %v3871 = vadd.f32 %v3518, %v3870
        %3872 = vmatprep.mubr.bf16.mxu0 %v3090
        %3873 = vmatmul.mubr.bf16.gmra.mxu0 %v3089
        %v3874 = vpop.f32.mrf.mxu0
        %v3875 = vadd.f32 %v3522, %v3874
        %v3876 = vpop.f32.mrf.mxu0
        %v3877 = vadd.f32 %v3524, %v3876
        %v3878 = vpop.f32.mrf.mxu0
        %v3879 = vadd.f32 %v3526, %v3878
        %v3880 = vpop.f32.mrf.mxu0
        %v3881 = vadd.f32 %v3528, %v3880
        %3882 = vmatprep.mubr.bf16.mxu0 %v3094
        %3883 = vmatmul.mubr.bf16.gmra.mxu0 %v3093
        %v3884 = vpop.f32.mrf.mxu0
        %v3885 = vadd.f32 %v3532, %v3884
        %v3886 = vpop.f32.mrf.mxu0
        %v3887 = vadd.f32 %v3534, %v3886
        %v3888 = vpop.f32.mrf.mxu0
        %v3889 = vadd.f32 %v3536, %v3888
        %v3890 = vpop.f32.mrf.mxu0
        %v3891 = vadd.f32 %v3538, %v3890
        %3892 = vmatprep.mubr.bf16.mxu0 %v3098
        %3893 = vmatmul.mubr.bf16.gmra.mxu0 %v3097
        %v3894 = vpop.f32.mrf.mxu0
        %v3895 = vadd.f32 %v3542, %v3894
        %v3896 = vpop.f32.mrf.mxu0
        %v3897 = vadd.f32 %v3544, %v3896
        %v3898 = vpop.f32.mrf.mxu0
        %v3899 = vadd.f32 %v3546, %v3898
        %v3900 = vpop.f32.mrf.mxu0
        %v3901 = vadd.f32 %v3548, %v3900
        %3902 = vmatprep.mubr.bf16.mxu0 %v3102
        %3903 = vmatmul.mubr.bf16.gmra.mxu0 %v3101
        %v3904 = vpop.f32.mrf.mxu0
        %v3905 = vadd.f32 %v3552, %v3904
        %v3906 = vpop.f32.mrf.mxu0
        %v3907 = vadd.f32 %v3554, %v3906
        %v3908 = vpop.f32.mrf.mxu0
        %v3909 = vadd.f32 %v3556, %v3908
        %v3910 = vpop.f32.mrf.mxu0
        %v3911 = vadd.f32 %v3558, %v3910
        %3912 = vmatprep.mubr.bf16.mxu0 %v3106
        %3913 = vmatmul.mubr.bf16.gmra.mxu0 %v3105
        %v3914 = vpop.f32.mrf.mxu0
        %v3915 = vadd.f32 %v3562, %v3914
        %v3916 = vpop.f32.mrf.mxu0
        %v3917 = vadd.f32 %v3564, %v3916
        %v3918 = vpop.f32.mrf.mxu0
        %v3919 = vadd.f32 %v3566, %v3918
        %v3920 = vpop.f32.mrf.mxu0
        %v3921 = vadd.f32 %v3568, %v3920
        %3922 = vmatprep.mubr.bf16.mxu0 %v3110
        %3923 = vmatmul.mubr.bf16.gmra.mxu0 %v3109
        %v3924 = vpop.f32.mrf.mxu0
        %v3925 = vadd.f32 %v3572, %v3924
        %v3926 = vpop.f32.mrf.mxu0
        %v3927 = vadd.f32 %v3574, %v3926
        %v3928 = vpop.f32.mrf.mxu0
        %v3929 = vadd.f32 %v3576, %v3928
        %v3930 = vpop.f32.mrf.mxu0
        %v3931 = vadd.f32 %v3578, %v3930
        %3932 = vmatprep.mubr.bf16.mxu0 %v3114
        %3933 = vmatmul.mubr.bf16.gmra.mxu0 %v3113
        %v3934 = vpop.f32.mrf.mxu0
        %v3935 = vadd.f32 %v3582, %v3934
        %v3936 = vpop.f32.mrf.mxu0
        %v3937 = vadd.f32 %v3584, %v3936
        %v3938 = vpop.f32.mrf.mxu0
        %v3939 = vadd.f32 %v3586, %v3938
        %v3940 = vpop.f32.mrf.mxu0
        %v3941 = vadd.f32 %v3588, %v3940
        %3942 = vmatprep.mubr.bf16.mxu0 %v3118
        %3943 = vmatmul.mubr.bf16.gmra.mxu0 %v3117
        %v3944 = vpop.f32.mrf.mxu0
        %v3945 = vadd.f32 %v3592, %v3944
        %v3946 = vpop.f32.mrf.mxu0
        %v3947 = vadd.f32 %v3594, %v3946
        %v3948 = vpop.f32.mrf.mxu0
        %v3949 = vadd.f32 %v3596, %v3948
        %v3950 = vpop.f32.mrf.mxu0
        %v3951 = vadd.f32 %v3598, %v3950
        %3952 = vdwg.mxu0
        %v3953 = vld [vmem:[%s7] sm:$0xff]
        %v3954 = vld [vmem:[%s7 + $0x8] sm:$0xff]
        %v3955 = vld [vmem:[%s7 + $0x10] sm:$0xff]
        %v3956 = vld [vmem:[%s7 + $0x18] sm:$0xff]
        %v3957 = vld [vmem:[%s7 + $0x20] sm:$0xff]
        %v3958 = vld [vmem:[%s7 + $0x28] sm:$0xff]
        %v3959 = vld [vmem:[%s7 + $0x30] sm:$0xff]
        %v3960 = vld [vmem:[%s7 + $0x38] sm:$0xff]
        %v3961 = vld [vmem:[%s7 + $0x40] sm:$0xff]
        %v3962 = vld [vmem:[%s7 + $0x48] sm:$0xff]
        %v3963 = vld [vmem:[%s7 + $0x50] sm:$0xff]
        %v3964 = vld [vmem:[%s7 + $0x58] sm:$0xff]
        %v3965 = vld [vmem:[%s7 + $0x60] sm:$0xff]
        %v3966 = vld [vmem:[%s7 + $0x68] sm:$0xff]
        %v3967 = vld [vmem:[%s7 + $0x70] sm:$0xff]
        %v3968 = vld [vmem:[%s7 + $0x78] sm:$0xff]
        %v3969 = vld [vmem:[%s7 + $0x80] sm:$0xff]
        %v3970 = vld [vmem:[%s7 + $0x88] sm:$0xff]
        %v3971 = vld [vmem:[%s7 + $0x90] sm:$0xff]
        %v3972 = vld [vmem:[%s7 + $0x98] sm:$0xff]
        %v3973 = vld [vmem:[%s7 + $0xa0] sm:$0xff]
        %v3974 = vld [vmem:[%s7 + $0xa8] sm:$0xff]
        %v3975 = vld [vmem:[%s7 + $0xb0] sm:$0xff]
        %v3976 = vld [vmem:[%s7 + $0xb8] sm:$0xff]
        %v3977 = vld [vmem:[%s7 + $0xc0] sm:$0xff]
        %v3978 = vld [vmem:[%s7 + $0xc8] sm:$0xff]
        %v3979 = vld [vmem:[%s7 + $0xd0] sm:$0xff]
        %v3980 = vld [vmem:[%s7 + $0xd8] sm:$0xff]
        %v3981 = vld [vmem:[%s7 + $0xe0] sm:$0xff]
        %v3982 = vld [vmem:[%s7 + $0xe8] sm:$0xff]
        %v3983 = vld [vmem:[%s7 + $0xf0] sm:$0xff]
        %v3984 = vld [vmem:[%s7 + $0xf8] sm:$0xff]
        %v3985 = vld [vmem:[%s7 + $0x100] sm:$0xff]
        %v3986 = vld [vmem:[%s7 + $0x108] sm:$0xff]
        %v3987 = vld [vmem:[%s7 + $0x110] sm:$0xff]
        %v3988 = vld [vmem:[%s7 + $0x118] sm:$0xff]
        %v3989 = vld [vmem:[%s7 + $0x120] sm:$0xff]
        %v3990 = vld [vmem:[%s7 + $0x128] sm:$0xff]
        %v3991 = vld [vmem:[%s7 + $0x130] sm:$0xff]
        %v3992 = vld [vmem:[%s7 + $0x138] sm:$0xff]
        %v3993 = vld [vmem:[%s7 + $0x140] sm:$0xff]
        %v3994 = vld [vmem:[%s7 + $0x148] sm:$0xff]
        %v3995 = vld [vmem:[%s7 + $0x150] sm:$0xff]
        %v3996 = vld [vmem:[%s7 + $0x158] sm:$0xff]
        %v3997 = vld [vmem:[%s7 + $0x160] sm:$0xff]
        %v3998 = vld [vmem:[%s7 + $0x168] sm:$0xff]
        %v3999 = vld [vmem:[%s7 + $0x170] sm:$0xff]
        %v4000 = vld [vmem:[%s7 + $0x178] sm:$0xff]
        %v4001 = vld [vmem:[%s7 + $0x180] sm:$0xff]
        %v4002 = vld [vmem:[%s7 + $0x188] sm:$0xff]
        %v4003 = vld [vmem:[%s7 + $0x190] sm:$0xff]
        %v4004 = vld [vmem:[%s7 + $0x198] sm:$0xff]
        %v4005 = vld [vmem:[%s7 + $0x1a0] sm:$0xff]
        %v4006 = vld [vmem:[%s7 + $0x1a8] sm:$0xff]
        %v4007 = vld [vmem:[%s7 + $0x1b0] sm:$0xff]
        %v4008 = vld [vmem:[%s7 + $0x1b8] sm:$0xff]
        %v4009 = vld [vmem:[%s7 + $0x1c0] sm:$0xff]
        %v4010 = vld [vmem:[%s7 + $0x1c8] sm:$0xff]
        %v4011 = vld [vmem:[%s7 + $0x1d0] sm:$0xff]
        %v4012 = vld [vmem:[%s7 + $0x1d8] sm:$0xff]
        %v4013 = vld [vmem:[%s7 + $0x1e0] sm:$0xff]
        %v4014 = vld [vmem:[%s7 + $0x1e8] sm:$0xff]
        %v4015 = vld [vmem:[%s7 + $0x1f0] sm:$0xff]
        %v4016 = vld [vmem:[%s7 + $0x1f8] sm:$0xff]
        %v4017 = vpack.c.bf16 %v3639, %v3635
        %v4018 = vpack.c.bf16 %v3641, %v3637
        %v4019 = vpack.c.bf16 %v3649, %v3645
        %v4020 = vpack.c.bf16 %v3651, %v3647
        %v4021 = vpack.c.bf16 %v3659, %v3655
        %v4022 = vpack.c.bf16 %v3661, %v3657
        %v4023 = vpack.c.bf16 %v3669, %v3665
        %v4024 = vpack.c.bf16 %v3671, %v3667
        %v4025 = vpack.c.bf16 %v3679, %v3675
        %v4026 = vpack.c.bf16 %v3681, %v3677
        %v4027 = vpack.c.bf16 %v3689, %v3685
        %v4028 = vpack.c.bf16 %v3691, %v3687
        %v4029 = vpack.c.bf16 %v3699, %v3695
        %v4030 = vpack.c.bf16 %v3701, %v3697
        %v4031 = vpack.c.bf16 %v3709, %v3705
        %v4032 = vpack.c.bf16 %v3711, %v3707
        %v4033 = vpack.c.bf16 %v3719, %v3715
        %v4034 = vpack.c.bf16 %v3721, %v3717
        %v4035 = vpack.c.bf16 %v3729, %v3725
        %v4036 = vpack.c.bf16 %v3731, %v3727
        %v4037 = vpack.c.bf16 %v3739, %v3735
        %v4038 = vpack.c.bf16 %v3741, %v3737
        %v4039 = vpack.c.bf16 %v3749, %v3745
        %v4040 = vpack.c.bf16 %v3751, %v3747
        %v4041 = vpack.c.bf16 %v3759, %v3755
        %v4042 = vpack.c.bf16 %v3761, %v3757
        %v4043 = vpack.c.bf16 %v3769, %v3765
        %v4044 = vpack.c.bf16 %v3771, %v3767
        %v4045 = vpack.c.bf16 %v3779, %v3775
        %v4046 = vpack.c.bf16 %v3781, %v3777
        %v4047 = vpack.c.bf16 %v3789, %v3785
        %v4048 = vpack.c.bf16 %v3791, %v3787
        %v4049 = vpack.c.bf16 %v3799, %v3795
        %v4050 = vpack.c.bf16 %v3801, %v3797
        %v4051 = vpack.c.bf16 %v3809, %v3805
        %v4052 = vpack.c.bf16 %v3811, %v3807
        %v4053 = vpack.c.bf16 %v3819, %v3815
        %v4054 = vpack.c.bf16 %v3821, %v3817
        %v4055 = vpack.c.bf16 %v3829, %v3825
        %v4056 = vpack.c.bf16 %v3831, %v3827
        %v4057 = vpack.c.bf16 %v3839, %v3835
        %v4058 = vpack.c.bf16 %v3841, %v3837
        %v4059 = vpack.c.bf16 %v3849, %v3845
        %v4060 = vpack.c.bf16 %v3851, %v3847
        %v4061 = vpack.c.bf16 %v3859, %v3855
        %v4062 = vpack.c.bf16 %v3861, %v3857
        %v4063 = vpack.c.bf16 %v3869, %v3865
        %v4064 = vpack.c.bf16 %v3871, %v3867
        %v4065 = vpack.c.bf16 %v3879, %v3875
        %v4066 = vpack.c.bf16 %v3881, %v3877
        %v4067 = vpack.c.bf16 %v3889, %v3885
        %v4068 = vpack.c.bf16 %v3891, %v3887
        %v4069 = vpack.c.bf16 %v3899, %v3895
        %v4070 = vpack.c.bf16 %v3901, %v3897
        %v4071 = vpack.c.bf16 %v3909, %v3905
        %v4072 = vpack.c.bf16 %v3911, %v3907
        %v4073 = vpack.c.bf16 %v3919, %v3915
        %v4074 = vpack.c.bf16 %v3921, %v3917
        %v4075 = vpack.c.bf16 %v3929, %v3925
        %v4076 = vpack.c.bf16 %v3931, %v3927
        %v4077 = vpack.c.bf16 %v3939, %v3935
        %v4078 = vpack.c.bf16 %v3941, %v3937
        %v4079 = vpack.c.bf16 %v3949, %v3945
        %v4080 = vpack.c.bf16 %v3951, %v3947
        %v4081 = vpack.c.bf16 %v3954, %v3953
        %v4082 = vpack.c.bf16 %v3956, %v3955
        %v4083 = vpack.c.bf16 %v3958, %v3957
        %v4084 = vpack.c.bf16 %v3960, %v3959
        %v4085 = vpack.c.bf16 %v3962, %v3961
        %v4086 = vpack.c.bf16 %v3964, %v3963
        %v4087 = vpack.c.bf16 %v3966, %v3965
        %v4088 = vpack.c.bf16 %v3968, %v3967
        %v4089 = vpack.c.bf16 %v3970, %v3969
        %v4090 = vpack.c.bf16 %v3972, %v3971
        %v4091 = vpack.c.bf16 %v3974, %v3973
        %v4092 = vpack.c.bf16 %v3976, %v3975
        %v4093 = vpack.c.bf16 %v3978, %v3977
        %v4094 = vpack.c.bf16 %v3980, %v3979
        %v4095 = vpack.c.bf16 %v3982, %v3981
        %v4096 = vpack.c.bf16 %v3984, %v3983
        %v4097 = vpack.c.bf16 %v3986, %v3985
        %v4098 = vpack.c.bf16 %v3988, %v3987
        %v4099 = vpack.c.bf16 %v3990, %v3989
        %v4100 = vpack.c.bf16 %v3992, %v3991
        %v4101 = vpack.c.bf16 %v3994, %v3993
        %v4102 = vpack.c.bf16 %v3996, %v3995
        %v4103 = vpack.c.bf16 %v3998, %v3997
        %v4104 = vpack.c.bf16 %v4000, %v3999
        %v4105 = vpack.c.bf16 %v4002, %v4001
        %v4106 = vpack.c.bf16 %v4004, %v4003
        %v4107 = vpack.c.bf16 %v4006, %v4005
        %v4108 = vpack.c.bf16 %v4008, %v4007
        %v4109 = vpack.c.bf16 %v4010, %v4009
        %v4110 = vpack.c.bf16 %v4012, %v4011
        %v4111 = vpack.c.bf16 %v4014, %v4013
        %v4112 = vpack.c.bf16 %v4016, %v4015
        %4114 = vset.pattern.permute.xlu0 0
        %4115 = vperm.xlu0 %4114, %v4081
        %v4116 = vpop.permute.xlu0 %4115
        %4119 = vset.pattern.permute.xlu0 0
        %4120 = vperm.xlu0 %4119, %v4082
        %v4121 = vpop.permute.xlu0 %4120
        %4124 = vset.pattern.permute.xlu0 0
        %4125 = vperm.xlu0 %4124, %v4083
        %v4126 = vpop.permute.xlu0 %4125
        %4129 = vset.pattern.permute.xlu0 0
        %4130 = vperm.xlu0 %4129, %v4084
        %v4131 = vpop.permute.xlu0 %4130
        %4134 = vset.pattern.permute.xlu0 0
        %4135 = vperm.xlu0 %4134, %v4085
        %v4136 = vpop.permute.xlu0 %4135
        %4139 = vset.pattern.permute.xlu0 0
        %4140 = vperm.xlu0 %4139, %v4086
        %v4141 = vpop.permute.xlu0 %4140
        %4144 = vset.pattern.permute.xlu0 0
        %4145 = vperm.xlu0 %4144, %v4087
        %v4146 = vpop.permute.xlu0 %4145
        %4149 = vset.pattern.permute.xlu0 0
        %4150 = vperm.xlu0 %4149, %v4088
        %v4151 = vpop.permute.xlu0 %4150
        %4154 = vset.pattern.permute.xlu0 0
        %4155 = vperm.xlu0 %4154, %v4089
        %v4156 = vpop.permute.xlu0 %4155
        %4159 = vset.pattern.permute.xlu0 0
        %4160 = vperm.xlu0 %4159, %v4090
        %v4161 = vpop.permute.xlu0 %4160
        %4164 = vset.pattern.permute.xlu0 0
        %4165 = vperm.xlu0 %4164, %v4091
        %v4166 = vpop.permute.xlu0 %4165
        %4169 = vset.pattern.permute.xlu0 0
        %4170 = vperm.xlu0 %4169, %v4092
        %v4171 = vpop.permute.xlu0 %4170
        %4174 = vset.pattern.permute.xlu0 0
        %4175 = vperm.xlu0 %4174, %v4093
        %v4176 = vpop.permute.xlu0 %4175
        %4179 = vset.pattern.permute.xlu0 0
        %4180 = vperm.xlu0 %4179, %v4094
        %v4181 = vpop.permute.xlu0 %4180
        %4184 = vset.pattern.permute.xlu0 0
        %4185 = vperm.xlu0 %4184, %v4095
        %v4186 = vpop.permute.xlu0 %4185
        %4189 = vset.pattern.permute.xlu0 0
        %4190 = vperm.xlu0 %4189, %v4096
        %v4191 = vpop.permute.xlu0 %4190
        %4194 = vset.pattern.permute.xlu0 0
        %4195 = vperm.xlu0 %4194, %v4097
        %v4196 = vpop.permute.xlu0 %4195
        %4199 = vset.pattern.permute.xlu0 0
        %4200 = vperm.xlu0 %4199, %v4098
        %v4201 = vpop.permute.xlu0 %4200
        %4204 = vset.pattern.permute.xlu0 0
        %4205 = vperm.xlu0 %4204, %v4099
        %v4206 = vpop.permute.xlu0 %4205
        %4209 = vset.pattern.permute.xlu0 0
        %4210 = vperm.xlu0 %4209, %v4100
        %v4211 = vpop.permute.xlu0 %4210
        %4214 = vset.pattern.permute.xlu0 0
        %4215 = vperm.xlu0 %4214, %v4101
        %v4216 = vpop.permute.xlu0 %4215
        %4219 = vset.pattern.permute.xlu0 0
        %4220 = vperm.xlu0 %4219, %v4102
        %v4221 = vpop.permute.xlu0 %4220
        %4224 = vset.pattern.permute.xlu0 0
        %4225 = vperm.xlu0 %4224, %v4103
        %v4226 = vpop.permute.xlu0 %4225
        %4229 = vset.pattern.permute.xlu0 0
        %4230 = vperm.xlu0 %4229, %v4104
        %v4231 = vpop.permute.xlu0 %4230
        %4234 = vset.pattern.permute.xlu0 0
        %4235 = vperm.xlu0 %4234, %v4105
        %v4236 = vpop.permute.xlu0 %4235
        %4239 = vset.pattern.permute.xlu0 0
        %4240 = vperm.xlu0 %4239, %v4106
        %v4241 = vpop.permute.xlu0 %4240
        %4244 = vset.pattern.permute.xlu0 0
        %4245 = vperm.xlu0 %4244, %v4107
        %v4246 = vpop.permute.xlu0 %4245
        %4249 = vset.pattern.permute.xlu0 0
        %4250 = vperm.xlu0 %4249, %v4108
        %v4251 = vpop.permute.xlu0 %4250
        %4254 = vset.pattern.permute.xlu0 0
        %4255 = vperm.xlu0 %4254, %v4109
        %v4256 = vpop.permute.xlu0 %4255
        %4259 = vset.pattern.permute.xlu0 0
        %4260 = vperm.xlu0 %4259, %v4110
        %v4261 = vpop.permute.xlu0 %4260
        %4264 = vset.pattern.permute.xlu0 0
        %4265 = vperm.xlu0 %4264, %v4111
        %v4266 = vpop.permute.xlu0 %4265
        %4269 = vset.pattern.permute.xlu0 0
        %4270 = vperm.xlu0 %4269, %v4112
        %v4271 = vpop.permute.xlu0 %4270
        %v4273 = vadd.bf16 %v4017, %v4116
        %v4274 = vadd.bf16 %v4018, %v4116
        %v4275 = vadd.bf16 %v4019, %v4121
        %v4276 = vadd.bf16 %v4020, %v4121
        %v4277 = vadd.bf16 %v4021, %v4126
        %v4278 = vadd.bf16 %v4022, %v4126
        %v4279 = vadd.bf16 %v4023, %v4131
        %v4280 = vadd.bf16 %v4024, %v4131
        %v4281 = vadd.bf16 %v4025, %v4136
        %v4282 = vadd.bf16 %v4026, %v4136
        %v4283 = vadd.bf16 %v4027, %v4141
        %v4284 = vadd.bf16 %v4028, %v4141
        %v4285 = vadd.bf16 %v4029, %v4146
        %v4286 = vadd.bf16 %v4030, %v4146
        %v4287 = vadd.bf16 %v4031, %v4151
        %v4288 = vadd.bf16 %v4032, %v4151
        %v4289 = vadd.bf16 %v4033, %v4156
        %v4290 = vadd.bf16 %v4034, %v4156
        %v4291 = vadd.bf16 %v4035, %v4161
        %v4292 = vadd.bf16 %v4036, %v4161
        %v4293 = vadd.bf16 %v4037, %v4166
        %v4294 = vadd.bf16 %v4038, %v4166
        %v4295 = vadd.bf16 %v4039, %v4171
        %v4296 = vadd.bf16 %v4040, %v4171
        %v4297 = vadd.bf16 %v4041, %v4176
        %v4298 = vadd.bf16 %v4042, %v4176
        %v4299 = vadd.bf16 %v4043, %v4181
        %v4300 = vadd.bf16 %v4044, %v4181
        %v4301 = vadd.bf16 %v4045, %v4186
        %v4302 = vadd.bf16 %v4046, %v4186
        %v4303 = vadd.bf16 %v4047, %v4191
        %v4304 = vadd.bf16 %v4048, %v4191
        %v4305 = vadd.bf16 %v4049, %v4196
        %v4306 = vadd.bf16 %v4050, %v4196
        %v4307 = vadd.bf16 %v4051, %v4201
        %v4308 = vadd.bf16 %v4052, %v4201
        %v4309 = vadd.bf16 %v4053, %v4206
        %v4310 = vadd.bf16 %v4054, %v4206
        %v4311 = vadd.bf16 %v4055, %v4211
        %v4312 = vadd.bf16 %v4056, %v4211
        %v4313 = vadd.bf16 %v4057, %v4216
        %v4314 = vadd.bf16 %v4058, %v4216
        %v4315 = vadd.bf16 %v4059, %v4221
        %v4316 = vadd.bf16 %v4060, %v4221
        %v4317 = vadd.bf16 %v4061, %v4226
        %v4318 = vadd.bf16 %v4062, %v4226
        %v4319 = vadd.bf16 %v4063, %v4231
        %v4320 = vadd.bf16 %v4064, %v4231
        %v4321 = vadd.bf16 %v4065, %v4236
        %v4322 = vadd.bf16 %v4066, %v4236
        %v4323 = vadd.bf16 %v4067, %v4241
        %v4324 = vadd.bf16 %v4068, %v4241
        %v4325 = vadd.bf16 %v4069, %v4246
        %v4326 = vadd.bf16 %v4070, %v4246
        %v4327 = vadd.bf16 %v4071, %v4251
        %v4328 = vadd.bf16 %v4072, %v4251
        %v4329 = vadd.bf16 %v4073, %v4256
        %v4330 = vadd.bf16 %v4074, %v4256
        %v4331 = vadd.bf16 %v4075, %v4261
        %v4332 = vadd.bf16 %v4076, %v4261
        %v4333 = vadd.bf16 %v4077, %v4266
        %v4334 = vadd.bf16 %v4078, %v4266
        %v4335 = vadd.bf16 %v4079, %v4271
        %v4336 = vadd.bf16 %v4080, %v4271
        %v4337 = vmax.bf16 %v4273, 0
        %v4338 = vmax.bf16 %v4274, 0
        %v4339 = vmax.bf16 %v4275, 0
        %v4340 = vmax.bf16 %v4276, 0
        %v4341 = vmax.bf16 %v4277, 0
        %v4342 = vmax.bf16 %v4278, 0
        %v4343 = vmax.bf16 %v4279, 0
        %v4344 = vmax.bf16 %v4280, 0
        %v4345 = vmax.bf16 %v4281, 0
        %v4346 = vmax.bf16 %v4282, 0
        %v4347 = vmax.bf16 %v4283, 0
        %v4348 = vmax.bf16 %v4284, 0
        %v4349 = vmax.bf16 %v4285, 0
        %v4350 = vmax.bf16 %v4286, 0
        %v4351 = vmax.bf16 %v4287, 0
        %v4352 = vmax.bf16 %v4288, 0
        %v4353 = vmax.bf16 %v4289, 0
        %v4354 = vmax.bf16 %v4290, 0
        %v4355 = vmax.bf16 %v4291, 0
        %v4356 = vmax.bf16 %v4292, 0
        %v4357 = vmax.bf16 %v4293, 0
        %v4358 = vmax.bf16 %v4294, 0
        %v4359 = vmax.bf16 %v4295, 0
        %v4360 = vmax.bf16 %v4296, 0
        %v4361 = vmax.bf16 %v4297, 0
        %v4362 = vmax.bf16 %v4298, 0
        %v4363 = vmax.bf16 %v4299, 0
        %v4364 = vmax.bf16 %v4300, 0
        %v4365 = vmax.bf16 %v4301, 0
        %v4366 = vmax.bf16 %v4302, 0
        %v4367 = vmax.bf16 %v4303, 0
        %v4368 = vmax.bf16 %v4304, 0
        %v4369 = vmax.bf16 %v4305, 0
        %v4370 = vmax.bf16 %v4306, 0
        %v4371 = vmax.bf16 %v4307, 0
        %v4372 = vmax.bf16 %v4308, 0
        %v4373 = vmax.bf16 %v4309, 0
        %v4374 = vmax.bf16 %v4310, 0
        %v4375 = vmax.bf16 %v4311, 0
        %v4376 = vmax.bf16 %v4312, 0
        %v4377 = vmax.bf16 %v4313, 0
        %v4378 = vmax.bf16 %v4314, 0
        %v4379 = vmax.bf16 %v4315, 0
        %v4380 = vmax.bf16 %v4316, 0
        %v4381 = vmax.bf16 %v4317, 0
        %v4382 = vmax.bf16 %v4318, 0
        %v4383 = vmax.bf16 %v4319, 0
        %v4384 = vmax.bf16 %v4320, 0
        %v4385 = vmax.bf16 %v4321, 0
        %v4386 = vmax.bf16 %v4322, 0
        %v4387 = vmax.bf16 %v4323, 0
        %v4388 = vmax.bf16 %v4324, 0
        %v4389 = vmax.bf16 %v4325, 0
        %v4390 = vmax.bf16 %v4326, 0
        %v4391 = vmax.bf16 %v4327, 0
        %v4392 = vmax.bf16 %v4328, 0
        %v4393 = vmax.bf16 %v4329, 0
        %v4394 = vmax.bf16 %v4330, 0
        %v4395 = vmax.bf16 %v4331, 0
        %v4396 = vmax.bf16 %v4332, 0
        %v4397 = vmax.bf16 %v4333, 0
        %v4398 = vmax.bf16 %v4334, 0
        %v4399 = vmax.bf16 %v4335, 0
        %v4400 = vmax.bf16 %v4336, 0
        %v4401 = vld [vmem:[#allocation3] sm:$0xff]
        %v4402 = vld [vmem:[#allocation3 + $0x8] sm:$0xff]
        %v4403 = vld [vmem:[#allocation3 + $0x10] sm:$0xff]
        %v4404 = vld [vmem:[#allocation3 + $0x18] sm:$0xff]
        %v4405 = vld [vmem:[#allocation3 + $0x20] sm:$0xff]
        %v4406 = vld [vmem:[#allocation3 + $0x28] sm:$0xff]
        %v4407 = vld [vmem:[#allocation3 + $0x30] sm:$0xff]
        %v4408 = vld [vmem:[#allocation3 + $0x38] sm:$0xff]
        %v4409 = vld [vmem:[#allocation3 + $0x40] sm:$0xff]
        %v4410 = vld [vmem:[#allocation3 + $0x48] sm:$0xff]
        %v4411 = vld [vmem:[#allocation3 + $0x50] sm:$0xff]
        %v4412 = vld [vmem:[#allocation3 + $0x58] sm:$0xff]
        %v4413 = vld [vmem:[#allocation3 + $0x60] sm:$0xff]
        %v4414 = vld [vmem:[#allocation3 + $0x68] sm:$0xff]
        %v4415 = vld [vmem:[#allocation3 + $0x70] sm:$0xff]
        %v4416 = vld [vmem:[#allocation3 + $0x78] sm:$0xff]
        %v4417 = vld [vmem:[#allocation3 + $0x80] sm:$0xff]
        %v4418 = vld [vmem:[#allocation3 + $0x88] sm:$0xff]
        %v4419 = vld [vmem:[#allocation3 + $0x90] sm:$0xff]
        %v4420 = vld [vmem:[#allocation3 + $0x98] sm:$0xff]
        %v4421 = vld [vmem:[#allocation3 + $0xa0] sm:$0xff]
        %v4422 = vld [vmem:[#allocation3 + $0xa8] sm:$0xff]
        %v4423 = vld [vmem:[#allocation3 + $0xb0] sm:$0xff]
        %v4424 = vld [vmem:[#allocation3 + $0xb8] sm:$0xff]
        %v4425 = vld [vmem:[#allocation3 + $0xc0] sm:$0xff]
        %v4426 = vld [vmem:[#allocation3 + $0xc8] sm:$0xff]
        %v4427 = vld [vmem:[#allocation3 + $0xd0] sm:$0xff]
        %v4428 = vld [vmem:[#allocation3 + $0xd8] sm:$0xff]
        %v4429 = vld [vmem:[#allocation3 + $0xe0] sm:$0xff]
        %v4430 = vld [vmem:[#allocation3 + $0xe8] sm:$0xff]
        %v4431 = vld [vmem:[#allocation3 + $0xf0] sm:$0xff]
        %v4432 = vld [vmem:[#allocation3 + $0xf8] sm:$0xff]
        %v4433 = vld [vmem:[#allocation3 + $0x100] sm:$0xff]
        %v4434 = vld [vmem:[#allocation3 + $0x108] sm:$0xff]
        %v4435 = vld [vmem:[#allocation3 + $0x110] sm:$0xff]
        %v4436 = vld [vmem:[#allocation3 + $0x118] sm:$0xff]
        %v4437 = vld [vmem:[#allocation3 + $0x120] sm:$0xff]
        %v4438 = vld [vmem:[#allocation3 + $0x128] sm:$0xff]
        %v4439 = vld [vmem:[#allocation3 + $0x130] sm:$0xff]
        %v4440 = vld [vmem:[#allocation3 + $0x138] sm:$0xff]
        %v4441 = vld [vmem:[#allocation3 + $0x140] sm:$0xff]
        %v4442 = vld [vmem:[#allocation3 + $0x148] sm:$0xff]
        %v4443 = vld [vmem:[#allocation3 + $0x150] sm:$0xff]
        %v4444 = vld [vmem:[#allocation3 + $0x158] sm:$0xff]
        %v4445 = vld [vmem:[#allocation3 + $0x160] sm:$0xff]
        %v4446 = vld [vmem:[#allocation3 + $0x168] sm:$0xff]
        %v4447 = vld [vmem:[#allocation3 + $0x170] sm:$0xff]
        %v4448 = vld [vmem:[#allocation3 + $0x178] sm:$0xff]
        %v4449 = vld [vmem:[#allocation3 + $0x180] sm:$0xff]
        %v4450 = vld [vmem:[#allocation3 + $0x188] sm:$0xff]
        %v4451 = vld [vmem:[#allocation3 + $0x190] sm:$0xff]
        %v4452 = vld [vmem:[#allocation3 + $0x198] sm:$0xff]
        %v4453 = vld [vmem:[#allocation3 + $0x1a0] sm:$0xff]
        %v4454 = vld [vmem:[#allocation3 + $0x1a8] sm:$0xff]
        %v4455 = vld [vmem:[#allocation3 + $0x1b0] sm:$0xff]
        %v4456 = vld [vmem:[#allocation3 + $0x1b8] sm:$0xff]
        %v4457 = vld [vmem:[#allocation3 + $0x1c0] sm:$0xff]
        %v4458 = vld [vmem:[#allocation3 + $0x1c8] sm:$0xff]
        %v4459 = vld [vmem:[#allocation3 + $0x1d0] sm:$0xff]
        %v4460 = vld [vmem:[#allocation3 + $0x1d8] sm:$0xff]
        %v4461 = vld [vmem:[#allocation3 + $0x1e0] sm:$0xff]
        %v4462 = vld [vmem:[#allocation3 + $0x1e8] sm:$0xff]
        %v4463 = vld [vmem:[#allocation3 + $0x1f0] sm:$0xff]
        %v4464 = vld [vmem:[#allocation3 + $0x1f8] sm:$0xff]
        %v4529 = vunpack.c.l.b16 %v4401
        %v4530 = vunpack.c.h.b16 %v4401
        %v4531 = vunpack.c.l.b16 %v4402
        %v4532 = vunpack.c.h.b16 %v4402
        %v4533 = vunpack.c.l.b16 %v4403
        %v4534 = vunpack.c.h.b16 %v4403
        %v4535 = vunpack.c.l.b16 %v4404
        %v4536 = vunpack.c.h.b16 %v4404
        %v4537 = vunpack.c.l.b16 %v4405
        %v4538 = vunpack.c.h.b16 %v4405
        %v4539 = vunpack.c.l.b16 %v4406
        %v4540 = vunpack.c.h.b16 %v4406
        %v4541 = vunpack.c.l.b16 %v4407
        %v4542 = vunpack.c.h.b16 %v4407
        %v4543 = vunpack.c.l.b16 %v4408
        %v4544 = vunpack.c.h.b16 %v4408
        %v4545 = vunpack.c.l.b16 %v4409
        %v4546 = vunpack.c.h.b16 %v4409
        %v4547 = vunpack.c.l.b16 %v4410
        %v4548 = vunpack.c.h.b16 %v4410
        %v4549 = vunpack.c.l.b16 %v4411
        %v4550 = vunpack.c.h.b16 %v4411
        %v4551 = vunpack.c.l.b16 %v4412
        %v4552 = vunpack.c.h.b16 %v4412
        %v4553 = vunpack.c.l.b16 %v4413
        %v4554 = vunpack.c.h.b16 %v4413
        %v4555 = vunpack.c.l.b16 %v4414
        %v4556 = vunpack.c.h.b16 %v4414
        %v4557 = vunpack.c.l.b16 %v4415
        %v4558 = vunpack.c.h.b16 %v4415
        %v4559 = vunpack.c.l.b16 %v4416
        %v4560 = vunpack.c.h.b16 %v4416
        %v4561 = vunpack.c.l.b16 %v4417
        %v4562 = vunpack.c.h.b16 %v4417
        %v4563 = vunpack.c.l.b16 %v4418
        %v4564 = vunpack.c.h.b16 %v4418
        %v4565 = vunpack.c.l.b16 %v4419
        %v4566 = vunpack.c.h.b16 %v4419
        %v4567 = vunpack.c.l.b16 %v4420
        %v4568 = vunpack.c.h.b16 %v4420
        %v4569 = vunpack.c.l.b16 %v4421
        %v4570 = vunpack.c.h.b16 %v4421
        %v4571 = vunpack.c.l.b16 %v4422
        %v4572 = vunpack.c.h.b16 %v4422
        %v4573 = vunpack.c.l.b16 %v4423
        %v4574 = vunpack.c.h.b16 %v4423
        %v4575 = vunpack.c.l.b16 %v4424
        %v4576 = vunpack.c.h.b16 %v4424
        %v4577 = vunpack.c.l.b16 %v4425
        %v4578 = vunpack.c.h.b16 %v4425
        %v4579 = vunpack.c.l.b16 %v4426
        %v4580 = vunpack.c.h.b16 %v4426
        %v4581 = vunpack.c.l.b16 %v4427
        %v4582 = vunpack.c.h.b16 %v4427
        %v4583 = vunpack.c.l.b16 %v4428
        %v4584 = vunpack.c.h.b16 %v4428
        %v4585 = vunpack.c.l.b16 %v4429
        %v4586 = vunpack.c.h.b16 %v4429
        %v4587 = vunpack.c.l.b16 %v4430
        %v4588 = vunpack.c.h.b16 %v4430
        %v4589 = vunpack.c.l.b16 %v4431
        %v4590 = vunpack.c.h.b16 %v4431
        %v4591 = vunpack.c.l.b16 %v4432
        %v4592 = vunpack.c.h.b16 %v4432
        %v4593 = vunpack.c.l.b16 %v4433
        %v4594 = vunpack.c.h.b16 %v4433
        %v4595 = vunpack.c.l.b16 %v4434
        %v4596 = vunpack.c.h.b16 %v4434
        %v4597 = vunpack.c.l.b16 %v4435
        %v4598 = vunpack.c.h.b16 %v4435
        %v4599 = vunpack.c.l.b16 %v4436
        %v4600 = vunpack.c.h.b16 %v4436
        %v4601 = vunpack.c.l.b16 %v4437
        %v4602 = vunpack.c.h.b16 %v4437
        %v4603 = vunpack.c.l.b16 %v4438
        %v4604 = vunpack.c.h.b16 %v4438
        %v4605 = vunpack.c.l.b16 %v4439
        %v4606 = vunpack.c.h.b16 %v4439
        %v4607 = vunpack.c.l.b16 %v4440
        %v4608 = vunpack.c.h.b16 %v4440
        %v4609 = vunpack.c.l.b16 %v4441
        %v4610 = vunpack.c.h.b16 %v4441
        %v4611 = vunpack.c.l.b16 %v4442
        %v4612 = vunpack.c.h.b16 %v4442
        %v4613 = vunpack.c.l.b16 %v4443
        %v4614 = vunpack.c.h.b16 %v4443
        %v4615 = vunpack.c.l.b16 %v4444
        %v4616 = vunpack.c.h.b16 %v4444
        %v4617 = vunpack.c.l.b16 %v4445
        %v4618 = vunpack.c.h.b16 %v4445
        %v4619 = vunpack.c.l.b16 %v4446
        %v4620 = vunpack.c.h.b16 %v4446
        %v4621 = vunpack.c.l.b16 %v4447
        %v4622 = vunpack.c.h.b16 %v4447
        %v4623 = vunpack.c.l.b16 %v4448
        %v4624 = vunpack.c.h.b16 %v4448
        %v4625 = vunpack.c.l.b16 %v4449
        %v4626 = vunpack.c.h.b16 %v4449
        %v4627 = vunpack.c.l.b16 %v4450
        %v4628 = vunpack.c.h.b16 %v4450
        %v4629 = vunpack.c.l.b16 %v4451
        %v4630 = vunpack.c.h.b16 %v4451
        %v4631 = vunpack.c.l.b16 %v4452
        %v4632 = vunpack.c.h.b16 %v4452
        %v4633 = vunpack.c.l.b16 %v4453
        %v4634 = vunpack.c.h.b16 %v4453
        %v4635 = vunpack.c.l.b16 %v4454
        %v4636 = vunpack.c.h.b16 %v4454
        %v4637 = vunpack.c.l.b16 %v4455
        %v4638 = vunpack.c.h.b16 %v4455
        %v4639 = vunpack.c.l.b16 %v4456
        %v4640 = vunpack.c.h.b16 %v4456
        %v4641 = vunpack.c.l.b16 %v4457
        %v4642 = vunpack.c.h.b16 %v4457
        %v4643 = vunpack.c.l.b16 %v4458
        %v4644 = vunpack.c.h.b16 %v4458
        %v4645 = vunpack.c.l.b16 %v4459
        %v4646 = vunpack.c.h.b16 %v4459
        %v4647 = vunpack.c.l.b16 %v4460
        %v4648 = vunpack.c.h.b16 %v4460
        %v4649 = vunpack.c.l.b16 %v4461
        %v4650 = vunpack.c.h.b16 %v4461
        %v4651 = vunpack.c.l.b16 %v4462
        %v4652 = vunpack.c.h.b16 %v4462
        %v4653 = vunpack.c.l.b16 %v4463
        %v4654 = vunpack.c.h.b16 %v4463
        %v4655 = vunpack.c.l.b16 %v4464
        %v4656 = vunpack.c.h.b16 %v4464
        %v4657 = vpack.c.b16 %v4533, %v4529
        %v4658 = vpack.c.b16 %v4534, %v4530
        %v4659 = vpack.c.b16 %v4535, %v4531
        %v4660 = vpack.c.b16 %v4536, %v4532
        %v4661 = vpack.c.b16 %v4541, %v4537
        %v4662 = vpack.c.b16 %v4542, %v4538
        %v4663 = vpack.c.b16 %v4543, %v4539
        %v4664 = vpack.c.b16 %v4544, %v4540
        %v4665 = vpack.c.b16 %v4549, %v4545
        %v4666 = vpack.c.b16 %v4550, %v4546
        %v4667 = vpack.c.b16 %v4551, %v4547
        %v4668 = vpack.c.b16 %v4552, %v4548
        %v4669 = vpack.c.b16 %v4557, %v4553
        %v4670 = vpack.c.b16 %v4558, %v4554
        %v4671 = vpack.c.b16 %v4559, %v4555
        %v4672 = vpack.c.b16 %v4560, %v4556
        %v4673 = vpack.c.b16 %v4565, %v4561
        %v4674 = vpack.c.b16 %v4566, %v4562
        %v4675 = vpack.c.b16 %v4567, %v4563
        %v4676 = vpack.c.b16 %v4568, %v4564
        %v4677 = vpack.c.b16 %v4573, %v4569
        %v4678 = vpack.c.b16 %v4574, %v4570
        %v4679 = vpack.c.b16 %v4575, %v4571
        %v4680 = vpack.c.b16 %v4576, %v4572
        %v4681 = vpack.c.b16 %v4581, %v4577
        %v4682 = vpack.c.b16 %v4582, %v4578
        %v4683 = vpack.c.b16 %v4583, %v4579
        %v4684 = vpack.c.b16 %v4584, %v4580
        %v4685 = vpack.c.b16 %v4589, %v4585
        %v4686 = vpack.c.b16 %v4590, %v4586
        %v4687 = vpack.c.b16 %v4591, %v4587
        %v4688 = vpack.c.b16 %v4592, %v4588
        %v4689 = vpack.c.b16 %v4597, %v4593
        %v4690 = vpack.c.b16 %v4598, %v4594
        %v4691 = vpack.c.b16 %v4599, %v4595
        %v4692 = vpack.c.b16 %v4600, %v4596
        %v4693 = vpack.c.b16 %v4605, %v4601
        %v4694 = vpack.c.b16 %v4606, %v4602
        %v4695 = vpack.c.b16 %v4607, %v4603
        %v4696 = vpack.c.b16 %v4608, %v4604
        %v4697 = vpack.c.b16 %v4613, %v4609
        %v4698 = vpack.c.b16 %v4614, %v4610
        %v4699 = vpack.c.b16 %v4615, %v4611
        %v4700 = vpack.c.b16 %v4616, %v4612
        %v4701 = vpack.c.b16 %v4621, %v4617
        %v4702 = vpack.c.b16 %v4622, %v4618
        %v4703 = vpack.c.b16 %v4623, %v4619
        %v4704 = vpack.c.b16 %v4624, %v4620
        %v4705 = vpack.c.b16 %v4629, %v4625
        %v4706 = vpack.c.b16 %v4630, %v4626
        %v4707 = vpack.c.b16 %v4631, %v4627
        %v4708 = vpack.c.b16 %v4632, %v4628
        %v4709 = vpack.c.b16 %v4637, %v4633
        %v4710 = vpack.c.b16 %v4638, %v4634
        %v4711 = vpack.c.b16 %v4639, %v4635
        %v4712 = vpack.c.b16 %v4640, %v4636
        %v4713 = vpack.c.b16 %v4645, %v4641
        %v4714 = vpack.c.b16 %v4646, %v4642
        %v4715 = vpack.c.b16 %v4647, %v4643
        %v4716 = vpack.c.b16 %v4648, %v4644
        %v4717 = vpack.c.b16 %v4653, %v4649
        %v4718 = vpack.c.b16 %v4654, %v4650
        %v4719 = vpack.c.b16 %v4655, %v4651
        %v4720 = vpack.c.b16 %v4656, %v4652
        %4785 = vmatprep.subr.bf16.mxu0 %v4352
        %4786 = vmatpush1.bf16.msra.mxu0 %v4351
        %4787 = vmatprep.subr.bf16.mxu0 %v4350
        %4788 = vmatpush1.bf16.msra.mxu0 %v4349
        %4789 = vmatprep.subr.bf16.mxu0 %v4348
        %4790 = vmatpush1.bf16.msra.mxu0 %v4347
        %4791 = vmatprep.subr.bf16.mxu0 %v4346
        %4792 = vmatpush1.bf16.msra.mxu0 %v4345
        %4793 = vmatprep.subr.bf16.mxu0 %v4344
        %4794 = vmatpush1.bf16.msra.mxu0 %v4343
        %4795 = vmatprep.subr.bf16.mxu0 %v4342
        %4796 = vmatpush1.bf16.msra.mxu0 %v4341
        %4797 = vmatprep.subr.bf16.mxu0 %v4340
        %4798 = vmatpush1.bf16.msra.mxu0 %v4339
        %4799 = vmatprep.subr.bf16.mxu0 %v4338
        %4800 = vmatpush1.bf16.msra.mxu0 %v4337
        %4801 = vmatprep.subr.bf16.mxu0 %v4368
        %4802 = vmatpush2.bf16.msra.mxu0 %v4367
        %4803 = vmatprep.subr.bf16.mxu0 %v4366
        %4804 = vmatpush2.bf16.msra.mxu0 %v4365
        %4805 = vmatprep.subr.bf16.mxu0 %v4364
        %4806 = vmatpush2.bf16.msra.mxu0 %v4363
        %4807 = vmatprep.subr.bf16.mxu0 %v4362
        %4808 = vmatpush2.bf16.msra.mxu0 %v4361
        %4809 = vmatprep.subr.bf16.mxu0 %v4360
        %4810 = vmatpush2.bf16.msra.mxu0 %v4359
        %4811 = vmatprep.subr.bf16.mxu0 %v4358
        %4812 = vmatpush2.bf16.msra.mxu0 %v4357
        %4813 = vmatprep.subr.bf16.mxu0 %v4356
        %4814 = vmatpush2.bf16.msra.mxu0 %v4355
        %4815 = vmatprep.subr.bf16.mxu0 %v4354
        %4816 = vmatpush2.bf16.msra.mxu0 %v4353
        %4817 = vmatprep.mubr.bf16.mxu0 %v4658
        %4818 = vmatmul.mubr.bf16.gmra.mxu0 %v4657
        %v4819 = vpop.f32.mrf.mxu0
        %v4820 = vadd.f32 0.0, %v4819
        %v4821 = vpop.f32.mrf.mxu0
        %v4822 = vadd.f32 0.0, %v4821
        %v4823 = vpop.f32.mrf.mxu0
        %v4824 = vadd.f32 0.0, %v4823
        %v4825 = vpop.f32.mrf.mxu0
        %v4826 = vadd.f32 0.0, %v4825
        %4827 = vmatprep.mubr.bf16.mxu0 %v4662
        %4828 = vmatmul.mubr.bf16.gmra.mxu0 %v4661
        %v4829 = vpop.f32.mrf.mxu0
        %v4830 = vadd.f32 0.0, %v4829
        %v4831 = vpop.f32.mrf.mxu0
        %v4832 = vadd.f32 0.0, %v4831
        %v4833 = vpop.f32.mrf.mxu0
        %v4834 = vadd.f32 0.0, %v4833
        %v4835 = vpop.f32.mrf.mxu0
        %v4836 = vadd.f32 0.0, %v4835
        %4837 = vmatprep.mubr.bf16.mxu0 %v4666
        %4838 = vmatmul.mubr.bf16.gmra.mxu0 %v4665
        %v4839 = vpop.f32.mrf.mxu0
        %v4840 = vadd.f32 0.0, %v4839
        %v4841 = vpop.f32.mrf.mxu0
        %v4842 = vadd.f32 0.0, %v4841
        %v4843 = vpop.f32.mrf.mxu0
        %v4844 = vadd.f32 0.0, %v4843
        %v4845 = vpop.f32.mrf.mxu0
        %v4846 = vadd.f32 0.0, %v4845
        %4847 = vmatprep.mubr.bf16.mxu0 %v4670
        %4848 = vmatmul.mubr.bf16.gmra.mxu0 %v4669
        %v4849 = vpop.f32.mrf.mxu0
        %v4850 = vadd.f32 0.0, %v4849
        %v4851 = vpop.f32.mrf.mxu0
        %v4852 = vadd.f32 0.0, %v4851
        %v4853 = vpop.f32.mrf.mxu0
        %v4854 = vadd.f32 0.0, %v4853
        %v4855 = vpop.f32.mrf.mxu0
        %v4856 = vadd.f32 0.0, %v4855
        %4857 = vmatprep.mubr.bf16.mxu0 %v4674
        %4858 = vmatmul.mubr.bf16.gmra.mxu0 %v4673
        %v4859 = vpop.f32.mrf.mxu0
        %v4860 = vadd.f32 0.0, %v4859
        %v4861 = vpop.f32.mrf.mxu0
        %v4862 = vadd.f32 0.0, %v4861
        %v4863 = vpop.f32.mrf.mxu0
        %v4864 = vadd.f32 0.0, %v4863
        %v4865 = vpop.f32.mrf.mxu0
        %v4866 = vadd.f32 0.0, %v4865
        %4867 = vmatprep.mubr.bf16.mxu0 %v4678
        %4868 = vmatmul.mubr.bf16.gmra.mxu0 %v4677
        %v4869 = vpop.f32.mrf.mxu0
        %v4870 = vadd.f32 0.0, %v4869
        %v4871 = vpop.f32.mrf.mxu0
        %v4872 = vadd.f32 0.0, %v4871
        %v4873 = vpop.f32.mrf.mxu0
        %v4874 = vadd.f32 0.0, %v4873
        %v4875 = vpop.f32.mrf.mxu0
        %v4876 = vadd.f32 0.0, %v4875
        %4877 = vmatprep.mubr.bf16.mxu0 %v4682
        %4878 = vmatmul.mubr.bf16.gmra.mxu0 %v4681
        %v4879 = vpop.f32.mrf.mxu0
        %v4880 = vadd.f32 0.0, %v4879
        %v4881 = vpop.f32.mrf.mxu0
        %v4882 = vadd.f32 0.0, %v4881
        %v4883 = vpop.f32.mrf.mxu0
        %v4884 = vadd.f32 0.0, %v4883
        %v4885 = vpop.f32.mrf.mxu0
        %v4886 = vadd.f32 0.0, %v4885
        %4887 = vmatprep.mubr.bf16.mxu0 %v4686
        %4888 = vmatmul.mubr.bf16.gmra.mxu0 %v4685
        %v4889 = vpop.f32.mrf.mxu0
        %v4890 = vadd.f32 0.0, %v4889
        %v4891 = vpop.f32.mrf.mxu0
        %v4892 = vadd.f32 0.0, %v4891
        %v4893 = vpop.f32.mrf.mxu0
        %v4894 = vadd.f32 0.0, %v4893
        %v4895 = vpop.f32.mrf.mxu0
        %v4896 = vadd.f32 0.0, %v4895
        %4897 = vmatprep.mubr.bf16.mxu0 %v4690
        %4898 = vmatmul.mubr.bf16.gmra.mxu0 %v4689
        %v4899 = vpop.f32.mrf.mxu0
        %v4900 = vadd.f32 0.0, %v4899
        %v4901 = vpop.f32.mrf.mxu0
        %v4902 = vadd.f32 0.0, %v4901
        %v4903 = vpop.f32.mrf.mxu0
        %v4904 = vadd.f32 0.0, %v4903
        %v4905 = vpop.f32.mrf.mxu0
        %v4906 = vadd.f32 0.0, %v4905
        %4907 = vmatprep.mubr.bf16.mxu0 %v4694
        %4908 = vmatmul.mubr.bf16.gmra.mxu0 %v4693
        %v4909 = vpop.f32.mrf.mxu0
        %v4910 = vadd.f32 0.0, %v4909
        %v4911 = vpop.f32.mrf.mxu0
        %v4912 = vadd.f32 0.0, %v4911
        %v4913 = vpop.f32.mrf.mxu0
        %v4914 = vadd.f32 0.0, %v4913
        %v4915 = vpop.f32.mrf.mxu0
        %v4916 = vadd.f32 0.0, %v4915
        %4917 = vmatprep.mubr.bf16.mxu0 %v4698
        %4918 = vmatmul.mubr.bf16.gmra.mxu0 %v4697
        %v4919 = vpop.f32.mrf.mxu0
        %v4920 = vadd.f32 0.0, %v4919
        %v4921 = vpop.f32.mrf.mxu0
        %v4922 = vadd.f32 0.0, %v4921
        %v4923 = vpop.f32.mrf.mxu0
        %v4924 = vadd.f32 0.0, %v4923
        %v4925 = vpop.f32.mrf.mxu0
        %v4926 = vadd.f32 0.0, %v4925
        %4927 = vmatprep.mubr.bf16.mxu0 %v4702
        %4928 = vmatmul.mubr.bf16.gmra.mxu0 %v4701
        %v4929 = vpop.f32.mrf.mxu0
        %v4930 = vadd.f32 0.0, %v4929
        %v4931 = vpop.f32.mrf.mxu0
        %v4932 = vadd.f32 0.0, %v4931
        %v4933 = vpop.f32.mrf.mxu0
        %v4934 = vadd.f32 0.0, %v4933
        %v4935 = vpop.f32.mrf.mxu0
        %v4936 = vadd.f32 0.0, %v4935
        %4937 = vmatprep.mubr.bf16.mxu0 %v4706
        %4938 = vmatmul.mubr.bf16.gmra.mxu0 %v4705
        %v4939 = vpop.f32.mrf.mxu0
        %v4940 = vadd.f32 0.0, %v4939
        %v4941 = vpop.f32.mrf.mxu0
        %v4942 = vadd.f32 0.0, %v4941
        %v4943 = vpop.f32.mrf.mxu0
        %v4944 = vadd.f32 0.0, %v4943
        %v4945 = vpop.f32.mrf.mxu0
        %v4946 = vadd.f32 0.0, %v4945
        %4947 = vmatprep.mubr.bf16.mxu0 %v4710
        %4948 = vmatmul.mubr.bf16.gmra.mxu0 %v4709
        %v4949 = vpop.f32.mrf.mxu0
        %v4950 = vadd.f32 0.0, %v4949
        %v4951 = vpop.f32.mrf.mxu0
        %v4952 = vadd.f32 0.0, %v4951
        %v4953 = vpop.f32.mrf.mxu0
        %v4954 = vadd.f32 0.0, %v4953
        %v4955 = vpop.f32.mrf.mxu0
        %v4956 = vadd.f32 0.0, %v4955
        %4957 = vmatprep.mubr.bf16.mxu0 %v4714
        %4958 = vmatmul.mubr.bf16.gmra.mxu0 %v4713
        %v4959 = vpop.f32.mrf.mxu0
        %v4960 = vadd.f32 0.0, %v4959
        %v4961 = vpop.f32.mrf.mxu0
        %v4962 = vadd.f32 0.0, %v4961
        %v4963 = vpop.f32.mrf.mxu0
        %v4964 = vadd.f32 0.0, %v4963
        %v4965 = vpop.f32.mrf.mxu0
        %v4966 = vadd.f32 0.0, %v4965
        %4967 = vmatprep.mubr.bf16.mxu0 %v4718
        %4968 = vmatmul.mubr.bf16.gmra.mxu0 %v4717
        %v4969 = vpop.f32.mrf.mxu0
        %v4970 = vadd.f32 0.0, %v4969
        %v4971 = vpop.f32.mrf.mxu0
        %v4972 = vadd.f32 0.0, %v4971
        %v4973 = vpop.f32.mrf.mxu0
        %v4974 = vadd.f32 0.0, %v4973
        %v4975 = vpop.f32.mrf.mxu0
        %v4976 = vadd.f32 0.0, %v4975
        %4977 = vdwg.mxu0
        %4978 = vmatprep.subr.bf16.mxu0 %v4384
        %4979 = vmatpush1.bf16.msra.mxu0 %v4383
        %4980 = vmatprep.subr.bf16.mxu0 %v4382
        %4981 = vmatpush1.bf16.msra.mxu0 %v4381
        %4982 = vmatprep.subr.bf16.mxu0 %v4380
        %4983 = vmatpush1.bf16.msra.mxu0 %v4379
        %4984 = vmatprep.subr.bf16.mxu0 %v4378
        %4985 = vmatpush1.bf16.msra.mxu0 %v4377
        %4986 = vmatprep.subr.bf16.mxu0 %v4376
        %4987 = vmatpush1.bf16.msra.mxu0 %v4375
        %4988 = vmatprep.subr.bf16.mxu0 %v4374
        %4989 = vmatpush1.bf16.msra.mxu0 %v4373
        %4990 = vmatprep.subr.bf16.mxu0 %v4372
        %4991 = vmatpush1.bf16.msra.mxu0 %v4371
        %4992 = vmatprep.subr.bf16.mxu0 %v4370
        %4993 = vmatpush1.bf16.msra.mxu0 %v4369
        %4994 = vmatprep.subr.bf16.mxu0 %v4400
        %4995 = vmatpush2.bf16.msra.mxu0 %v4399
        %4996 = vmatprep.subr.bf16.mxu0 %v4398
        %4997 = vmatpush2.bf16.msra.mxu0 %v4397
        %4998 = vmatprep.subr.bf16.mxu0 %v4396
        %4999 = vmatpush2.bf16.msra.mxu0 %v4395
        %5000 = vmatprep.subr.bf16.mxu0 %v4394
        %5001 = vmatpush2.bf16.msra.mxu0 %v4393
        %5002 = vmatprep.subr.bf16.mxu0 %v4392
        %5003 = vmatpush2.bf16.msra.mxu0 %v4391
        %5004 = vmatprep.subr.bf16.mxu0 %v4390
        %5005 = vmatpush2.bf16.msra.mxu0 %v4389
        %5006 = vmatprep.subr.bf16.mxu0 %v4388
        %5007 = vmatpush2.bf16.msra.mxu0 %v4387
        %5008 = vmatprep.subr.bf16.mxu0 %v4386
        %5009 = vmatpush2.bf16.msra.mxu0 %v4385
        %5010 = vmatprep.mubr.bf16.mxu0 %v4660
        %5011 = vmatmul.mubr.bf16.gmra.mxu0 %v4659
        %v5012 = vpop.f32.mrf.mxu0
        %v5013 = vadd.f32 %v4820, %v5012
        %v5014 = vpop.f32.mrf.mxu0
        %v5015 = vadd.f32 %v4822, %v5014
        %v5016 = vpop.f32.mrf.mxu0
        %v5017 = vadd.f32 %v4824, %v5016
        %v5018 = vpop.f32.mrf.mxu0
        %v5019 = vadd.f32 %v4826, %v5018
        %5020 = vmatprep.mubr.bf16.mxu0 %v4664
        %5021 = vmatmul.mubr.bf16.gmra.mxu0 %v4663
        %v5022 = vpop.f32.mrf.mxu0
        %v5023 = vadd.f32 %v4830, %v5022
        %v5024 = vpop.f32.mrf.mxu0
        %v5025 = vadd.f32 %v4832, %v5024
        %v5026 = vpop.f32.mrf.mxu0
        %v5027 = vadd.f32 %v4834, %v5026
        %v5028 = vpop.f32.mrf.mxu0
        %v5029 = vadd.f32 %v4836, %v5028
        %5030 = vmatprep.mubr.bf16.mxu0 %v4668
        %5031 = vmatmul.mubr.bf16.gmra.mxu0 %v4667
        %v5032 = vpop.f32.mrf.mxu0
        %v5033 = vadd.f32 %v4840, %v5032
        %v5034 = vpop.f32.mrf.mxu0
        %v5035 = vadd.f32 %v4842, %v5034
        %v5036 = vpop.f32.mrf.mxu0
        %v5037 = vadd.f32 %v4844, %v5036
        %v5038 = vpop.f32.mrf.mxu0
        %v5039 = vadd.f32 %v4846, %v5038
        %5040 = vmatprep.mubr.bf16.mxu0 %v4672
        %5041 = vmatmul.mubr.bf16.gmra.mxu0 %v4671
        %v5042 = vpop.f32.mrf.mxu0
        %v5043 = vadd.f32 %v4850, %v5042
        %v5044 = vpop.f32.mrf.mxu0
        %v5045 = vadd.f32 %v4852, %v5044
        %v5046 = vpop.f32.mrf.mxu0
        %v5047 = vadd.f32 %v4854, %v5046
        %v5048 = vpop.f32.mrf.mxu0
        %v5049 = vadd.f32 %v4856, %v5048
        %5050 = vmatprep.mubr.bf16.mxu0 %v4676
        %5051 = vmatmul.mubr.bf16.gmra.mxu0 %v4675
        %v5052 = vpop.f32.mrf.mxu0
        %v5053 = vadd.f32 %v4860, %v5052
        %v5054 = vpop.f32.mrf.mxu0
        %v5055 = vadd.f32 %v4862, %v5054
        %v5056 = vpop.f32.mrf.mxu0
        %v5057 = vadd.f32 %v4864, %v5056
        %v5058 = vpop.f32.mrf.mxu0
        %v5059 = vadd.f32 %v4866, %v5058
        %5060 = vmatprep.mubr.bf16.mxu0 %v4680
        %5061 = vmatmul.mubr.bf16.gmra.mxu0 %v4679
        %v5062 = vpop.f32.mrf.mxu0
        %v5063 = vadd.f32 %v4870, %v5062
        %v5064 = vpop.f32.mrf.mxu0
        %v5065 = vadd.f32 %v4872, %v5064
        %v5066 = vpop.f32.mrf.mxu0
        %v5067 = vadd.f32 %v4874, %v5066
        %v5068 = vpop.f32.mrf.mxu0
        %v5069 = vadd.f32 %v4876, %v5068
        %5070 = vmatprep.mubr.bf16.mxu0 %v4684
        %5071 = vmatmul.mubr.bf16.gmra.mxu0 %v4683
        %v5072 = vpop.f32.mrf.mxu0
        %v5073 = vadd.f32 %v4880, %v5072
        %v5074 = vpop.f32.mrf.mxu0
        %v5075 = vadd.f32 %v4882, %v5074
        %v5076 = vpop.f32.mrf.mxu0
        %v5077 = vadd.f32 %v4884, %v5076
        %v5078 = vpop.f32.mrf.mxu0
        %v5079 = vadd.f32 %v4886, %v5078
        %5080 = vmatprep.mubr.bf16.mxu0 %v4688
        %5081 = vmatmul.mubr.bf16.gmra.mxu0 %v4687
        %v5082 = vpop.f32.mrf.mxu0
        %v5083 = vadd.f32 %v4890, %v5082
        %v5084 = vpop.f32.mrf.mxu0
        %v5085 = vadd.f32 %v4892, %v5084
        %v5086 = vpop.f32.mrf.mxu0
        %v5087 = vadd.f32 %v4894, %v5086
        %v5088 = vpop.f32.mrf.mxu0
        %v5089 = vadd.f32 %v4896, %v5088
        %5090 = vmatprep.mubr.bf16.mxu0 %v4692
        %5091 = vmatmul.mubr.bf16.gmra.mxu0 %v4691
        %v5092 = vpop.f32.mrf.mxu0
        %v5093 = vadd.f32 %v4900, %v5092
        %v5094 = vpop.f32.mrf.mxu0
        %v5095 = vadd.f32 %v4902, %v5094
        %v5096 = vpop.f32.mrf.mxu0
        %v5097 = vadd.f32 %v4904, %v5096
        %v5098 = vpop.f32.mrf.mxu0
        %v5099 = vadd.f32 %v4906, %v5098
        %5100 = vmatprep.mubr.bf16.mxu0 %v4696
        %5101 = vmatmul.mubr.bf16.gmra.mxu0 %v4695
        %v5102 = vpop.f32.mrf.mxu0
        %v5103 = vadd.f32 %v4910, %v5102
        %v5104 = vpop.f32.mrf.mxu0
        %v5105 = vadd.f32 %v4912, %v5104
        %v5106 = vpop.f32.mrf.mxu0
        %v5107 = vadd.f32 %v4914, %v5106
        %v5108 = vpop.f32.mrf.mxu0
        %v5109 = vadd.f32 %v4916, %v5108
        %5110 = vmatprep.mubr.bf16.mxu0 %v4700
        %5111 = vmatmul.mubr.bf16.gmra.mxu0 %v4699
        %v5112 = vpop.f32.mrf.mxu0
        %v5113 = vadd.f32 %v4920, %v5112
        %v5114 = vpop.f32.mrf.mxu0
        %v5115 = vadd.f32 %v4922, %v5114
        %v5116 = vpop.f32.mrf.mxu0
        %v5117 = vadd.f32 %v4924, %v5116
        %v5118 = vpop.f32.mrf.mxu0
        %v5119 = vadd.f32 %v4926, %v5118
        %5120 = vmatprep.mubr.bf16.mxu0 %v4704
        %5121 = vmatmul.mubr.bf16.gmra.mxu0 %v4703
        %v5122 = vpop.f32.mrf.mxu0
        %v5123 = vadd.f32 %v4930, %v5122
        %v5124 = vpop.f32.mrf.mxu0
        %v5125 = vadd.f32 %v4932, %v5124
        %v5126 = vpop.f32.mrf.mxu0
        %v5127 = vadd.f32 %v4934, %v5126
        %v5128 = vpop.f32.mrf.mxu0
        %v5129 = vadd.f32 %v4936, %v5128
        %5130 = vmatprep.mubr.bf16.mxu0 %v4708
        %5131 = vmatmul.mubr.bf16.gmra.mxu0 %v4707
        %v5132 = vpop.f32.mrf.mxu0
        %v5133 = vadd.f32 %v4940, %v5132
        %v5134 = vpop.f32.mrf.mxu0
        %v5135 = vadd.f32 %v4942, %v5134
        %v5136 = vpop.f32.mrf.mxu0
        %v5137 = vadd.f32 %v4944, %v5136
        %v5138 = vpop.f32.mrf.mxu0
        %v5139 = vadd.f32 %v4946, %v5138
        %5140 = vmatprep.mubr.bf16.mxu0 %v4712
        %5141 = vmatmul.mubr.bf16.gmra.mxu0 %v4711
        %v5142 = vpop.f32.mrf.mxu0
        %v5143 = vadd.f32 %v4950, %v5142
        %v5144 = vpop.f32.mrf.mxu0
        %v5145 = vadd.f32 %v4952, %v5144
        %v5146 = vpop.f32.mrf.mxu0
        %v5147 = vadd.f32 %v4954, %v5146
        %v5148 = vpop.f32.mrf.mxu0
        %v5149 = vadd.f32 %v4956, %v5148
        %5150 = vmatprep.mubr.bf16.mxu0 %v4716
        %5151 = vmatmul.mubr.bf16.gmra.mxu0 %v4715
        %v5152 = vpop.f32.mrf.mxu0
        %v5153 = vadd.f32 %v4960, %v5152
        %v5154 = vpop.f32.mrf.mxu0
        %v5155 = vadd.f32 %v4962, %v5154
        %v5156 = vpop.f32.mrf.mxu0
        %v5157 = vadd.f32 %v4964, %v5156
        %v5158 = vpop.f32.mrf.mxu0
        %v5159 = vadd.f32 %v4966, %v5158
        %5160 = vmatprep.mubr.bf16.mxu0 %v4720
        %5161 = vmatmul.mubr.bf16.gmra.mxu0 %v4719
        %v5162 = vpop.f32.mrf.mxu0
        %v5163 = vadd.f32 %v4970, %v5162
        %v5164 = vpop.f32.mrf.mxu0
        %v5165 = vadd.f32 %v4972, %v5164
        %v5166 = vpop.f32.mrf.mxu0
        %v5167 = vadd.f32 %v4974, %v5166
        %v5168 = vpop.f32.mrf.mxu0
        %v5169 = vadd.f32 %v4976, %v5168
        %5170 = vdwg.mxu0
        %v5171 = vld [vmem:[%s9] sm:$0xff]
        %v5172 = vld [vmem:[%s9 + $0x8] sm:$0xff]
        %v5173 = vld [vmem:[%s9 + $0x10] sm:$0xff]
        %v5174 = vld [vmem:[%s9 + $0x18] sm:$0xff]
        %v5175 = vld [vmem:[%s9 + $0x20] sm:$0xff]
        %v5176 = vld [vmem:[%s9 + $0x28] sm:$0xff]
        %v5177 = vld [vmem:[%s9 + $0x30] sm:$0xff]
        %v5178 = vld [vmem:[%s9 + $0x38] sm:$0xff]
        %v5179 = vld [vmem:[%s9 + $0x40] sm:$0xff]
        %v5180 = vld [vmem:[%s9 + $0x48] sm:$0xff]
        %v5181 = vld [vmem:[%s9 + $0x50] sm:$0xff]
        %v5182 = vld [vmem:[%s9 + $0x58] sm:$0xff]
        %v5183 = vld [vmem:[%s9 + $0x60] sm:$0xff]
        %v5184 = vld [vmem:[%s9 + $0x68] sm:$0xff]
        %v5185 = vld [vmem:[%s9 + $0x70] sm:$0xff]
        %v5186 = vld [vmem:[%s9 + $0x78] sm:$0xff]
        %v5187 = vld [vmem:[%s9 + $0x80] sm:$0xff]
        %v5188 = vld [vmem:[%s9 + $0x88] sm:$0xff]
        %v5189 = vld [vmem:[%s9 + $0x90] sm:$0xff]
        %v5190 = vld [vmem:[%s9 + $0x98] sm:$0xff]
        %v5191 = vld [vmem:[%s9 + $0xa0] sm:$0xff]
        %v5192 = vld [vmem:[%s9 + $0xa8] sm:$0xff]
        %v5193 = vld [vmem:[%s9 + $0xb0] sm:$0xff]
        %v5194 = vld [vmem:[%s9 + $0xb8] sm:$0xff]
        %v5195 = vld [vmem:[%s9 + $0xc0] sm:$0xff]
        %v5196 = vld [vmem:[%s9 + $0xc8] sm:$0xff]
        %v5197 = vld [vmem:[%s9 + $0xd0] sm:$0xff]
        %v5198 = vld [vmem:[%s9 + $0xd8] sm:$0xff]
        %v5199 = vld [vmem:[%s9 + $0xe0] sm:$0xff]
        %v5200 = vld [vmem:[%s9 + $0xe8] sm:$0xff]
        %v5201 = vld [vmem:[%s9 + $0xf0] sm:$0xff]
        %v5202 = vld [vmem:[%s9 + $0xf8] sm:$0xff]
        %v5203 = vpack.c.bf16 %v5017, %v5013
        %v5204 = vpack.c.bf16 %v5019, %v5015
        %v5205 = vpack.c.bf16 %v5027, %v5023
        %v5206 = vpack.c.bf16 %v5029, %v5025
        %v5207 = vpack.c.bf16 %v5037, %v5033
        %v5208 = vpack.c.bf16 %v5039, %v5035
        %v5209 = vpack.c.bf16 %v5047, %v5043
        %v5210 = vpack.c.bf16 %v5049, %v5045
        %v5211 = vpack.c.bf16 %v5057, %v5053
        %v5212 = vpack.c.bf16 %v5059, %v5055
        %v5213 = vpack.c.bf16 %v5067, %v5063
        %v5214 = vpack.c.bf16 %v5069, %v5065
        %v5215 = vpack.c.bf16 %v5077, %v5073
        %v5216 = vpack.c.bf16 %v5079, %v5075
        %v5217 = vpack.c.bf16 %v5087, %v5083
        %v5218 = vpack.c.bf16 %v5089, %v5085
        %v5219 = vpack.c.bf16 %v5097, %v5093
        %v5220 = vpack.c.bf16 %v5099, %v5095
        %v5221 = vpack.c.bf16 %v5107, %v5103
        %v5222 = vpack.c.bf16 %v5109, %v5105
        %v5223 = vpack.c.bf16 %v5117, %v5113
        %v5224 = vpack.c.bf16 %v5119, %v5115
        %v5225 = vpack.c.bf16 %v5127, %v5123
        %v5226 = vpack.c.bf16 %v5129, %v5125
        %v5227 = vpack.c.bf16 %v5137, %v5133
        %v5228 = vpack.c.bf16 %v5139, %v5135
        %v5229 = vpack.c.bf16 %v5147, %v5143
        %v5230 = vpack.c.bf16 %v5149, %v5145
        %v5231 = vpack.c.bf16 %v5157, %v5153
        %v5232 = vpack.c.bf16 %v5159, %v5155
        %v5233 = vpack.c.bf16 %v5167, %v5163
        %v5234 = vpack.c.bf16 %v5169, %v5165
        %v5235 = vpack.c.bf16 %v5172, %v5171
        %v5236 = vpack.c.bf16 %v5174, %v5173
        %v5237 = vpack.c.bf16 %v5176, %v5175
        %v5238 = vpack.c.bf16 %v5178, %v5177
        %v5239 = vpack.c.bf16 %v5180, %v5179
        %v5240 = vpack.c.bf16 %v5182, %v5181
        %v5241 = vpack.c.bf16 %v5184, %v5183
        %v5242 = vpack.c.bf16 %v5186, %v5185
        %v5243 = vpack.c.bf16 %v5188, %v5187
        %v5244 = vpack.c.bf16 %v5190, %v5189
        %v5245 = vpack.c.bf16 %v5192, %v5191
        %v5246 = vpack.c.bf16 %v5194, %v5193
        %v5247 = vpack.c.bf16 %v5196, %v5195
        %v5248 = vpack.c.bf16 %v5198, %v5197
        %v5249 = vpack.c.bf16 %v5200, %v5199
        %v5250 = vpack.c.bf16 %v5202, %v5201
        %5252 = vset.pattern.permute.xlu0 0
        %5253 = vperm.xlu0 %5252, %v5235
        %v5254 = vpop.permute.xlu0 %5253
        %5257 = vset.pattern.permute.xlu0 0
        %5258 = vperm.xlu0 %5257, %v5236
        %v5259 = vpop.permute.xlu0 %5258
        %5262 = vset.pattern.permute.xlu0 0
        %5263 = vperm.xlu0 %5262, %v5237
        %v5264 = vpop.permute.xlu0 %5263
        %5267 = vset.pattern.permute.xlu0 0
        %5268 = vperm.xlu0 %5267, %v5238
        %v5269 = vpop.permute.xlu0 %5268
        %5272 = vset.pattern.permute.xlu0 0
        %5273 = vperm.xlu0 %5272, %v5239
        %v5274 = vpop.permute.xlu0 %5273
        %5277 = vset.pattern.permute.xlu0 0
        %5278 = vperm.xlu0 %5277, %v5240
        %v5279 = vpop.permute.xlu0 %5278
        %5282 = vset.pattern.permute.xlu0 0
        %5283 = vperm.xlu0 %5282, %v5241
        %v5284 = vpop.permute.xlu0 %5283
        %5287 = vset.pattern.permute.xlu0 0
        %5288 = vperm.xlu0 %5287, %v5242
        %v5289 = vpop.permute.xlu0 %5288
        %5292 = vset.pattern.permute.xlu0 0
        %5293 = vperm.xlu0 %5292, %v5243
        %v5294 = vpop.permute.xlu0 %5293
        %5297 = vset.pattern.permute.xlu0 0
        %5298 = vperm.xlu0 %5297, %v5244
        %v5299 = vpop.permute.xlu0 %5298
        %5302 = vset.pattern.permute.xlu0 0
        %5303 = vperm.xlu0 %5302, %v5245
        %v5304 = vpop.permute.xlu0 %5303
        %5307 = vset.pattern.permute.xlu0 0
        %5308 = vperm.xlu0 %5307, %v5246
        %v5309 = vpop.permute.xlu0 %5308
        %5312 = vset.pattern.permute.xlu0 0
        %5313 = vperm.xlu0 %5312, %v5247
        %v5314 = vpop.permute.xlu0 %5313
        %5317 = vset.pattern.permute.xlu0 0
        %5318 = vperm.xlu0 %5317, %v5248
        %v5319 = vpop.permute.xlu0 %5318
        %5322 = vset.pattern.permute.xlu0 0
        %5323 = vperm.xlu0 %5322, %v5249
        %v5324 = vpop.permute.xlu0 %5323
        %5327 = vset.pattern.permute.xlu0 0
        %5328 = vperm.xlu0 %5327, %v5250
        %v5329 = vpop.permute.xlu0 %5328
        %v5331 = vadd.bf16 %v5203, %v5254
        %v5332 = vadd.bf16 %v5204, %v5254
        %v5333 = vadd.bf16 %v5205, %v5259
        %v5334 = vadd.bf16 %v5206, %v5259
        %v5335 = vadd.bf16 %v5207, %v5264
        %v5336 = vadd.bf16 %v5208, %v5264
        %v5337 = vadd.bf16 %v5209, %v5269
        %v5338 = vadd.bf16 %v5210, %v5269
        %v5339 = vadd.bf16 %v5211, %v5274
        %v5340 = vadd.bf16 %v5212, %v5274
        %v5341 = vadd.bf16 %v5213, %v5279
        %v5342 = vadd.bf16 %v5214, %v5279
        %v5343 = vadd.bf16 %v5215, %v5284
        %v5344 = vadd.bf16 %v5216, %v5284
        %v5345 = vadd.bf16 %v5217, %v5289
        %v5346 = vadd.bf16 %v5218, %v5289
        %v5347 = vadd.bf16 %v5219, %v5294
        %v5348 = vadd.bf16 %v5220, %v5294
        %v5349 = vadd.bf16 %v5221, %v5299
        %v5350 = vadd.bf16 %v5222, %v5299
        %v5351 = vadd.bf16 %v5223, %v5304
        %v5352 = vadd.bf16 %v5224, %v5304
        %v5353 = vadd.bf16 %v5225, %v5309
        %v5354 = vadd.bf16 %v5226, %v5309
        %v5355 = vadd.bf16 %v5227, %v5314
        %v5356 = vadd.bf16 %v5228, %v5314
        %v5357 = vadd.bf16 %v5229, %v5319
        %v5358 = vadd.bf16 %v5230, %v5319
        %v5359 = vadd.bf16 %v5231, %v5324
        %v5360 = vadd.bf16 %v5232, %v5324
        %v5361 = vadd.bf16 %v5233, %v5329
        %v5362 = vadd.bf16 %v5234, %v5329
        %v5363 = vmax.bf16 %v5331, 0
        %v5364 = vmax.bf16 %v5332, 0
        %v5365 = vmax.bf16 %v5333, 0
        %v5366 = vmax.bf16 %v5334, 0
        %v5367 = vmax.bf16 %v5335, 0
        %v5368 = vmax.bf16 %v5336, 0
        %v5369 = vmax.bf16 %v5337, 0
        %v5370 = vmax.bf16 %v5338, 0
        %v5371 = vmax.bf16 %v5339, 0
        %v5372 = vmax.bf16 %v5340, 0
        %v5373 = vmax.bf16 %v5341, 0
        %v5374 = vmax.bf16 %v5342, 0
        %v5375 = vmax.bf16 %v5343, 0
        %v5376 = vmax.bf16 %v5344, 0
        %v5377 = vmax.bf16 %v5345, 0
        %v5378 = vmax.bf16 %v5346, 0
        %v5379 = vmax.bf16 %v5347, 0
        %v5380 = vmax.bf16 %v5348, 0
        %v5381 = vmax.bf16 %v5349, 0
        %v5382 = vmax.bf16 %v5350, 0
        %v5383 = vmax.bf16 %v5351, 0
        %v5384 = vmax.bf16 %v5352, 0
        %v5385 = vmax.bf16 %v5353, 0
        %v5386 = vmax.bf16 %v5354, 0
        %v5387 = vmax.bf16 %v5355, 0
        %v5388 = vmax.bf16 %v5356, 0
        %v5389 = vmax.bf16 %v5357, 0
        %v5390 = vmax.bf16 %v5358, 0
        %v5391 = vmax.bf16 %v5359, 0
        %v5392 = vmax.bf16 %v5360, 0
        %v5393 = vmax.bf16 %v5361, 0
        %v5394 = vmax.bf16 %v5362, 0
        %v5395 = vld [vmem:[%s10] sm:$0xff]
        %v5396 = vld [vmem:[%s11] sm:$0xff]
        %5398 = vset.pattern.permute.xlu0 0
        %5399 = vperm.xlu0 %5398, %v5396
        %v5400 = vpop.permute.xlu0 %5399
        %v5403 = vunpack.c.l.b16 %v5395
        %v5404 = vunpack.c.h.b16 %v5395
        %v5405 = vpack.c.b16 %v5403, %v5403
        %v5406 = vpack.c.b16 %v5404, %v5404
        %5409 = vmatprep.subr.bf16.mxu0 %v5378
        %5410 = vmatpush1.bf16.msra.mxu0 %v5377
        %5411 = vmatprep.subr.bf16.mxu0 %v5376
        %5412 = vmatpush1.bf16.msra.mxu0 %v5375
        %5413 = vmatprep.subr.bf16.mxu0 %v5374
        %5414 = vmatpush1.bf16.msra.mxu0 %v5373
        %5415 = vmatprep.subr.bf16.mxu0 %v5372
        %5416 = vmatpush1.bf16.msra.mxu0 %v5371
        %5417 = vmatprep.subr.bf16.mxu0 %v5370
        %5418 = vmatpush1.bf16.msra.mxu0 %v5369
        %5419 = vmatprep.subr.bf16.mxu0 %v5368
        %5420 = vmatpush1.bf16.msra.mxu0 %v5367
        %5421 = vmatprep.subr.bf16.mxu0 %v5366
        %5422 = vmatpush1.bf16.msra.mxu0 %v5365
        %5423 = vmatprep.subr.bf16.mxu0 %v5364
        %5424 = vmatpush1.bf16.msra.mxu0 %v5363
        %5425 = vmatprep.subr.bf16.mxu0 %v5394
        %5426 = vmatpush2.bf16.msra.mxu0 %v5393
        %5427 = vmatprep.subr.bf16.mxu0 %v5392
        %5428 = vmatpush2.bf16.msra.mxu0 %v5391
        %5429 = vmatprep.subr.bf16.mxu0 %v5390
        %5430 = vmatpush2.bf16.msra.mxu0 %v5389
        %5431 = vmatprep.subr.bf16.mxu0 %v5388
        %5432 = vmatpush2.bf16.msra.mxu0 %v5387
        %5433 = vmatprep.subr.bf16.mxu0 %v5386
        %5434 = vmatpush2.bf16.msra.mxu0 %v5385
        %5435 = vmatprep.subr.bf16.mxu0 %v5384
        %5436 = vmatpush2.bf16.msra.mxu0 %v5383
        %5437 = vmatprep.subr.bf16.mxu0 %v5382
        %5438 = vmatpush2.bf16.msra.mxu0 %v5381
        %5439 = vmatprep.subr.bf16.mxu0 %v5380
        %5440 = vmatpush2.bf16.msra.mxu0 %v5379
        %5441 = vmatprep.mubr.bf16.mxu0 %v5406
        %5442 = vmatmul.mubr.bf16.gmra.mxu0 %v5405
        %v5443 = vpop.f32.mrf.mxu0
        %v5444 = vadd.f32 %v5400, %v5443
        %v5445 = vpop.f32.mrf.mxu0
        %v5446 = vadd.f32 %v5400, %v5445
        %v5447 = vpop.f32.mrf.mxu0
        %v5448 = vpop.f32.mrf.mxu0
        %5449 = vdwg.mxu0
        %5450 = vst [vmem:[%s480] sm:$0xff] %v5444
        %5451 = vst [vmem:[%s480 + $0x8] sm:$0xff] %v5446
        %s5452 = sand.u32 %s297, 1
        %s5453 = scalar_lea.sflag [#allocation5], %s5452
        %s5454 = sand.u32 %s297, 1
        %s5455 = smul.addr %s5454, 16
        %s5456 = scalar_lea.vmem [#allocation6], %s5455
        // Predicated region
        $region111: #{tpu_custom_call.1} parent=101 // pred_check
          %p5457 = pneg %p307
        $region112: #{tpu_custom_call.1} parent=101 // pred_check_branch
          %5459 = sbr.rel (%p5457) target = $region114
        $region113: #{tpu_custom_call.1} parent=101 // pred_region
          %s5460 = smul.u32 2, %s27
          %s5462 = ssub.s32 256, 256
          %5463 = vsyncadd %s5453, %s5462
          %s5464 = smul.addr %s5460, 128
          %s5465 = scalar_lea.hbm %s12, %s5464
          %s5467 = sshll.u32 %s5456, 4
          %s5468 = int_to_ptr.vmem [resolvable:$true] %s5467
          %5470 = dma.vmem_to_hbm [thread:$0]  %s5468, 256, %s5465, %s5453
        $region114: #{tpu_custom_call.1} parent=101 // pred_fallthru
          _
      $region102: #{tpu_custom_call.1} parent=5 // pred_fallthru
        _
      %p5471 = scmp.le.s32.totalorder 2, %s22
      // Predicated region
      $region115: #{tpu_custom_call.1} parent=5 // pred_check
        %p5472 = pneg %p5471
      $region116: #{tpu_custom_call.1} parent=5 // pred_check_branch
        %5474 = sbr.rel (%p5472) target = $region118
      $region117: #{tpu_custom_call.1} parent=5 // pred_region
        %s5475 = ssub.s32 %s22, 2
        // Predicated region
        $region119: #{tpu_custom_call.1} parent=117 // pred_check
          %p5476 = pneg %p313
        $region120: #{tpu_custom_call.1} parent=117 // pred_check_branch
          %5478 = sbr.rel (%p5476) target = $region122
        $region121: #{tpu_custom_call.1} parent=117 // pred_region
          %s5479 = sand.u32 %s298, 1
          %s5480 = scalar_lea.sflag [#allocation5], %s5479
          %s5481 = sand.u32 %s298, 1
          %s5482 = smul.addr %s5481, 16
          %s5483 = scalar_lea.vmem [#allocation6], %s5482
          %5484 = dma.done %s5480, 256
        $region122: #{tpu_custom_call.1} parent=117 // pred_fallthru
          _
      $region118: #{tpu_custom_call.1} parent=5 // pred_fallthru
        _
    $region6: #{tpu_custom_call.1} parent=1 // loop_footer
      %s26 = sadd.s32 1, %s22
    $region7: #{tpu_custom_call.1} parent=1 // loop_footer_branch
      %21 = sbr.rel target = $region3
    $region8: #{tpu_custom_call.1} parent=1 // loop_exit
      _
    %5485 = vsyncpa [#allocation4], 1
    %s5486 = scalar_lea.sflag [#allocation4], 1
    %5487 = vsyncpa %s5486, 1
    %5488 = vsyncpa [#allocation5], 1
    %s5489 = scalar_lea.sflag [#allocation5], 1
    %5490 = vsyncpa %s5489, 1

</llo_original>
